<compile_context>
chip_gen: v7x
topology: tpu7x:2x2x1
jax: 0.10.0
libtpu: 0.0.40
codegen_flags: <defaults>
</compile_context>

<pallas_src>
import numpy as np
import jax
import jax.numpy as jnp
from jax.experimental import pallas as pl
from jax.experimental.pallas import tpu as pltpu


def _make_msda_kernel(num_heads, num_levels, num_points, spatial_shapes,
                      hwp_sizes, level_offsets):
    H, L, P = num_heads, num_levels, num_points
    LP = L * P
    HP = H * P
    inv_P = 1.0 / P

    def kernel(q_ref, rp_ref, vf_ref, rc_ref,
               woff_ref, boff_ref, wattn_ref, battn_ref, bout_ref,
               out_ref):
        q = q_ref[0]            # (TQ, C)   bf16
        rp = rp_ref[0]          # (TQ, 4*L) f32
        TQ = q.shape[0]
        Cd = vf_ref.shape[-1]

        # --- q-side projections: bf16 operands, f32 accumulate (MXU) ---
        off = jnp.dot(q, woff_ref[...], preferred_element_type=jnp.float32) + boff_ref[...]
        logits = jnp.dot(q, wattn_ref[...], preferred_element_type=jnp.float32) + battn_ref[...]

        # --- softmax over (L*P) per head: per-head max + exact divide (robust) ---
        aw_heads = []
        for h in range(H):
            lg = logits[:, h * LP:(h + 1) * LP]
            m = jnp.max(lg, axis=-1, keepdims=True)
            e = jnp.exp(lg - m)
            aw_heads.append(e / jnp.sum(e, axis=-1, keepdims=True))     # (TQ, LP)

        # --- per-level sampling pixel coords for ALL heads*points at once ---
        # off column layout (after wrapper permutation) is (level, coord, head, point).
        px_lvls, py_lvls = [], []
        for l, (Hl, Wl) in enumerate(spatial_shapes):
            cx = rp[:, 4 * l + 0:4 * l + 1]
            cy = rp[:, 4 * l + 1:4 * l + 2]
            wh2 = rp[:, 4 * l + 2:4 * l + 3] * 0.5
            hh2 = rp[:, 4 * l + 3:4 * l + 4] * 0.5
            ox = off[:, (2 * l + 0) * HP:(2 * l + 0) * HP + HP]         # (TQ, H*P)
            oy = off[:, (2 * l + 1) * HP:(2 * l + 1) * HP + HP]
            # sampling location in [0,1] -> pixel coords (align_corners=False)
            px_lvls.append((cx + ox * inv_P * wh2) * Wl - 0.5)
            py_lvls.append((cy + oy * inv_P * hh2) * Hl - 0.5)

        # --- per-level pixel row/col coordinate rows, hoisted out of the head loop ---
        row_lvls = [rc_ref[0:1, level_offsets[l]:level_offsets[l] + hwp_sizes[l]]
                    for l in range(L)]
        col_lvls = [rc_ref[1:2, level_offsets[l]:level_offsets[l] + hwp_sizes[l]]
                    for l in range(L)]

        # --- gather + output projection fused:
        #     per (head, level): lane-dense (TQ, HWpad) bilinear slab -> one MXU matmul
        #     against the Wout-folded value slice, accumulated into a single (TQ, C) buffer ---
        acc = jnp.zeros((TQ, Cd), jnp.float32)
        for h in range(H):
            aw_h = aw_heads[h]
            for l in range(L):
                o0, hwp = level_offsets[l], hwp_sizes[l]
                row2, col2 = row_lvls[l], col_lvls[l]                   # (1, HWpad)
                px, py = px_lvls[l], py_lvls[l]
                ws = None
                for p in range(P):
                    i = h * P + p
                    # triangular (bilinear) weights; out-of-range / pad pixels get exactly 0
                    wx = jnp.maximum(0.0, 1.0 - jnp.abs(col2 - px[:, i:i + 1]))
                    wy = jnp.maximum(0.0, 1.0 - jnp.abs(row2 - py[:, i:i + 1]))
                    t = aw_h[:, l * P + p:l * P + p + 1] * (wx * wy)    # (TQ, HWpad)
                    ws = t if ws is None else ws + t
                acc = acc + jnp.dot(ws.astype(jnp.bfloat16),
                                    vf_ref[0, h, o0:o0 + hwp, :],
                                    preferred_element_type=jnp.float32)

        out_ref[0] = (acc + bout_ref[...]).astype(out_ref.dtype)

    return kernel


def msda_pallas(query, reference_points, value, spatial_shapes, params,
                num_heads, num_levels, num_points):
    N, Lq, C = query.shape
    Lv = value.shape[1]
    H, L, P = num_heads, num_levels, num_points
    c = C // H
    (Woff, boff, Wattn, battn, Wval, bval, Wout, bout) = params

    # --- lane-dense per-level layout: pad each level's HW to a multiple of 128 ---
    hw_sizes = [h * w for h, w in spatial_shapes]
    hwp_sizes = [int(-(-s // 128) * 128) for s in hw_sizes]
    level_offsets = np.concatenate([[0], np.cumsum(hwp_sizes)[:-1]]).astype(int).tolist()
    Lv_pad = int(sum(hwp_sizes))

    # --- hoisted value projection + per-head fold of the output projection (once per call) ---
    v = (value @ Wval + bval).reshape(N, Lv, H, c)                       # f32
    vf = jnp.einsum('nlhc,hcd->nhld', v, Wout.reshape(H, c, C))          # (N, H, Lv, C)
    parts, o0 = [], 0
    for s, sp in zip(hw_sizes, hwp_sizes):
        seg = vf[:, :, o0:o0 + s, :]
        if sp > s:
            seg = jnp.pad(seg, ((0, 0), (0, 0), (0, sp - s), (0, 0)))
        parts.append(seg)
        o0 += s
    vf_pad = jnp.concatenate(parts, axis=2).astype(jnp.bfloat16)         # (N, H, Lv_pad, C)

    # --- flattened (row, col) pixel coordinates (f32); pad pixels -> far out of range ---
    rc_np = np.full((2, Lv_pad), -1.0e6, np.float32)
    for (Hl, Wl), s, off0 in zip(spatial_shapes, hw_sizes, level_offsets):
        pix = np.arange(s)
        rc_np[0, off0:off0 + s] = pix // Wl
        rc_np[1, off0:off0 + s] = pix % Wl
    rc = jnp.asarray(rc_np)

    # --- sampling-offset columns permuted (head, level, point, coord) -> (level, coord, head, point)
    #     so per-level x/y offsets for all heads*points are contiguous lane slices ---
    perm = np.arange(2 * H * L * P).reshape(H, L, P, 2).transpose(1, 3, 0, 2).reshape(-1)
    Woff_p = Woff[:, perm].astype(jnp.bfloat16)
    boff_p = boff[perm].reshape(1, -1)
    Wattn_b = Wattn.astype(jnp.bfloat16)
    battn2 = battn.reshape(1, -1)
    bout2 = bout.reshape(1, -1)

    # --- generation-aware Lq tile + VMEM budget (64 MiB parts get the smaller tile) ---
    try:
        vmem_cap = int(pltpu.get_tpu_info().vmem_capacity_bytes)
    except Exception:
        vmem_cap = 64 * 1024 * 1024
    tq_target = 128 if vmem_cap <= 64 * 1024 * 1024 else 256
    TQ = Lq if Lq <= tq_target else tq_target
    Lq_pad = ((Lq + TQ - 1) // TQ) * TQ

    q_bf = query.astype(jnp.bfloat16)
    rp2 = reference_points.reshape(N, Lq, 4 * L)
    if Lq_pad > Lq:
        q_bf = jnp.pad(q_bf, ((0, 0), (0, Lq_pad - Lq), (0, 0)))
        rp2 = jnp.pad(rp2, ((0, 0), (0, Lq_pad - Lq), (0, 0)))

    kernel = _make_msda_kernel(H, L, P, spatial_shapes, hwp_sizes, level_offsets)

    grid_spec = pltpu.PrefetchScalarGridSpec(
        num_scalar_prefetch=0,
        grid=(N, Lq_pad // TQ),
        in_specs=[
            pl.BlockSpec((1, TQ, C), lambda n, t: (n, t, 0)),
            pl.BlockSpec((1, TQ, 4 * L), lambda n, t: (n, t, 0)),
            # batch-resident operands: block index depends only on n -> fetched once per batch
            pl.BlockSpec((1, H, Lv_pad, C), lambda n, t: (n, 0, 0, 0)),
            pl.BlockSpec((2, Lv_pad), lambda n, t: (0, 0)),
            pl.BlockSpec(Woff_p.shape, lambda n, t: (0, 0)),
            pl.BlockSpec(boff_p.shape, lambda n, t: (0, 0)),
            pl.BlockSpec(Wattn_b.shape, lambda n, t: (0, 0)),
            pl.BlockSpec(battn2.shape, lambda n, t: (0, 0)),
            pl.BlockSpec(bout2.shape, lambda n, t: (0, 0)),
        ],
        out_specs=pl.BlockSpec((1, TQ, C), lambda n, t: (n, t, 0)),
    )
    out = pl.pallas_call(
        kernel,
        out_shape=jax.ShapeDtypeStruct((N, Lq_pad, C), jnp.float32),
        grid_spec=grid_spec,
        compiler_params=pltpu.CompilerParams(
            dimension_semantics=("parallel", "parallel"),       # batch and Lq tiles both shard
            vmem_limit_bytes=min(vmem_cap // 2, 64 * 1024 * 1024),
        ),
    )(q_bf, rp2, vf_pad, rc, Woff_p, boff_p, Wattn_b, battn2, bout2)
    return out[:, :Lq, :] if Lq_pad > Lq else out


def msda_reference(query, reference_points, value, spatial_shapes, params,
                   num_heads, num_levels, num_points):
    """Pure-JAX reference mirroring the PyTorch semantics (explicit 4-corner bilinear)."""
    H, L, P = num_heads, num_levels, num_points
    N, Lq, C = query.shape
    Lv = value.shape[1]
    c = C // H
    (Woff, boff, Wattn, battn, Wval, bval, Wout, bout) = params

    off = (query @ Woff + boff).reshape(N, Lq, H, L, P, 2)
    logits = (query @ Wattn + battn).reshape(N, Lq, H, L * P)
    aw = jax.nn.softmax(logits, axis=-1).reshape(N, Lq, H, L, P)
    refc = reference_points[:, :, None, :, None, :2]
    refwh = reference_points[:, :, None, :, None, 2:]
    loc = refc + off / P * refwh * 0.5                    # (N,Lq,H,L,P,2)
    v = (value @ Wval + bval).reshape(N, Lv, H, c)

    out = jnp.zeros((N, Lq, H, c), jnp.float32)
    start = 0
    n_idx = jnp.arange(N)[:, None, None, None]
    h_idx = jnp.arange(H)[None, None, :, None]
    for l, (Hl, Wl) in enumerate(spatial_shapes):
        v_l = v[:, start:start + Hl * Wl].reshape(N, Hl, Wl, H, c)
        px = loc[:, :, :, l, :, 0] * Wl - 0.5             # (N,Lq,H,P)
        py = loc[:, :, :, l, :, 1] * Hl - 0.5
        x0 = jnp.floor(px)
        y0 = jnp.floor(py)
        for dy in (0, 1):
            for dx in (0, 1):
                xi = x0 + dx
                yi = y0 + dy
                w = (1.0 - jnp.abs(px - xi)) * (1.0 - jnp.abs(py - yi))
                valid = (xi >= 0) & (xi <= Wl - 1) & (yi >= 0) & (yi <= Hl - 1)
                xc = jnp.clip(xi, 0, Wl - 1).astype(jnp.int32)
                yc = jnp.clip(yi, 0, Hl - 1).astype(jnp.int32)
                g = v_l[n_idx, yc, xc, h_idx]             # (N,Lq,H,P,c)
                out = out + jnp.sum((aw[:, :, :, l, :] * w * valid)[..., None] * g, axis=3)
        start += Hl * Wl
    out = out.reshape(N, Lq, C)
    return out @ Wout + bout


if __name__ == "__main__":
    # module config
    embed_dim, num_heads, num_levels, num_points = 32, 4, 2, 4
    total_points = num_heads * num_levels * num_points
    spatial_shapes = [(8, 8), (4, 4)]

    N, Lq, C = 2, 8, embed_dim
    Lv = sum(h * w for h, w in spatial_shapes)            # 80

    key = jax.random.PRNGKey(0)
    ks = jax.random.split(key, 12)
    query = jax.random.normal(ks[0], (N, Lq, C), jnp.float32)
    value = jax.random.normal(ks[1], (N, Lv, C), jnp.float32)
    ref_cxcy = jax.random.uniform(ks[2], (N, Lq, num_levels, 2), jnp.float32, 0.2, 0.8)
    ref_wh = jax.random.uniform(ks[3], (N, Lq, num_levels, 2), jnp.float32, 0.2, 0.6)
    reference_points = jnp.concatenate([ref_cxcy, ref_wh], axis=-1)

    s = 0.1
    Woff = s * jax.random.normal(ks[4], (C, 2 * total_points), jnp.float32)
    boff = s * jax.random.normal(ks[5], (2 * total_points,), jnp.float32)
    Wattn = s * jax.random.normal(ks[6], (C, total_points), jnp.float32)
    battn = s * jax.random.normal(ks[7], (total_points,), jnp.float32)
    Wval = s * jax.random.normal(ks[8], (C, C), jnp.float32)
    bval = s * jax.random.normal(ks[9], (C,), jnp.float32)
    Wout = s * jax.random.normal(ks[10], (C, C), jnp.float32)
    bout = s * jax.random.normal(ks[11], (C,), jnp.float32)
    params = (Woff, boff, Wattn, battn, Wval, bval, Wout, bout)

    out = msda_pallas(query, reference_points, value, spatial_shapes, params,
                      num_heads, num_levels, num_points)
    out = jax.block_until_ready(out)

    ref = msda_reference(query, reference_points, value, spatial_shapes, params,
                         num_heads, num_levels, num_points)
    ref = jax.block_until_ready(ref)

    assert out.shape == (N, Lq, C)
    assert bool(jnp.all(jnp.isfinite(out)))
    np.testing.assert_allclose(np.asarray(out), np.asarray(ref), rtol=5e-2, atol=5e-2)
    print("KERNEL_OK")
</pallas_src>

<mosaic_0001>
module attributes {stable_mosaic.version = 11 : i64} {
  func.func @kernel(%arg0: i32, %arg1: i32, %arg2: memref<1x8x32xbf16, #tpu.memory_space<vmem>>, %arg3: memref<1x8x8xf32, #tpu.memory_space<vmem>>, %arg4: memref<1x4x256x32xbf16, #tpu.memory_space<vmem>>, %arg5: memref<2x256xf32, #tpu.memory_space<vmem>>, %arg6: memref<32x64xbf16, #tpu.memory_space<vmem>>, %arg7: memref<1x64xf32, #tpu.memory_space<vmem>>, %arg8: memref<32x32xbf16, #tpu.memory_space<vmem>>, %arg9: memref<1x32xf32, #tpu.memory_space<vmem>>, %arg10: memref<1x32xf32, #tpu.memory_space<vmem>>, %arg11: memref<1x8x32xf32, #tpu.memory_space<vmem>>) attributes {dimension_semantics = [#tpu.dimension_semantics<parallel>, #tpu.dimension_semantics<parallel>], iteration_bounds = array<i64: 2, 1>, scalar_prefetch = 0 : i64, scratch_operands = 0 : i64, tpu.core_type = #tpu.core_type<tc>, window_params = [{transform_indices = @transform_0, window_bounds = array<i64: 1, 8, 32>}, {transform_indices = @transform_1, window_bounds = array<i64: 1, 8, 8>}, {transform_indices = @transform_2, window_bounds = array<i64: 1, 4, 256, 32>}, {pipeline_mode = #tpu.pipeline_mode<synchronous>, transform_indices = @transform_3, window_bounds = array<i64: 2, 256>}, {pipeline_mode = #tpu.pipeline_mode<synchronous>, transform_indices = @transform_4, window_bounds = array<i64: 32, 64>}, {pipeline_mode = #tpu.pipeline_mode<synchronous>, transform_indices = @transform_5, window_bounds = array<i64: 1, 64>}, {pipeline_mode = #tpu.pipeline_mode<synchronous>, transform_indices = @transform_6, window_bounds = array<i64: 32, 32>}, {pipeline_mode = #tpu.pipeline_mode<synchronous>, transform_indices = @transform_7, window_bounds = array<i64: 1, 32>}, {pipeline_mode = #tpu.pipeline_mode<synchronous>, transform_indices = @transform_8, window_bounds = array<i64: 1, 32>}, {transform_indices = @transform_9, window_bounds = array<i64: 1, 8, 32>}]} {
    %c0 = arith.constant 0 : index
    %c0_0 = arith.constant 0 : index
    %c0_1 = arith.constant 0 : index
    %0 = vector.load %arg2[%c0, %c0_0, %c0_1] : memref<1x8x32xbf16, #tpu.memory_space<vmem>>, vector<1x8x32xbf16>
    %1 = vector.shape_cast %0 : vector<1x8x32xbf16> to vector<8x32xbf16>
    %c0_2 = arith.constant 0 : index
    %c0_3 = arith.constant 0 : index
    %c0_4 = arith.constant 0 : index
    %2 = vector.load %arg3[%c0_2, %c0_3, %c0_4] : memref<1x8x8xf32, #tpu.memory_space<vmem>>, vector<1x8x8xf32>
    %3 = vector.shape_cast %2 : vector<1x8x8xf32> to vector<8x8xf32>
    %c0_5 = arith.constant 0 : index
    %c0_6 = arith.constant 0 : index
    %4 = vector.load %arg6[%c0_5, %c0_6] : memref<32x64xbf16, #tpu.memory_space<vmem>>, vector<32x64xbf16>
    %cst = arith.constant dense<0.000000e+00> : vector<8x64xf32>
    %5 = tpu.matmul %1, %4, %cst {dimension_numbers = #tpu.dot_dimension_numbers<[1], [0], [0], [1], [0, 0, 1, 1], [], []>} : vector<8x32xbf16>, vector<32x64xbf16>, vector<8x64xf32> -> vector<8x64xf32>
    %c0_7 = arith.constant 0 : index
    %c0_8 = arith.constant 0 : index
    %6 = vector.load %arg7[%c0_7, %c0_8] : memref<1x64xf32, #tpu.memory_space<vmem>>, vector<1x64xf32>
    %7 = vector.broadcast %6 : vector<1x64xf32> to vector<8x64xf32>
    %8 = arith.addf %5, %7 : vector<8x64xf32>
    %c0_9 = arith.constant 0 : index
    %c0_10 = arith.constant 0 : index
    %9 = vector.load %arg8[%c0_9, %c0_10] : memref<32x32xbf16, #tpu.memory_space<vmem>>, vector<32x32xbf16>
    %cst_11 = arith.constant dense<0.000000e+00> : vector<8x32xf32>
    %10 = tpu.matmul %1, %9, %cst_11 {dimension_numbers = #tpu.dot_dimension_numbers<[1], [0], [0], [1], [0, 0, 1, 1], [], []>} : vector<8x32xbf16>, vector<32x32xbf16>, vector<8x32xf32> -> vector<8x32xf32>
    %c0_12 = arith.constant 0 : index
    %c0_13 = arith.constant 0 : index
    %11 = vector.load %arg9[%c0_12, %c0_13] : memref<1x32xf32, #tpu.memory_space<vmem>>, vector<1x32xf32>
    %12 = vector.broadcast %11 : vector<1x32xf32> to vector<8x32xf32>
    %13 = arith.addf %10, %12 : vector<8x32xf32>
    %14 = vector.extract_strided_slice %13 {offsets = [0, 0], sizes = [8, 8], strides = [1, 1]} : vector<8x32xf32> to vector<8x8xf32>
    %cst_14 = arith.constant dense<0xFF800000> : vector<8xf32>
    %15 = vector.multi_reduction <maximumf>, %14, %cst_14 [1] : vector<8x8xf32> to vector<8xf32>
    %16 = vector.shape_cast %15 : vector<8xf32> to vector<8x1xf32>
    %17 = vector.broadcast %16 : vector<8x1xf32> to vector<8x8xf32>
    %18 = arith.subf %14, %17 : vector<8x8xf32>
    %19 = math.exp %18 : vector<8x8xf32>
    %cst_15 = arith.constant dense<0.000000e+00> : vector<8xf32>
    %20 = vector.multi_reduction <add>, %19, %cst_15 [1] : vector<8x8xf32> to vector<8xf32>
    %21 = vector.shape_cast %20 : vector<8xf32> to vector<8x1xf32>
    %22 = vector.broadcast %21 : vector<8x1xf32> to vector<8x8xf32>
    %23 = arith.divf %19, %22 : vector<8x8xf32>
    %24 = vector.extract_strided_slice %13 {offsets = [0, 8], sizes = [8, 8], strides = [1, 1]} : vector<8x32xf32> to vector<8x8xf32>
    %cst_16 = arith.constant dense<0xFF800000> : vector<8xf32>
    %25 = vector.multi_reduction <maximumf>, %24, %cst_16 [1] : vector<8x8xf32> to vector<8xf32>
    %26 = vector.shape_cast %25 : vector<8xf32> to vector<8x1xf32>
    %27 = vector.broadcast %26 : vector<8x1xf32> to vector<8x8xf32>
    %28 = arith.subf %24, %27 : vector<8x8xf32>
    %29 = math.exp %28 : vector<8x8xf32>
    %cst_17 = arith.constant dense<0.000000e+00> : vector<8xf32>
    %30 = vector.multi_reduction <add>, %29, %cst_17 [1] : vector<8x8xf32> to vector<8xf32>
    %31 = vector.shape_cast %30 : vector<8xf32> to vector<8x1xf32>
    %32 = vector.broadcast %31 : vector<8x1xf32> to vector<8x8xf32>
    %33 = arith.divf %29, %32 : vector<8x8xf32>
    %34 = vector.extract_strided_slice %13 {offsets = [0, 16], sizes = [8, 8], strides = [1, 1]} : vector<8x32xf32> to vector<8x8xf32>
    %cst_18 = arith.constant dense<0xFF800000> : vector<8xf32>
    %35 = vector.multi_reduction <maximumf>, %34, %cst_18 [1] : vector<8x8xf32> to vector<8xf32>
    %36 = vector.shape_cast %35 : vector<8xf32> to vector<8x1xf32>
    %37 = vector.broadcast %36 : vector<8x1xf32> to vector<8x8xf32>
    %38 = arith.subf %34, %37 : vector<8x8xf32>
    %39 = math.exp %38 : vector<8x8xf32>
    %cst_19 = arith.constant dense<0.000000e+00> : vector<8xf32>
    %40 = vector.multi_reduction <add>, %39, %cst_19 [1] : vector<8x8xf32> to vector<8xf32>
    %41 = vector.shape_cast %40 : vector<8xf32> to vector<8x1xf32>
    %42 = vector.broadcast %41 : vector<8x1xf32> to vector<8x8xf32>
    %43 = arith.divf %39, %42 : vector<8x8xf32>
    %44 = vector.extract_strided_slice %13 {offsets = [0, 24], sizes = [8, 8], strides = [1, 1]} : vector<8x32xf32> to vector<8x8xf32>
    %cst_20 = arith.constant dense<0xFF800000> : vector<8xf32>
    %45 = vector.multi_reduction <maximumf>, %44, %cst_20 [1] : vector<8x8xf32> to vector<8xf32>
    %46 = vector.shape_cast %45 : vector<8xf32> to vector<8x1xf32>
    %47 = vector.broadcast %46 : vector<8x1xf32> to vector<8x8xf32>
    %48 = arith.subf %44, %47 : vector<8x8xf32>
    %49 = math.exp %48 : vector<8x8xf32>
    %cst_21 = arith.constant dense<0.000000e+00> : vector<8xf32>
    %50 = vector.multi_reduction <add>, %49, %cst_21 [1] : vector<8x8xf32> to vector<8xf32>
    %51 = vector.shape_cast %50 : vector<8xf32> to vector<8x1xf32>
    %52 = vector.broadcast %51 : vector<8x1xf32> to vector<8x8xf32>
    %53 = arith.divf %49, %52 : vector<8x8xf32>
    %54 = vector.extract_strided_slice %3 {offsets = [0, 0], sizes = [8, 1], strides = [1, 1]} : vector<8x8xf32> to vector<8x1xf32>
    %55 = vector.extract_strided_slice %3 {offsets = [0, 1], sizes = [8, 1], strides = [1, 1]} : vector<8x8xf32> to vector<8x1xf32>
    %56 = vector.extract_strided_slice %3 {offsets = [0, 2], sizes = [8, 1], strides = [1, 1]} : vector<8x8xf32> to vector<8x1xf32>
    %cst_22 = arith.constant 5.000000e-01 : f32
    %57 = vector.broadcast %cst_22 : f32 to vector<8x1xf32>
    %58 = arith.mulf %56, %57 : vector<8x1xf32>
    %59 = vector.extract_strided_slice %3 {offsets = [0, 3], sizes = [8, 1], strides = [1, 1]} : vector<8x8xf32> to vector<8x1xf32>
    %cst_23 = arith.constant 5.000000e-01 : f32
    %60 = vector.broadcast %cst_23 : f32 to vector<8x1xf32>
    %61 = arith.mulf %59, %60 : vector<8x1xf32>
    %62 = vector.extract_strided_slice %8 {offsets = [0, 0], sizes = [8, 16], strides = [1, 1]} : vector<8x64xf32> to vector<8x16xf32>
    %63 = vector.extract_strided_slice %8 {offsets = [0, 16], sizes = [8, 16], strides = [1, 1]} : vector<8x64xf32> to vector<8x16xf32>
    %cst_24 = arith.constant 2.500000e-01 : f32
    %64 = vector.broadcast %cst_24 : f32 to vector<8x16xf32>
    %65 = arith.mulf %62, %64 : vector<8x16xf32>
    %66 = vector.broadcast %58 : vector<8x1xf32> to vector<8x16xf32>
    %67 = arith.mulf %65, %66 : vector<8x16xf32>
    %68 = vector.broadcast %54 : vector<8x1xf32> to vector<8x16xf32>
    %69 = arith.addf %68, %67 : vector<8x16xf32>
    %cst_25 = arith.constant 8.000000e+00 : f32
    %70 = vector.broadcast %cst_25 : f32 to vector<8x16xf32>
    %71 = arith.mulf %69, %70 : vector<8x16xf32>
    %cst_26 = arith.constant 5.000000e-01 : f32
    %72 = vector.broadcast %cst_26 : f32 to vector<8x16xf32>
    %73 = arith.subf %71, %72 : vector<8x16xf32>
    %cst_27 = arith.constant 2.500000e-01 : f32
    %74 = vector.broadcast %cst_27 : f32 to vector<8x16xf32>
    %75 = arith.mulf %63, %74 : vector<8x16xf32>
    %76 = vector.broadcast %61 : vector<8x1xf32> to vector<8x16xf32>
    %77 = arith.mulf %75, %76 : vector<8x16xf32>
    %78 = vector.broadcast %55 : vector<8x1xf32> to vector<8x16xf32>
    %79 = arith.addf %78, %77 : vector<8x16xf32>
    %cst_28 = arith.constant 8.000000e+00 : f32
    %80 = vector.broadcast %cst_28 : f32 to vector<8x16xf32>
    %81 = arith.mulf %79, %80 : vector<8x16xf32>
    %cst_29 = arith.constant 5.000000e-01 : f32
    %82 = vector.broadcast %cst_29 : f32 to vector<8x16xf32>
    %83 = arith.subf %81, %82 : vector<8x16xf32>
    %84 = vector.extract_strided_slice %3 {offsets = [0, 4], sizes = [8, 1], strides = [1, 1]} : vector<8x8xf32> to vector<8x1xf32>
    %85 = vector.extract_strided_slice %3 {offsets = [0, 5], sizes = [8, 1], strides = [1, 1]} : vector<8x8xf32> to vector<8x1xf32>
    %86 = vector.extract_strided_slice %3 {offsets = [0, 6], sizes = [8, 1], strides = [1, 1]} : vector<8x8xf32> to vector<8x1xf32>
    %cst_30 = arith.constant 5.000000e-01 : f32
    %87 = vector.broadcast %cst_30 : f32 to vector<8x1xf32>
    %88 = arith.mulf %86, %87 : vector<8x1xf32>
    %89 = vector.extract_strided_slice %3 {offsets = [0, 7], sizes = [8, 1], strides = [1, 1]} : vector<8x8xf32> to vector<8x1xf32>
    %cst_31 = arith.constant 5.000000e-01 : f32
    %90 = vector.broadcast %cst_31 : f32 to vector<8x1xf32>
    %91 = arith.mulf %89, %90 : vector<8x1xf32>
    %92 = vector.extract_strided_slice %8 {offsets = [0, 32], sizes = [8, 16], strides = [1, 1]} : vector<8x64xf32> to vector<8x16xf32>
    %93 = vector.extract_strided_slice %8 {offsets = [0, 48], sizes = [8, 16], strides = [1, 1]} : vector<8x64xf32> to vector<8x16xf32>
    %cst_32 = arith.constant 2.500000e-01 : f32
    %94 = vector.broadcast %cst_32 : f32 to vector<8x16xf32>
    %95 = arith.mulf %92, %94 : vector<8x16xf32>
    %96 = vector.broadcast %88 : vector<8x1xf32> to vector<8x16xf32>
    %97 = arith.mulf %95, %96 : vector<8x16xf32>
    %98 = vector.broadcast %84 : vector<8x1xf32> to vector<8x16xf32>
    %99 = arith.addf %98, %97 : vector<8x16xf32>
    %cst_33 = arith.constant 4.000000e+00 : f32
    %100 = vector.broadcast %cst_33 : f32 to vector<8x16xf32>
    %101 = arith.mulf %99, %100 : vector<8x16xf32>
    %cst_34 = arith.constant 5.000000e-01 : f32
    %102 = vector.broadcast %cst_34 : f32 to vector<8x16xf32>
    %103 = arith.subf %101, %102 : vector<8x16xf32>
    %cst_35 = arith.constant 2.500000e-01 : f32
    %104 = vector.broadcast %cst_35 : f32 to vector<8x16xf32>
    %105 = arith.mulf %93, %104 : vector<8x16xf32>
    %106 = vector.broadcast %91 : vector<8x1xf32> to vector<8x16xf32>
    %107 = arith.mulf %105, %106 : vector<8x16xf32>
    %108 = vector.broadcast %85 : vector<8x1xf32> to vector<8x16xf32>
    %109 = arith.addf %108, %107 : vector<8x16xf32>
    %cst_36 = arith.constant 4.000000e+00 : f32
    %110 = vector.broadcast %cst_36 : f32 to vector<8x16xf32>
    %111 = arith.mulf %109, %110 : vector<8x16xf32>
    %cst_37 = arith.constant 5.000000e-01 : f32
    %112 = vector.broadcast %cst_37 : f32 to vector<8x16xf32>
    %113 = arith.subf %111, %112 : vector<8x16xf32>
    %c0_38 = arith.constant 0 : index
    %c0_39 = arith.constant 0 : index
    %114 = vector.load %arg5[%c0_38, %c0_39] : memref<2x256xf32, #tpu.memory_space<vmem>>, vector<1x128xf32>
    %c0_40 = arith.constant 0 : index
    %c128 = arith.constant 128 : index
    %115 = vector.load %arg5[%c0_40, %c128] : memref<2x256xf32, #tpu.memory_space<vmem>>, vector<1x128xf32>
    %c1 = arith.constant 1 : index
    %c0_41 = arith.constant 0 : index
    %116 = vector.load %arg5[%c1, %c0_41] : memref<2x256xf32, #tpu.memory_space<vmem>>, vector<1x128xf32>
    %c1_42 = arith.constant 1 : index
    %c128_43 = arith.constant 128 : index
    %117 = vector.load %arg5[%c1_42, %c128_43] : memref<2x256xf32, #tpu.memory_space<vmem>>, vector<1x128xf32>
    %cst_44 = arith.constant 0.000000e+00 : f32
    %118 = vector.broadcast %cst_44 : f32 to vector<8x32xf32>
    %119 = vector.extract_strided_slice %73 {offsets = [0, 0], sizes = [8, 1], strides = [1, 1]} : vector<8x16xf32> to vector<8x1xf32>
    %120 = vector.broadcast %116 : vector<1x128xf32> to vector<8x128xf32>
    %121 = vector.broadcast %119 : vector<8x1xf32> to vector<8x128xf32>
    %122 = arith.subf %120, %121 : vector<8x128xf32>
    %123 = math.absf %122 : vector<8x128xf32>
    %cst_45 = arith.constant 1.000000e+00 : f32
    %124 = vector.broadcast %cst_45 : f32 to vector<8x128xf32>
    %125 = arith.subf %124, %123 : vector<8x128xf32>
    %cst_46 = arith.constant 0.000000e+00 : f32
    %126 = vector.broadcast %cst_46 : f32 to vector<8x128xf32>
    %127 = arith.maximumf %126, %125 : vector<8x128xf32>
    %128 = vector.extract_strided_slice %83 {offsets = [0, 0], sizes = [8, 1], strides = [1, 1]} : vector<8x16xf32> to vector<8x1xf32>
    %129 = vector.broadcast %114 : vector<1x128xf32> to vector<8x128xf32>
    %130 = vector.broadcast %128 : vector<8x1xf32> to vector<8x128xf32>
    %131 = arith.subf %129, %130 : vector<8x128xf32>
    %132 = math.absf %131 : vector<8x128xf32>
    %cst_47 = arith.constant 1.000000e+00 : f32
    %133 = vector.broadcast %cst_47 : f32 to vector<8x128xf32>
    %134 = arith.subf %133, %132 : vector<8x128xf32>
    %cst_48 = arith.constant 0.000000e+00 : f32
    %135 = vector.broadcast %cst_48 : f32 to vector<8x128xf32>
    %136 = arith.maximumf %135, %134 : vector<8x128xf32>
    %137 = vector.extract_strided_slice %23 {offsets = [0, 0], sizes = [8, 1], strides = [1, 1]} : vector<8x8xf32> to vector<8x1xf32>
    %138 = arith.mulf %127, %136 : vector<8x128xf32>
    %139 = vector.broadcast %137 : vector<8x1xf32> to vector<8x128xf32>
    %140 = arith.mulf %139, %138 : vector<8x128xf32>
    %141 = vector.extract_strided_slice %73 {offsets = [0, 1], sizes = [8, 1], strides = [1, 1]} : vector<8x16xf32> to vector<8x1xf32>
    %142 = vector.broadcast %116 : vector<1x128xf32> to vector<8x128xf32>
    %143 = vector.broadcast %141 : vector<8x1xf32> to vector<8x128xf32>
    %144 = arith.subf %142, %143 : vector<8x128xf32>
    %145 = math.absf %144 : vector<8x128xf32>
    %cst_49 = arith.constant 1.000000e+00 : f32
    %146 = vector.broadcast %cst_49 : f32 to vector<8x128xf32>
    %147 = arith.subf %146, %145 : vector<8x128xf32>
    %cst_50 = arith.constant 0.000000e+00 : f32
    %148 = vector.broadcast %cst_50 : f32 to vector<8x128xf32>
    %149 = arith.maximumf %148, %147 : vector<8x128xf32>
    %150 = vector.extract_strided_slice %83 {offsets = [0, 1], sizes = [8, 1], strides = [1, 1]} : vector<8x16xf32> to vector<8x1xf32>
    %151 = vector.broadcast %114 : vector<1x128xf32> to vector<8x128xf32>
    %152 = vector.broadcast %150 : vector<8x1xf32> to vector<8x128xf32>
    %153 = arith.subf %151, %152 : vector<8x128xf32>
    %154 = math.absf %153 : vector<8x128xf32>
    %cst_51 = arith.constant 1.000000e+00 : f32
    %155 = vector.broadcast %cst_51 : f32 to vector<8x128xf32>
    %156 = arith.subf %155, %154 : vector<8x128xf32>
    %cst_52 = arith.constant 0.000000e+00 : f32
    %157 = vector.broadcast %cst_52 : f32 to vector<8x128xf32>
    %158 = arith.maximumf %157, %156 : vector<8x128xf32>
    %159 = vector.extract_strided_slice %23 {offsets = [0, 1], sizes = [8, 1], strides = [1, 1]} : vector<8x8xf32> to vector<8x1xf32>
    %160 = arith.mulf %149, %158 : vector<8x128xf32>
    %161 = vector.broadcast %159 : vector<8x1xf32> to vector<8x128xf32>
    %162 = arith.mulf %161, %160 : vector<8x128xf32>
    %163 = arith.addf %140, %162 : vector<8x128xf32>
    %164 = vector.extract_strided_slice %73 {offsets = [0, 2], sizes = [8, 1], strides = [1, 1]} : vector<8x16xf32> to vector<8x1xf32>
    %165 = vector.broadcast %116 : vector<1x128xf32> to vector<8x128xf32>
    %166 = vector.broadcast %164 : vector<8x1xf32> to vector<8x128xf32>
    %167 = arith.subf %165, %166 : vector<8x128xf32>
    %168 = math.absf %167 : vector<8x128xf32>
    %cst_53 = arith.constant 1.000000e+00 : f32
    %169 = vector.broadcast %cst_53 : f32 to vector<8x128xf32>
    %170 = arith.subf %169, %168 : vector<8x128xf32>
    %cst_54 = arith.constant 0.000000e+00 : f32
    %171 = vector.broadcast %cst_54 : f32 to vector<8x128xf32>
    %172 = arith.maximumf %171, %170 : vector<8x128xf32>
    %173 = vector.extract_strided_slice %83 {offsets = [0, 2], sizes = [8, 1], strides = [1, 1]} : vector<8x16xf32> to vector<8x1xf32>
    %174 = vector.broadcast %114 : vector<1x128xf32> to vector<8x128xf32>
    %175 = vector.broadcast %173 : vector<8x1xf32> to vector<8x128xf32>
    %176 = arith.subf %174, %175 : vector<8x128xf32>
    %177 = math.absf %176 : vector<8x128xf32>
    %cst_55 = arith.constant 1.000000e+00 : f32
    %178 = vector.broadcast %cst_55 : f32 to vector<8x128xf32>
    %179 = arith.subf %178, %177 : vector<8x128xf32>
    %cst_56 = arith.constant 0.000000e+00 : f32
    %180 = vector.broadcast %cst_56 : f32 to vector<8x128xf32>
    %181 = arith.maximumf %180, %179 : vector<8x128xf32>
    %182 = vector.extract_strided_slice %23 {offsets = [0, 2], sizes = [8, 1], strides = [1, 1]} : vector<8x8xf32> to vector<8x1xf32>
    %183 = arith.mulf %172, %181 : vector<8x128xf32>
    %184 = vector.broadcast %182 : vector<8x1xf32> to vector<8x128xf32>
    %185 = arith.mulf %184, %183 : vector<8x128xf32>
    %186 = arith.addf %163, %185 : vector<8x128xf32>
    %187 = vector.extract_strided_slice %73 {offsets = [0, 3], sizes = [8, 1], strides = [1, 1]} : vector<8x16xf32> to vector<8x1xf32>
    %188 = vector.broadcast %116 : vector<1x128xf32> to vector<8x128xf32>
    %189 = vector.broadcast %187 : vector<8x1xf32> to vector<8x128xf32>
    %190 = arith.subf %188, %189 : vector<8x128xf32>
    %191 = math.absf %190 : vector<8x128xf32>
    %cst_57 = arith.constant 1.000000e+00 : f32
    %192 = vector.broadcast %cst_57 : f32 to vector<8x128xf32>
    %193 = arith.subf %192, %191 : vector<8x128xf32>
    %cst_58 = arith.constant 0.000000e+00 : f32
    %194 = vector.broadcast %cst_58 : f32 to vector<8x128xf32>
    %195 = arith.maximumf %194, %193 : vector<8x128xf32>
    %196 = vector.extract_strided_slice %83 {offsets = [0, 3], sizes = [8, 1], strides = [1, 1]} : vector<8x16xf32> to vector<8x1xf32>
    %197 = vector.broadcast %114 : vector<1x128xf32> to vector<8x128xf32>
    %198 = vector.broadcast %196 : vector<8x1xf32> to vector<8x128xf32>
    %199 = arith.subf %197, %198 : vector<8x128xf32>
    %200 = math.absf %199 : vector<8x128xf32>
    %cst_59 = arith.constant 1.000000e+00 : f32
    %201 = vector.broadcast %cst_59 : f32 to vector<8x128xf32>
    %202 = arith.subf %201, %200 : vector<8x128xf32>
    %cst_60 = arith.constant 0.000000e+00 : f32
    %203 = vector.broadcast %cst_60 : f32 to vector<8x128xf32>
    %204 = arith.maximumf %203, %202 : vector<8x128xf32>
    %205 = vector.extract_strided_slice %23 {offsets = [0, 3], sizes = [8, 1], strides = [1, 1]} : vector<8x8xf32> to vector<8x1xf32>
    %206 = arith.mulf %195, %204 : vector<8x128xf32>
    %207 = vector.broadcast %205 : vector<8x1xf32> to vector<8x128xf32>
    %208 = arith.mulf %207, %206 : vector<8x128xf32>
    %209 = arith.addf %186, %208 : vector<8x128xf32>
    %210 = arith.truncf %209 : vector<8x128xf32> to vector<8x128xbf16>
    %c0_61 = arith.constant 0 : index
    %c0_62 = arith.constant 0 : index
    %c0_63 = arith.constant 0 : index
    %c0_64 = arith.constant 0 : index
    %211 = vector.load %arg4[%c0_61, %c0_62, %c0_63, %c0_64] : memref<1x4x256x32xbf16, #tpu.memory_space<vmem>>, vector<1x1x128x32xbf16>
    %212 = vector.shape_cast %211 : vector<1x1x128x32xbf16> to vector<128x32xbf16>
    %cst_65 = arith.constant dense<0.000000e+00> : vector<8x32xf32>
    %213 = tpu.matmul %210, %212, %cst_65 {dimension_numbers = #tpu.dot_dimension_numbers<[1], [0], [0], [1], [0, 0, 1, 1], [], []>} : vector<8x128xbf16>, vector<128x32xbf16>, vector<8x32xf32> -> vector<8x32xf32>
    %214 = arith.addf %118, %213 : vector<8x32xf32>
    %215 = vector.extract_strided_slice %103 {offsets = [0, 0], sizes = [8, 1], strides = [1, 1]} : vector<8x16xf32> to vector<8x1xf32>
    %216 = vector.broadcast %117 : vector<1x128xf32> to vector<8x128xf32>
    %217 = vector.broadcast %215 : vector<8x1xf32> to vector<8x128xf32>
    %218 = arith.subf %216, %217 : vector<8x128xf32>
    %219 = math.absf %218 : vector<8x128xf32>
    %cst_66 = arith.constant 1.000000e+00 : f32
    %220 = vector.broadcast %cst_66 : f32 to vector<8x128xf32>
    %221 = arith.subf %220, %219 : vector<8x128xf32>
    %cst_67 = arith.constant 0.000000e+00 : f32
    %222 = vector.broadcast %cst_67 : f32 to vector<8x128xf32>
    %223 = arith.maximumf %222, %221 : vector<8x128xf32>
    %224 = vector.extract_strided_slice %113 {offsets = [0, 0], sizes = [8, 1], strides = [1, 1]} : vector<8x16xf32> to vector<8x1xf32>
    %225 = vector.broadcast %115 : vector<1x128xf32> to vector<8x128xf32>
    %226 = vector.broadcast %224 : vector<8x1xf32> to vector<8x128xf32>
    %227 = arith.subf %225, %226 : vector<8x128xf32>
    %228 = math.absf %227 : vector<8x128xf32>
    %cst_68 = arith.constant 1.000000e+00 : f32
    %229 = vector.broadcast %cst_68 : f32 to vector<8x128xf32>
    %230 = arith.subf %229, %228 : vector<8x128xf32>
    %cst_69 = arith.constant 0.000000e+00 : f32
    %231 = vector.broadcast %cst_69 : f32 to vector<8x128xf32>
    %232 = arith.maximumf %231, %230 : vector<8x128xf32>
    %233 = vector.extract_strided_slice %23 {offsets = [0, 4], sizes = [8, 1], strides = [1, 1]} : vector<8x8xf32> to vector<8x1xf32>
    %234 = arith.mulf %223, %232 : vector<8x128xf32>
    %235 = vector.broadcast %233 : vector<8x1xf32> to vector<8x128xf32>
    %236 = arith.mulf %235, %234 : vector<8x128xf32>
    %237 = vector.extract_strided_slice %103 {offsets = [0, 1], sizes = [8, 1], strides = [1, 1]} : vector<8x16xf32> to vector<8x1xf32>
    %238 = vector.broadcast %117 : vector<1x128xf32> to vector<8x128xf32>
    %239 = vector.broadcast %237 : vector<8x1xf32> to vector<8x128xf32>
    %240 = arith.subf %238, %239 : vector<8x128xf32>
    %241 = math.absf %240 : vector<8x128xf32>
    %cst_70 = arith.constant 1.000000e+00 : f32
    %242 = vector.broadcast %cst_70 : f32 to vector<8x128xf32>
    %243 = arith.subf %242, %241 : vector<8x128xf32>
    %cst_71 = arith.constant 0.000000e+00 : f32
    %244 = vector.broadcast %cst_71 : f32 to vector<8x128xf32>
    %245 = arith.maximumf %244, %243 : vector<8x128xf32>
    %246 = vector.extract_strided_slice %113 {offsets = [0, 1], sizes = [8, 1], strides = [1, 1]} : vector<8x16xf32> to vector<8x1xf32>
    %247 = vector.broadcast %115 : vector<1x128xf32> to vector<8x128xf32>
    %248 = vector.broadcast %246 : vector<8x1xf32> to vector<8x128xf32>
    %249 = arith.subf %247, %248 : vector<8x128xf32>
    %250 = math.absf %249 : vector<8x128xf32>
    %cst_72 = arith.constant 1.000000e+00 : f32
    %251 = vector.broadcast %cst_72 : f32 to vector<8x128xf32>
    %252 = arith.subf %251, %250 : vector<8x128xf32>
    %cst_73 = arith.constant 0.000000e+00 : f32
    %253 = vector.broadcast %cst_73 : f32 to vector<8x128xf32>
    %254 = arith.maximumf %253, %252 : vector<8x128xf32>
    %255 = vector.extract_strided_slice %23 {offsets = [0, 5], sizes = [8, 1], strides = [1, 1]} : vector<8x8xf32> to vector<8x1xf32>
    %256 = arith.mulf %245, %254 : vector<8x128xf32>
    %257 = vector.broadcast %255 : vector<8x1xf32> to vector<8x128xf32>
    %258 = arith.mulf %257, %256 : vector<8x128xf32>
    %259 = arith.addf %236, %258 : vector<8x128xf32>
    %260 = vector.extract_strided_slice %103 {offsets = [0, 2], sizes = [8, 1], strides = [1, 1]} : vector<8x16xf32> to vector<8x1xf32>
    %261 = vector.broadcast %117 : vector<1x128xf32> to vector<8x128xf32>
    %262 = vector.broadcast %260 : vector<8x1xf32> to vector<8x128xf32>
    %263 = arith.subf %261, %262 : vector<8x128xf32>
    %264 = math.absf %263 : vector<8x128xf32>
    %cst_74 = arith.constant 1.000000e+00 : f32
    %265 = vector.broadcast %cst_74 : f32 to vector<8x128xf32>
    %266 = arith.subf %265, %264 : vector<8x128xf32>
    %cst_75 = arith.constant 0.000000e+00 : f32
    %267 = vector.broadcast %cst_75 : f32 to vector<8x128xf32>
    %268 = arith.maximumf %267, %266 : vector<8x128xf32>
    %269 = vector.extract_strided_slice %113 {offsets = [0, 2], sizes = [8, 1], strides = [1, 1]} : vector<8x16xf32> to vector<8x1xf32>
    %270 = vector.broadcast %115 : vector<1x128xf32> to vector<8x128xf32>
    %271 = vector.broadcast %269 : vector<8x1xf32> to vector<8x128xf32>
    %272 = arith.subf %270, %271 : vector<8x128xf32>
    %273 = math.absf %272 : vector<8x128xf32>
    %cst_76 = arith.constant 1.000000e+00 : f32
    %274 = vector.broadcast %cst_76 : f32 to vector<8x128xf32>
    %275 = arith.subf %274, %273 : vector<8x128xf32>
    %cst_77 = arith.constant 0.000000e+00 : f32
    %276 = vector.broadcast %cst_77 : f32 to vector<8x128xf32>
    %277 = arith.maximumf %276, %275 : vector<8x128xf32>
    %278 = vector.extract_strided_slice %23 {offsets = [0, 6], sizes = [8, 1], strides = [1, 1]} : vector<8x8xf32> to vector<8x1xf32>
    %279 = arith.mulf %268, %277 : vector<8x128xf32>
    %280 = vector.broadcast %278 : vector<8x1xf32> to vector<8x128xf32>
    %281 = arith.mulf %280, %279 : vector<8x128xf32>
    %282 = arith.addf %259, %281 : vector<8x128xf32>
    %283 = vector.extract_strided_slice %103 {offsets = [0, 3], sizes = [8, 1], strides = [1, 1]} : vector<8x16xf32> to vector<8x1xf32>
    %284 = vector.broadcast %117 : vector<1x128xf32> to vector<8x128xf32>
    %285 = vector.broadcast %283 : vector<8x1xf32> to vector<8x128xf32>
    %286 = arith.subf %284, %285 : vector<8x128xf32>
    %287 = math.absf %286 : vector<8x128xf32>
    %cst_78 = arith.constant 1.000000e+00 : f32
    %288 = vector.broadcast %cst_78 : f32 to vector<8x128xf32>
    %289 = arith.subf %288, %287 : vector<8x128xf32>
    %cst_79 = arith.constant 0.000000e+00 : f32
    %290 = vector.broadcast %cst_79 : f32 to vector<8x128xf32>
    %291 = arith.maximumf %290, %289 : vector<8x128xf32>
    %292 = vector.extract_strided_slice %113 {offsets = [0, 3], sizes = [8, 1], strides = [1, 1]} : vector<8x16xf32> to vector<8x1xf32>
    %293 = vector.broadcast %115 : vector<1x128xf32> to vector<8x128xf32>
    %294 = vector.broadcast %292 : vector<8x1xf32> to vector<8x128xf32>
    %295 = arith.subf %293, %294 : vector<8x128xf32>
    %296 = math.absf %295 : vector<8x128xf32>
    %cst_80 = arith.constant 1.000000e+00 : f32
    %297 = vector.broadcast %cst_80 : f32 to vector<8x128xf32>
    %298 = arith.subf %297, %296 : vector<8x128xf32>
    %cst_81 = arith.constant 0.000000e+00 : f32
    %299 = vector.broadcast %cst_81 : f32 to vector<8x128xf32>
    %300 = arith.maximumf %299, %298 : vector<8x128xf32>
    %301 = vector.extract_strided_slice %23 {offsets = [0, 7], sizes = [8, 1], strides = [1, 1]} : vector<8x8xf32> to vector<8x1xf32>
    %302 = arith.mulf %291, %300 : vector<8x128xf32>
    %303 = vector.broadcast %301 : vector<8x1xf32> to vector<8x128xf32>
    %304 = arith.mulf %303, %302 : vector<8x128xf32>
    %305 = arith.addf %282, %304 : vector<8x128xf32>
    %306 = arith.truncf %305 : vector<8x128xf32> to vector<8x128xbf16>
    %c0_82 = arith.constant 0 : index
    %c0_83 = arith.constant 0 : index
    %c128_84 = arith.constant 128 : index
    %c0_85 = arith.constant 0 : index
    %307 = vector.load %arg4[%c0_82, %c0_83, %c128_84, %c0_85] : memref<1x4x256x32xbf16, #tpu.memory_space<vmem>>, vector<1x1x128x32xbf16>
    %308 = vector.shape_cast %307 : vector<1x1x128x32xbf16> to vector<128x32xbf16>
    %cst_86 = arith.constant dense<0.000000e+00> : vector<8x32xf32>
    %309 = tpu.matmul %306, %308, %cst_86 {dimension_numbers = #tpu.dot_dimension_numbers<[1], [0], [0], [1], [0, 0, 1, 1], [], []>} : vector<8x128xbf16>, vector<128x32xbf16>, vector<8x32xf32> -> vector<8x32xf32>
    %310 = arith.addf %214, %309 : vector<8x32xf32>
    %311 = vector.extract_strided_slice %73 {offsets = [0, 4], sizes = [8, 1], strides = [1, 1]} : vector<8x16xf32> to vector<8x1xf32>
    %312 = vector.broadcast %116 : vector<1x128xf32> to vector<8x128xf32>
    %313 = vector.broadcast %311 : vector<8x1xf32> to vector<8x128xf32>
    %314 = arith.subf %312, %313 : vector<8x128xf32>
    %315 = math.absf %314 : vector<8x128xf32>
    %cst_87 = arith.constant 1.000000e+00 : f32
    %316 = vector.broadcast %cst_87 : f32 to vector<8x128xf32>
    %317 = arith.subf %316, %315 : vector<8x128xf32>
    %cst_88 = arith.constant 0.000000e+00 : f32
    %318 = vector.broadcast %cst_88 : f32 to vector<8x128xf32>
    %319 = arith.maximumf %318, %317 : vector<8x128xf32>
    %320 = vector.extract_strided_slice %83 {offsets = [0, 4], sizes = [8, 1], strides = [1, 1]} : vector<8x16xf32> to vector<8x1xf32>
    %321 = vector.broadcast %114 : vector<1x128xf32> to vector<8x128xf32>
    %322 = vector.broadcast %320 : vector<8x1xf32> to vector<8x128xf32>
    %323 = arith.subf %321, %322 : vector<8x128xf32>
    %324 = math.absf %323 : vector<8x128xf32>
    %cst_89 = arith.constant 1.000000e+00 : f32
    %325 = vector.broadcast %cst_89 : f32 to vector<8x128xf32>
    %326 = arith.subf %325, %324 : vector<8x128xf32>
    %cst_90 = arith.constant 0.000000e+00 : f32
    %327 = vector.broadcast %cst_90 : f32 to vector<8x128xf32>
    %328 = arith.maximumf %327, %326 : vector<8x128xf32>
    %329 = vector.extract_strided_slice %33 {offsets = [0, 0], sizes = [8, 1], strides = [1, 1]} : vector<8x8xf32> to vector<8x1xf32>
    %330 = arith.mulf %319, %328 : vector<8x128xf32>
    %331 = vector.broadcast %329 : vector<8x1xf32> to vector<8x128xf32>
    %332 = arith.mulf %331, %330 : vector<8x128xf32>
    %333 = vector.extract_strided_slice %73 {offsets = [0, 5], sizes = [8, 1], strides = [1, 1]} : vector<8x16xf32> to vector<8x1xf32>
    %334 = vector.broadcast %116 : vector<1x128xf32> to vector<8x128xf32>
    %335 = vector.broadcast %333 : vector<8x1xf32> to vector<8x128xf32>
    %336 = arith.subf %334, %335 : vector<8x128xf32>
    %337 = math.absf %336 : vector<8x128xf32>
    %cst_91 = arith.constant 1.000000e+00 : f32
    %338 = vector.broadcast %cst_91 : f32 to vector<8x128xf32>
    %339 = arith.subf %338, %337 : vector<8x128xf32>
    %cst_92 = arith.constant 0.000000e+00 : f32
    %340 = vector.broadcast %cst_92 : f32 to vector<8x128xf32>
    %341 = arith.maximumf %340, %339 : vector<8x128xf32>
    %342 = vector.extract_strided_slice %83 {offsets = [0, 5], sizes = [8, 1], strides = [1, 1]} : vector<8x16xf32> to vector<8x1xf32>
    %343 = vector.broadcast %114 : vector<1x128xf32> to vector<8x128xf32>
    %344 = vector.broadcast %342 : vector<8x1xf32> to vector<8x128xf32>
    %345 = arith.subf %343, %344 : vector<8x128xf32>
    %346 = math.absf %345 : vector<8x128xf32>
    %cst_93 = arith.constant 1.000000e+00 : f32
    %347 = vector.broadcast %cst_93 : f32 to vector<8x128xf32>
    %348 = arith.subf %347, %346 : vector<8x128xf32>
    %cst_94 = arith.constant 0.000000e+00 : f32
    %349 = vector.broadcast %cst_94 : f32 to vector<8x128xf32>
    %350 = arith.maximumf %349, %348 : vector<8x128xf32>
    %351 = vector.extract_strided_slice %33 {offsets = [0, 1], sizes = [8, 1], strides = [1, 1]} : vector<8x8xf32> to vector<8x1xf32>
    %352 = arith.mulf %341, %350 : vector<8x128xf32>
    %353 = vector.broadcast %351 : vector<8x1xf32> to vector<8x128xf32>
    %354 = arith.mulf %353, %352 : vector<8x128xf32>
    %355 = arith.addf %332, %354 : vector<8x128xf32>
    %356 = vector.extract_strided_slice %73 {offsets = [0, 6], sizes = [8, 1], strides = [1, 1]} : vector<8x16xf32> to vector<8x1xf32>
    %357 = vector.broadcast %116 : vector<1x128xf32> to vector<8x128xf32>
    %358 = vector.broadcast %356 : vector<8x1xf32> to vector<8x128xf32>
    %359 = arith.subf %357, %358 : vector<8x128xf32>
    %360 = math.absf %359 : vector<8x128xf32>
    %cst_95 = arith.constant 1.000000e+00 : f32
    %361 = vector.broadcast %cst_95 : f32 to vector<8x128xf32>
    %362 = arith.subf %361, %360 : vector<8x128xf32>
    %cst_96 = arith.constant 0.000000e+00 : f32
    %363 = vector.broadcast %cst_96 : f32 to vector<8x128xf32>
    %364 = arith.maximumf %363, %362 : vector<8x128xf32>
    %365 = vector.extract_strided_slice %83 {offsets = [0, 6], sizes = [8, 1], strides = [1, 1]} : vector<8x16xf32> to vector<8x1xf32>
    %366 = vector.broadcast %114 : vector<1x128xf32> to vector<8x128xf32>
    %367 = vector.broadcast %365 : vector<8x1xf32> to vector<8x128xf32>
    %368 = arith.subf %366, %367 : vector<8x128xf32>
    %369 = math.absf %368 : vector<8x128xf32>
    %cst_97 = arith.constant 1.000000e+00 : f32
    %370 = vector.broadcast %cst_97 : f32 to vector<8x128xf32>
    %371 = arith.subf %370, %369 : vector<8x128xf32>
    %cst_98 = arith.constant 0.000000e+00 : f32
    %372 = vector.broadcast %cst_98 : f32 to vector<8x128xf32>
    %373 = arith.maximumf %372, %371 : vector<8x128xf32>
    %374 = vector.extract_strided_slice %33 {offsets = [0, 2], sizes = [8, 1], strides = [1, 1]} : vector<8x8xf32> to vector<8x1xf32>
    %375 = arith.mulf %364, %373 : vector<8x128xf32>
    %376 = vector.broadcast %374 : vector<8x1xf32> to vector<8x128xf32>
    %377 = arith.mulf %376, %375 : vector<8x128xf32>
    %378 = arith.addf %355, %377 : vector<8x128xf32>
    %379 = vector.extract_strided_slice %73 {offsets = [0, 7], sizes = [8, 1], strides = [1, 1]} : vector<8x16xf32> to vector<8x1xf32>
    %380 = vector.broadcast %116 : vector<1x128xf32> to vector<8x128xf32>
    %381 = vector.broadcast %379 : vector<8x1xf32> to vector<8x128xf32>
    %382 = arith.subf %380, %381 : vector<8x128xf32>
    %383 = math.absf %382 : vector<8x128xf32>
    %cst_99 = arith.constant 1.000000e+00 : f32
    %384 = vector.broadcast %cst_99 : f32 to vector<8x128xf32>
    %385 = arith.subf %384, %383 : vector<8x128xf32>
    %cst_100 = arith.constant 0.000000e+00 : f32
    %386 = vector.broadcast %cst_100 : f32 to vector<8x128xf32>
    %387 = arith.maximumf %386, %385 : vector<8x128xf32>
    %388 = vector.extract_strided_slice %83 {offsets = [0, 7], sizes = [8, 1], strides = [1, 1]} : vector<8x16xf32> to vector<8x1xf32>
    %389 = vector.broadcast %114 : vector<1x128xf32> to vector<8x128xf32>
    %390 = vector.broadcast %388 : vector<8x1xf32> to vector<8x128xf32>
    %391 = arith.subf %389, %390 : vector<8x128xf32>
    %392 = math.absf %391 : vector<8x128xf32>
    %cst_101 = arith.constant 1.000000e+00 : f32
    %393 = vector.broadcast %cst_101 : f32 to vector<8x128xf32>
    %394 = arith.subf %393, %392 : vector<8x128xf32>
    %cst_102 = arith.constant 0.000000e+00 : f32
    %395 = vector.broadcast %cst_102 : f32 to vector<8x128xf32>
    %396 = arith.maximumf %395, %394 : vector<8x128xf32>
    %397 = vector.extract_strided_slice %33 {offsets = [0, 3], sizes = [8, 1], strides = [1, 1]} : vector<8x8xf32> to vector<8x1xf32>
    %398 = arith.mulf %387, %396 : vector<8x128xf32>
    %399 = vector.broadcast %397 : vector<8x1xf32> to vector<8x128xf32>
    %400 = arith.mulf %399, %398 : vector<8x128xf32>
    %401 = arith.addf %378, %400 : vector<8x128xf32>
    %402 = arith.truncf %401 : vector<8x128xf32> to vector<8x128xbf16>
    %c0_103 = arith.constant 0 : index
    %c1_104 = arith.constant 1 : index
    %c0_105 = arith.constant 0 : index
    %c0_106 = arith.constant 0 : index
    %403 = vector.load %arg4[%c0_103, %c1_104, %c0_105, %c0_106] : memref<1x4x256x32xbf16, #tpu.memory_space<vmem>>, vector<1x1x128x32xbf16>
    %404 = vector.shape_cast %403 : vector<1x1x128x32xbf16> to vector<128x32xbf16>
    %cst_107 = arith.constant dense<0.000000e+00> : vector<8x32xf32>
    %405 = tpu.matmul %402, %404, %cst_107 {dimension_numbers = #tpu.dot_dimension_numbers<[1], [0], [0], [1], [0, 0, 1, 1], [], []>} : vector<8x128xbf16>, vector<128x32xbf16>, vector<8x32xf32> -> vector<8x32xf32>
    %406 = arith.addf %310, %405 : vector<8x32xf32>
    %407 = vector.extract_strided_slice %103 {offsets = [0, 4], sizes = [8, 1], strides = [1, 1]} : vector<8x16xf32> to vector<8x1xf32>
    %408 = vector.broadcast %117 : vector<1x128xf32> to vector<8x128xf32>
    %409 = vector.broadcast %407 : vector<8x1xf32> to vector<8x128xf32>
    %410 = arith.subf %408, %409 : vector<8x128xf32>
    %411 = math.absf %410 : vector<8x128xf32>
    %cst_108 = arith.constant 1.000000e+00 : f32
    %412 = vector.broadcast %cst_108 : f32 to vector<8x128xf32>
    %413 = arith.subf %412, %411 : vector<8x128xf32>
    %cst_109 = arith.constant 0.000000e+00 : f32
    %414 = vector.broadcast %cst_109 : f32 to vector<8x128xf32>
    %415 = arith.maximumf %414, %413 : vector<8x128xf32>
    %416 = vector.extract_strided_slice %113 {offsets = [0, 4], sizes = [8, 1], strides = [1, 1]} : vector<8x16xf32> to vector<8x1xf32>
    %417 = vector.broadcast %115 : vector<1x128xf32> to vector<8x128xf32>
    %418 = vector.broadcast %416 : vector<8x1xf32> to vector<8x128xf32>
    %419 = arith.subf %417, %418 : vector<8x128xf32>
    %420 = math.absf %419 : vector<8x128xf32>
    %cst_110 = arith.constant 1.000000e+00 : f32
    %421 = vector.broadcast %cst_110 : f32 to vector<8x128xf32>
    %422 = arith.subf %421, %420 : vector<8x128xf32>
    %cst_111 = arith.constant 0.000000e+00 : f32
    %423 = vector.broadcast %cst_111 : f32 to vector<8x128xf32>
    %424 = arith.maximumf %423, %422 : vector<8x128xf32>
    %425 = vector.extract_strided_slice %33 {offsets = [0, 4], sizes = [8, 1], strides = [1, 1]} : vector<8x8xf32> to vector<8x1xf32>
    %426 = arith.mulf %415, %424 : vector<8x128xf32>
    %427 = vector.broadcast %425 : vector<8x1xf32> to vector<8x128xf32>
    %428 = arith.mulf %427, %426 : vector<8x128xf32>
    %429 = vector.extract_strided_slice %103 {offsets = [0, 5], sizes = [8, 1], strides = [1, 1]} : vector<8x16xf32> to vector<8x1xf32>
    %430 = vector.broadcast %117 : vector<1x128xf32> to vector<8x128xf32>
    %431 = vector.broadcast %429 : vector<8x1xf32> to vector<8x128xf32>
    %432 = arith.subf %430, %431 : vector<8x128xf32>
    %433 = math.absf %432 : vector<8x128xf32>
    %cst_112 = arith.constant 1.000000e+00 : f32
    %434 = vector.broadcast %cst_112 : f32 to vector<8x128xf32>
    %435 = arith.subf %434, %433 : vector<8x128xf32>
    %cst_113 = arith.constant 0.000000e+00 : f32
    %436 = vector.broadcast %cst_113 : f32 to vector<8x128xf32>
    %437 = arith.maximumf %436, %435 : vector<8x128xf32>
    %438 = vector.extract_strided_slice %113 {offsets = [0, 5], sizes = [8, 1], strides = [1, 1]} : vector<8x16xf32> to vector<8x1xf32>
    %439 = vector.broadcast %115 : vector<1x128xf32> to vector<8x128xf32>
    %440 = vector.broadcast %438 : vector<8x1xf32> to vector<8x128xf32>
    %441 = arith.subf %439, %440 : vector<8x128xf32>
    %442 = math.absf %441 : vector<8x128xf32>
    %cst_114 = arith.constant 1.000000e+00 : f32
    %443 = vector.broadcast %cst_114 : f32 to vector<8x128xf32>
    %444 = arith.subf %443, %442 : vector<8x128xf32>
    %cst_115 = arith.constant 0.000000e+00 : f32
    %445 = vector.broadcast %cst_115 : f32 to vector<8x128xf32>
    %446 = arith.maximumf %445, %444 : vector<8x128xf32>
    %447 = vector.extract_strided_slice %33 {offsets = [0, 5], sizes = [8, 1], strides = [1, 1]} : vector<8x8xf32> to vector<8x1xf32>
    %448 = arith.mulf %437, %446 : vector<8x128xf32>
    %449 = vector.broadcast %447 : vector<8x1xf32> to vector<8x128xf32>
    %450 = arith.mulf %449, %448 : vector<8x128xf32>
    %451 = arith.addf %428, %450 : vector<8x128xf32>
    %452 = vector.extract_strided_slice %103 {offsets = [0, 6], sizes = [8, 1], strides = [1, 1]} : vector<8x16xf32> to vector<8x1xf32>
    %453 = vector.broadcast %117 : vector<1x128xf32> to vector<8x128xf32>
    %454 = vector.broadcast %452 : vector<8x1xf32> to vector<8x128xf32>
    %455 = arith.subf %453, %454 : vector<8x128xf32>
    %456 = math.absf %455 : vector<8x128xf32>
    %cst_116 = arith.constant 1.000000e+00 : f32
    %457 = vector.broadcast %cst_116 : f32 to vector<8x128xf32>
    %458 = arith.subf %457, %456 : vector<8x128xf32>
    %cst_117 = arith.constant 0.000000e+00 : f32
    %459 = vector.broadcast %cst_117 : f32 to vector<8x128xf32>
    %460 = arith.maximumf %459, %458 : vector<8x128xf32>
    %461 = vector.extract_strided_slice %113 {offsets = [0, 6], sizes = [8, 1], strides = [1, 1]} : vector<8x16xf32> to vector<8x1xf32>
    %462 = vector.broadcast %115 : vector<1x128xf32> to vector<8x128xf32>
    %463 = vector.broadcast %461 : vector<8x1xf32> to vector<8x128xf32>
    %464 = arith.subf %462, %463 : vector<8x128xf32>
    %465 = math.absf %464 : vector<8x128xf32>
    %cst_118 = arith.constant 1.000000e+00 : f32
    %466 = vector.broadcast %cst_118 : f32 to vector<8x128xf32>
    %467 = arith.subf %466, %465 : vector<8x128xf32>
    %cst_119 = arith.constant 0.000000e+00 : f32
    %468 = vector.broadcast %cst_119 : f32 to vector<8x128xf32>
    %469 = arith.maximumf %468, %467 : vector<8x128xf32>
    %470 = vector.extract_strided_slice %33 {offsets = [0, 6], sizes = [8, 1], strides = [1, 1]} : vector<8x8xf32> to vector<8x1xf32>
    %471 = arith.mulf %460, %469 : vector<8x128xf32>
    %472 = vector.broadcast %470 : vector<8x1xf32> to vector<8x128xf32>
    %473 = arith.mulf %472, %471 : vector<8x128xf32>
    %474 = arith.addf %451, %473 : vector<8x128xf32>
    %475 = vector.extract_strided_slice %103 {offsets = [0, 7], sizes = [8, 1], strides = [1, 1]} : vector<8x16xf32> to vector<8x1xf32>
    %476 = vector.broadcast %117 : vector<1x128xf32> to vector<8x128xf32>
    %477 = vector.broadcast %475 : vector<8x1xf32> to vector<8x128xf32>
    %478 = arith.subf %476, %477 : vector<8x128xf32>
    %479 = math.absf %478 : vector<8x128xf32>
    %cst_120 = arith.constant 1.000000e+00 : f32
    %480 = vector.broadcast %cst_120 : f32 to vector<8x128xf32>
    %481 = arith.subf %480, %479 : vector<8x128xf32>
    %cst_121 = arith.constant 0.000000e+00 : f32
    %482 = vector.broadcast %cst_121 : f32 to vector<8x128xf32>
    %483 = arith.maximumf %482, %481 : vector<8x128xf32>
    %484 = vector.extract_strided_slice %113 {offsets = [0, 7], sizes = [8, 1], strides = [1, 1]} : vector<8x16xf32> to vector<8x1xf32>
    %485 = vector.broadcast %115 : vector<1x128xf32> to vector<8x128xf32>
    %486 = vector.broadcast %484 : vector<8x1xf32> to vector<8x128xf32>
    %487 = arith.subf %485, %486 : vector<8x128xf32>
    %488 = math.absf %487 : vector<8x128xf32>
    %cst_122 = arith.constant 1.000000e+00 : f32
    %489 = vector.broadcast %cst_122 : f32 to vector<8x128xf32>
    %490 = arith.subf %489, %488 : vector<8x128xf32>
    %cst_123 = arith.constant 0.000000e+00 : f32
    %491 = vector.broadcast %cst_123 : f32 to vector<8x128xf32>
    %492 = arith.maximumf %491, %490 : vector<8x128xf32>
    %493 = vector.extract_strided_slice %33 {offsets = [0, 7], sizes = [8, 1], strides = [1, 1]} : vector<8x8xf32> to vector<8x1xf32>
    %494 = arith.mulf %483, %492 : vector<8x128xf32>
    %495 = vector.broadcast %493 : vector<8x1xf32> to vector<8x128xf32>
    %496 = arith.mulf %495, %494 : vector<8x128xf32>
    %497 = arith.addf %474, %496 : vector<8x128xf32>
    %498 = arith.truncf %497 : vector<8x128xf32> to vector<8x128xbf16>
    %c0_124 = arith.constant 0 : index
    %c1_125 = arith.constant 1 : index
    %c128_126 = arith.constant 128 : index
    %c0_127 = arith.constant 0 : index
    %499 = vector.load %arg4[%c0_124, %c1_125, %c128_126, %c0_127] : memref<1x4x256x32xbf16, #tpu.memory_space<vmem>>, vector<1x1x128x32xbf16>
    %500 = vector.shape_cast %499 : vector<1x1x128x32xbf16> to vector<128x32xbf16>
    %cst_128 = arith.constant dense<0.000000e+00> : vector<8x32xf32>
    %501 = tpu.matmul %498, %500, %cst_128 {dimension_numbers = #tpu.dot_dimension_numbers<[1], [0], [0], [1], [0, 0, 1, 1], [], []>} : vector<8x128xbf16>, vector<128x32xbf16>, vector<8x32xf32> -> vector<8x32xf32>
    %502 = arith.addf %406, %501 : vector<8x32xf32>
    %503 = vector.extract_strided_slice %73 {offsets = [0, 8], sizes = [8, 1], strides = [1, 1]} : vector<8x16xf32> to vector<8x1xf32>
    %504 = vector.broadcast %116 : vector<1x128xf32> to vector<8x128xf32>
    %505 = vector.broadcast %503 : vector<8x1xf32> to vector<8x128xf32>
    %506 = arith.subf %504, %505 : vector<8x128xf32>
    %507 = math.absf %506 : vector<8x128xf32>
    %cst_129 = arith.constant 1.000000e+00 : f32
    %508 = vector.broadcast %cst_129 : f32 to vector<8x128xf32>
    %509 = arith.subf %508, %507 : vector<8x128xf32>
    %cst_130 = arith.constant 0.000000e+00 : f32
    %510 = vector.broadcast %cst_130 : f32 to vector<8x128xf32>
    %511 = arith.maximumf %510, %509 : vector<8x128xf32>
    %512 = vector.extract_strided_slice %83 {offsets = [0, 8], sizes = [8, 1], strides = [1, 1]} : vector<8x16xf32> to vector<8x1xf32>
    %513 = vector.broadcast %114 : vector<1x128xf32> to vector<8x128xf32>
    %514 = vector.broadcast %512 : vector<8x1xf32> to vector<8x128xf32>
    %515 = arith.subf %513, %514 : vector<8x128xf32>
    %516 = math.absf %515 : vector<8x128xf32>
    %cst_131 = arith.constant 1.000000e+00 : f32
    %517 = vector.broadcast %cst_131 : f32 to vector<8x128xf32>
    %518 = arith.subf %517, %516 : vector<8x128xf32>
    %cst_132 = arith.constant 0.000000e+00 : f32
    %519 = vector.broadcast %cst_132 : f32 to vector<8x128xf32>
    %520 = arith.maximumf %519, %518 : vector<8x128xf32>
    %521 = vector.extract_strided_slice %43 {offsets = [0, 0], sizes = [8, 1], strides = [1, 1]} : vector<8x8xf32> to vector<8x1xf32>
    %522 = arith.mulf %511, %520 : vector<8x128xf32>
    %523 = vector.broadcast %521 : vector<8x1xf32> to vector<8x128xf32>
    %524 = arith.mulf %523, %522 : vector<8x128xf32>
    %525 = vector.extract_strided_slice %73 {offsets = [0, 9], sizes = [8, 1], strides = [1, 1]} : vector<8x16xf32> to vector<8x1xf32>
    %526 = vector.broadcast %116 : vector<1x128xf32> to vector<8x128xf32>
    %527 = vector.broadcast %525 : vector<8x1xf32> to vector<8x128xf32>
    %528 = arith.subf %526, %527 : vector<8x128xf32>
    %529 = math.absf %528 : vector<8x128xf32>
    %cst_133 = arith.constant 1.000000e+00 : f32
    %530 = vector.broadcast %cst_133 : f32 to vector<8x128xf32>
    %531 = arith.subf %530, %529 : vector<8x128xf32>
    %cst_134 = arith.constant 0.000000e+00 : f32
    %532 = vector.broadcast %cst_134 : f32 to vector<8x128xf32>
    %533 = arith.maximumf %532, %531 : vector<8x128xf32>
    %534 = vector.extract_strided_slice %83 {offsets = [0, 9], sizes = [8, 1], strides = [1, 1]} : vector<8x16xf32> to vector<8x1xf32>
    %535 = vector.broadcast %114 : vector<1x128xf32> to vector<8x128xf32>
    %536 = vector.broadcast %534 : vector<8x1xf32> to vector<8x128xf32>
    %537 = arith.subf %535, %536 : vector<8x128xf32>
    %538 = math.absf %537 : vector<8x128xf32>
    %cst_135 = arith.constant 1.000000e+00 : f32
    %539 = vector.broadcast %cst_135 : f32 to vector<8x128xf32>
    %540 = arith.subf %539, %538 : vector<8x128xf32>
    %cst_136 = arith.constant 0.000000e+00 : f32
    %541 = vector.broadcast %cst_136 : f32 to vector<8x128xf32>
    %542 = arith.maximumf %541, %540 : vector<8x128xf32>
    %543 = vector.extract_strided_slice %43 {offsets = [0, 1], sizes = [8, 1], strides = [1, 1]} : vector<8x8xf32> to vector<8x1xf32>
    %544 = arith.mulf %533, %542 : vector<8x128xf32>
    %545 = vector.broadcast %543 : vector<8x1xf32> to vector<8x128xf32>
    %546 = arith.mulf %545, %544 : vector<8x128xf32>
    %547 = arith.addf %524, %546 : vector<8x128xf32>
    %548 = vector.extract_strided_slice %73 {offsets = [0, 10], sizes = [8, 1], strides = [1, 1]} : vector<8x16xf32> to vector<8x1xf32>
    %549 = vector.broadcast %116 : vector<1x128xf32> to vector<8x128xf32>
    %550 = vector.broadcast %548 : vector<8x1xf32> to vector<8x128xf32>
    %551 = arith.subf %549, %550 : vector<8x128xf32>
    %552 = math.absf %551 : vector<8x128xf32>
    %cst_137 = arith.constant 1.000000e+00 : f32
    %553 = vector.broadcast %cst_137 : f32 to vector<8x128xf32>
    %554 = arith.subf %553, %552 : vector<8x128xf32>
    %cst_138 = arith.constant 0.000000e+00 : f32
    %555 = vector.broadcast %cst_138 : f32 to vector<8x128xf32>
    %556 = arith.maximumf %555, %554 : vector<8x128xf32>
    %557 = vector.extract_strided_slice %83 {offsets = [0, 10], sizes = [8, 1], strides = [1, 1]} : vector<8x16xf32> to vector<8x1xf32>
    %558 = vector.broadcast %114 : vector<1x128xf32> to vector<8x128xf32>
    %559 = vector.broadcast %557 : vector<8x1xf32> to vector<8x128xf32>
    %560 = arith.subf %558, %559 : vector<8x128xf32>
    %561 = math.absf %560 : vector<8x128xf32>
    %cst_139 = arith.constant 1.000000e+00 : f32
    %562 = vector.broadcast %cst_139 : f32 to vector<8x128xf32>
    %563 = arith.subf %562, %561 : vector<8x128xf32>
    %cst_140 = arith.constant 0.000000e+00 : f32
    %564 = vector.broadcast %cst_140 : f32 to vector<8x128xf32>
    %565 = arith.maximumf %564, %563 : vector<8x128xf32>
    %566 = vector.extract_strided_slice %43 {offsets = [0, 2], sizes = [8, 1], strides = [1, 1]} : vector<8x8xf32> to vector<8x1xf32>
    %567 = arith.mulf %556, %565 : vector<8x128xf32>
    %568 = vector.broadcast %566 : vector<8x1xf32> to vector<8x128xf32>
    %569 = arith.mulf %568, %567 : vector<8x128xf32>
    %570 = arith.addf %547, %569 : vector<8x128xf32>
    %571 = vector.extract_strided_slice %73 {offsets = [0, 11], sizes = [8, 1], strides = [1, 1]} : vector<8x16xf32> to vector<8x1xf32>
    %572 = vector.broadcast %116 : vector<1x128xf32> to vector<8x128xf32>
    %573 = vector.broadcast %571 : vector<8x1xf32> to vector<8x128xf32>
    %574 = arith.subf %572, %573 : vector<8x128xf32>
    %575 = math.absf %574 : vector<8x128xf32>
    %cst_141 = arith.constant 1.000000e+00 : f32
    %576 = vector.broadcast %cst_141 : f32 to vector<8x128xf32>
    %577 = arith.subf %576, %575 : vector<8x128xf32>
    %cst_142 = arith.constant 0.000000e+00 : f32
    %578 = vector.broadcast %cst_142 : f32 to vector<8x128xf32>
    %579 = arith.maximumf %578, %577 : vector<8x128xf32>
    %580 = vector.extract_strided_slice %83 {offsets = [0, 11], sizes = [8, 1], strides = [1, 1]} : vector<8x16xf32> to vector<8x1xf32>
    %581 = vector.broadcast %114 : vector<1x128xf32> to vector<8x128xf32>
    %582 = vector.broadcast %580 : vector<8x1xf32> to vector<8x128xf32>
    %583 = arith.subf %581, %582 : vector<8x128xf32>
    %584 = math.absf %583 : vector<8x128xf32>
    %cst_143 = arith.constant 1.000000e+00 : f32
    %585 = vector.broadcast %cst_143 : f32 to vector<8x128xf32>
    %586 = arith.subf %585, %584 : vector<8x128xf32>
    %cst_144 = arith.constant 0.000000e+00 : f32
    %587 = vector.broadcast %cst_144 : f32 to vector<8x128xf32>
    %588 = arith.maximumf %587, %586 : vector<8x128xf32>
    %589 = vector.extract_strided_slice %43 {offsets = [0, 3], sizes = [8, 1], strides = [1, 1]} : vector<8x8xf32> to vector<8x1xf32>
    %590 = arith.mulf %579, %588 : vector<8x128xf32>
    %591 = vector.broadcast %589 : vector<8x1xf32> to vector<8x128xf32>
    %592 = arith.mulf %591, %590 : vector<8x128xf32>
    %593 = arith.addf %570, %592 : vector<8x128xf32>
    %594 = arith.truncf %593 : vector<8x128xf32> to vector<8x128xbf16>
    %c0_145 = arith.constant 0 : index
    %c2 = arith.constant 2 : index
    %c0_146 = arith.constant 0 : index
    %c0_147 = arith.constant 0 : index
    %595 = vector.load %arg4[%c0_145, %c2, %c0_146, %c0_147] : memref<1x4x256x32xbf16, #tpu.memory_space<vmem>>, vector<1x1x128x32xbf16>
    %596 = vector.shape_cast %595 : vector<1x1x128x32xbf16> to vector<128x32xbf16>
    %cst_148 = arith.constant dense<0.000000e+00> : vector<8x32xf32>
    %597 = tpu.matmul %594, %596, %cst_148 {dimension_numbers = #tpu.dot_dimension_numbers<[1], [0], [0], [1], [0, 0, 1, 1], [], []>} : vector<8x128xbf16>, vector<128x32xbf16>, vector<8x32xf32> -> vector<8x32xf32>
    %598 = arith.addf %502, %597 : vector<8x32xf32>
    %599 = vector.extract_strided_slice %103 {offsets = [0, 8], sizes = [8, 1], strides = [1, 1]} : vector<8x16xf32> to vector<8x1xf32>
    %600 = vector.broadcast %117 : vector<1x128xf32> to vector<8x128xf32>
    %601 = vector.broadcast %599 : vector<8x1xf32> to vector<8x128xf32>
    %602 = arith.subf %600, %601 : vector<8x128xf32>
    %603 = math.absf %602 : vector<8x128xf32>
    %cst_149 = arith.constant 1.000000e+00 : f32
    %604 = vector.broadcast %cst_149 : f32 to vector<8x128xf32>
    %605 = arith.subf %604, %603 : vector<8x128xf32>
    %cst_150 = arith.constant 0.000000e+00 : f32
    %606 = vector.broadcast %cst_150 : f32 to vector<8x128xf32>
    %607 = arith.maximumf %606, %605 : vector<8x128xf32>
    %608 = vector.extract_strided_slice %113 {offsets = [0, 8], sizes = [8, 1], strides = [1, 1]} : vector<8x16xf32> to vector<8x1xf32>
    %609 = vector.broadcast %115 : vector<1x128xf32> to vector<8x128xf32>
    %610 = vector.broadcast %608 : vector<8x1xf32> to vector<8x128xf32>
    %611 = arith.subf %609, %610 : vector<8x128xf32>
    %612 = math.absf %611 : vector<8x128xf32>
    %cst_151 = arith.constant 1.000000e+00 : f32
    %613 = vector.broadcast %cst_151 : f32 to vector<8x128xf32>
    %614 = arith.subf %613, %612 : vector<8x128xf32>
    %cst_152 = arith.constant 0.000000e+00 : f32
    %615 = vector.broadcast %cst_152 : f32 to vector<8x128xf32>
    %616 = arith.maximumf %615, %614 : vector<8x128xf32>
    %617 = vector.extract_strided_slice %43 {offsets = [0, 4], sizes = [8, 1], strides = [1, 1]} : vector<8x8xf32> to vector<8x1xf32>
    %618 = arith.mulf %607, %616 : vector<8x128xf32>
    %619 = vector.broadcast %617 : vector<8x1xf32> to vector<8x128xf32>
    %620 = arith.mulf %619, %618 : vector<8x128xf32>
    %621 = vector.extract_strided_slice %103 {offsets = [0, 9], sizes = [8, 1], strides = [1, 1]} : vector<8x16xf32> to vector<8x1xf32>
    %622 = vector.broadcast %117 : vector<1x128xf32> to vector<8x128xf32>
    %623 = vector.broadcast %621 : vector<8x1xf32> to vector<8x128xf32>
    %624 = arith.subf %622, %623 : vector<8x128xf32>
    %625 = math.absf %624 : vector<8x128xf32>
    %cst_153 = arith.constant 1.000000e+00 : f32
    %626 = vector.broadcast %cst_153 : f32 to vector<8x128xf32>
    %627 = arith.subf %626, %625 : vector<8x128xf32>
    %cst_154 = arith.constant 0.000000e+00 : f32
    %628 = vector.broadcast %cst_154 : f32 to vector<8x128xf32>
    %629 = arith.maximumf %628, %627 : vector<8x128xf32>
    %630 = vector.extract_strided_slice %113 {offsets = [0, 9], sizes = [8, 1], strides = [1, 1]} : vector<8x16xf32> to vector<8x1xf32>
    %631 = vector.broadcast %115 : vector<1x128xf32> to vector<8x128xf32>
    %632 = vector.broadcast %630 : vector<8x1xf32> to vector<8x128xf32>
    %633 = arith.subf %631, %632 : vector<8x128xf32>
    %634 = math.absf %633 : vector<8x128xf32>
    %cst_155 = arith.constant 1.000000e+00 : f32
    %635 = vector.broadcast %cst_155 : f32 to vector<8x128xf32>
    %636 = arith.subf %635, %634 : vector<8x128xf32>
    %cst_156 = arith.constant 0.000000e+00 : f32
    %637 = vector.broadcast %cst_156 : f32 to vector<8x128xf32>
    %638 = arith.maximumf %637, %636 : vector<8x128xf32>
    %639 = vector.extract_strided_slice %43 {offsets = [0, 5], sizes = [8, 1], strides = [1, 1]} : vector<8x8xf32> to vector<8x1xf32>
    %640 = arith.mulf %629, %638 : vector<8x128xf32>
    %641 = vector.broadcast %639 : vector<8x1xf32> to vector<8x128xf32>
    %642 = arith.mulf %641, %640 : vector<8x128xf32>
    %643 = arith.addf %620, %642 : vector<8x128xf32>
    %644 = vector.extract_strided_slice %103 {offsets = [0, 10], sizes = [8, 1], strides = [1, 1]} : vector<8x16xf32> to vector<8x1xf32>
    %645 = vector.broadcast %117 : vector<1x128xf32> to vector<8x128xf32>
    %646 = vector.broadcast %644 : vector<8x1xf32> to vector<8x128xf32>
    %647 = arith.subf %645, %646 : vector<8x128xf32>
    %648 = math.absf %647 : vector<8x128xf32>
    %cst_157 = arith.constant 1.000000e+00 : f32
    %649 = vector.broadcast %cst_157 : f32 to vector<8x128xf32>
    %650 = arith.subf %649, %648 : vector<8x128xf32>
    %cst_158 = arith.constant 0.000000e+00 : f32
    %651 = vector.broadcast %cst_158 : f32 to vector<8x128xf32>
    %652 = arith.maximumf %651, %650 : vector<8x128xf32>
    %653 = vector.extract_strided_slice %113 {offsets = [0, 10], sizes = [8, 1], strides = [1, 1]} : vector<8x16xf32> to vector<8x1xf32>
    %654 = vector.broadcast %115 : vector<1x128xf32> to vector<8x128xf32>
    %655 = vector.broadcast %653 : vector<8x1xf32> to vector<8x128xf32>
    %656 = arith.subf %654, %655 : vector<8x128xf32>
    %657 = math.absf %656 : vector<8x128xf32>
    %cst_159 = arith.constant 1.000000e+00 : f32
    %658 = vector.broadcast %cst_159 : f32 to vector<8x128xf32>
    %659 = arith.subf %658, %657 : vector<8x128xf32>
    %cst_160 = arith.constant 0.000000e+00 : f32
    %660 = vector.broadcast %cst_160 : f32 to vector<8x128xf32>
    %661 = arith.maximumf %660, %659 : vector<8x128xf32>
    %662 = vector.extract_strided_slice %43 {offsets = [0, 6], sizes = [8, 1], strides = [1, 1]} : vector<8x8xf32> to vector<8x1xf32>
    %663 = arith.mulf %652, %661 : vector<8x128xf32>
    %664 = vector.broadcast %662 : vector<8x1xf32> to vector<8x128xf32>
    %665 = arith.mulf %664, %663 : vector<8x128xf32>
    %666 = arith.addf %643, %665 : vector<8x128xf32>
    %667 = vector.extract_strided_slice %103 {offsets = [0, 11], sizes = [8, 1], strides = [1, 1]} : vector<8x16xf32> to vector<8x1xf32>
    %668 = vector.broadcast %117 : vector<1x128xf32> to vector<8x128xf32>
    %669 = vector.broadcast %667 : vector<8x1xf32> to vector<8x128xf32>
    %670 = arith.subf %668, %669 : vector<8x128xf32>
    %671 = math.absf %670 : vector<8x128xf32>
    %cst_161 = arith.constant 1.000000e+00 : f32
    %672 = vector.broadcast %cst_161 : f32 to vector<8x128xf32>
    %673 = arith.subf %672, %671 : vector<8x128xf32>
    %cst_162 = arith.constant 0.000000e+00 : f32
    %674 = vector.broadcast %cst_162 : f32 to vector<8x128xf32>
    %675 = arith.maximumf %674, %673 : vector<8x128xf32>
    %676 = vector.extract_strided_slice %113 {offsets = [0, 11], sizes = [8, 1], strides = [1, 1]} : vector<8x16xf32> to vector<8x1xf32>
    %677 = vector.broadcast %115 : vector<1x128xf32> to vector<8x128xf32>
    %678 = vector.broadcast %676 : vector<8x1xf32> to vector<8x128xf32>
    %679 = arith.subf %677, %678 : vector<8x128xf32>
    %680 = math.absf %679 : vector<8x128xf32>
    %cst_163 = arith.constant 1.000000e+00 : f32
    %681 = vector.broadcast %cst_163 : f32 to vector<8x128xf32>
    %682 = arith.subf %681, %680 : vector<8x128xf32>
    %cst_164 = arith.constant 0.000000e+00 : f32
    %683 = vector.broadcast %cst_164 : f32 to vector<8x128xf32>
    %684 = arith.maximumf %683, %682 : vector<8x128xf32>
    %685 = vector.extract_strided_slice %43 {offsets = [0, 7], sizes = [8, 1], strides = [1, 1]} : vector<8x8xf32> to vector<8x1xf32>
    %686 = arith.mulf %675, %684 : vector<8x128xf32>
    %687 = vector.broadcast %685 : vector<8x1xf32> to vector<8x128xf32>
    %688 = arith.mulf %687, %686 : vector<8x128xf32>
    %689 = arith.addf %666, %688 : vector<8x128xf32>
    %690 = arith.truncf %689 : vector<8x128xf32> to vector<8x128xbf16>
    %c0_165 = arith.constant 0 : index
    %c2_166 = arith.constant 2 : index
    %c128_167 = arith.constant 128 : index
    %c0_168 = arith.constant 0 : index
    %691 = vector.load %arg4[%c0_165, %c2_166, %c128_167, %c0_168] : memref<1x4x256x32xbf16, #tpu.memory_space<vmem>>, vector<1x1x128x32xbf16>
    %692 = vector.shape_cast %691 : vector<1x1x128x32xbf16> to vector<128x32xbf16>
    %cst_169 = arith.constant dense<0.000000e+00> : vector<8x32xf32>
    %693 = tpu.matmul %690, %692, %cst_169 {dimension_numbers = #tpu.dot_dimension_numbers<[1], [0], [0], [1], [0, 0, 1, 1], [], []>} : vector<8x128xbf16>, vector<128x32xbf16>, vector<8x32xf32> -> vector<8x32xf32>
    %694 = arith.addf %598, %693 : vector<8x32xf32>
    %695 = vector.extract_strided_slice %73 {offsets = [0, 12], sizes = [8, 1], strides = [1, 1]} : vector<8x16xf32> to vector<8x1xf32>
    %696 = vector.broadcast %116 : vector<1x128xf32> to vector<8x128xf32>
    %697 = vector.broadcast %695 : vector<8x1xf32> to vector<8x128xf32>
    %698 = arith.subf %696, %697 : vector<8x128xf32>
    %699 = math.absf %698 : vector<8x128xf32>
    %cst_170 = arith.constant 1.000000e+00 : f32
    %700 = vector.broadcast %cst_170 : f32 to vector<8x128xf32>
    %701 = arith.subf %700, %699 : vector<8x128xf32>
    %cst_171 = arith.constant 0.000000e+00 : f32
    %702 = vector.broadcast %cst_171 : f32 to vector<8x128xf32>
    %703 = arith.maximumf %702, %701 : vector<8x128xf32>
    %704 = vector.extract_strided_slice %83 {offsets = [0, 12], sizes = [8, 1], strides = [1, 1]} : vector<8x16xf32> to vector<8x1xf32>
    %705 = vector.broadcast %114 : vector<1x128xf32> to vector<8x128xf32>
    %706 = vector.broadcast %704 : vector<8x1xf32> to vector<8x128xf32>
    %707 = arith.subf %705, %706 : vector<8x128xf32>
    %708 = math.absf %707 : vector<8x128xf32>
    %cst_172 = arith.constant 1.000000e+00 : f32
    %709 = vector.broadcast %cst_172 : f32 to vector<8x128xf32>
    %710 = arith.subf %709, %708 : vector<8x128xf32>
    %cst_173 = arith.constant 0.000000e+00 : f32
    %711 = vector.broadcast %cst_173 : f32 to vector<8x128xf32>
    %712 = arith.maximumf %711, %710 : vector<8x128xf32>
    %713 = vector.extract_strided_slice %53 {offsets = [0, 0], sizes = [8, 1], strides = [1, 1]} : vector<8x8xf32> to vector<8x1xf32>
    %714 = arith.mulf %703, %712 : vector<8x128xf32>
    %715 = vector.broadcast %713 : vector<8x1xf32> to vector<8x128xf32>
    %716 = arith.mulf %715, %714 : vector<8x128xf32>
    %717 = vector.extract_strided_slice %73 {offsets = [0, 13], sizes = [8, 1], strides = [1, 1]} : vector<8x16xf32> to vector<8x1xf32>
    %718 = vector.broadcast %116 : vector<1x128xf32> to vector<8x128xf32>
    %719 = vector.broadcast %717 : vector<8x1xf32> to vector<8x128xf32>
    %720 = arith.subf %718, %719 : vector<8x128xf32>
    %721 = math.absf %720 : vector<8x128xf32>
    %cst_174 = arith.constant 1.000000e+00 : f32
    %722 = vector.broadcast %cst_174 : f32 to vector<8x128xf32>
    %723 = arith.subf %722, %721 : vector<8x128xf32>
    %cst_175 = arith.constant 0.000000e+00 : f32
    %724 = vector.broadcast %cst_175 : f32 to vector<8x128xf32>
    %725 = arith.maximumf %724, %723 : vector<8x128xf32>
    %726 = vector.extract_strided_slice %83 {offsets = [0, 13], sizes = [8, 1], strides = [1, 1]} : vector<8x16xf32> to vector<8x1xf32>
    %727 = vector.broadcast %114 : vector<1x128xf32> to vector<8x128xf32>
    %728 = vector.broadcast %726 : vector<8x1xf32> to vector<8x128xf32>
    %729 = arith.subf %727, %728 : vector<8x128xf32>
    %730 = math.absf %729 : vector<8x128xf32>
    %cst_176 = arith.constant 1.000000e+00 : f32
    %731 = vector.broadcast %cst_176 : f32 to vector<8x128xf32>
    %732 = arith.subf %731, %730 : vector<8x128xf32>
    %cst_177 = arith.constant 0.000000e+00 : f32
    %733 = vector.broadcast %cst_177 : f32 to vector<8x128xf32>
    %734 = arith.maximumf %733, %732 : vector<8x128xf32>
    %735 = vector.extract_strided_slice %53 {offsets = [0, 1], sizes = [8, 1], strides = [1, 1]} : vector<8x8xf32> to vector<8x1xf32>
    %736 = arith.mulf %725, %734 : vector<8x128xf32>
    %737 = vector.broadcast %735 : vector<8x1xf32> to vector<8x128xf32>
    %738 = arith.mulf %737, %736 : vector<8x128xf32>
    %739 = arith.addf %716, %738 : vector<8x128xf32>
    %740 = vector.extract_strided_slice %73 {offsets = [0, 14], sizes = [8, 1], strides = [1, 1]} : vector<8x16xf32> to vector<8x1xf32>
    %741 = vector.broadcast %116 : vector<1x128xf32> to vector<8x128xf32>
    %742 = vector.broadcast %740 : vector<8x1xf32> to vector<8x128xf32>
    %743 = arith.subf %741, %742 : vector<8x128xf32>
    %744 = math.absf %743 : vector<8x128xf32>
    %cst_178 = arith.constant 1.000000e+00 : f32
    %745 = vector.broadcast %cst_178 : f32 to vector<8x128xf32>
    %746 = arith.subf %745, %744 : vector<8x128xf32>
    %cst_179 = arith.constant 0.000000e+00 : f32
    %747 = vector.broadcast %cst_179 : f32 to vector<8x128xf32>
    %748 = arith.maximumf %747, %746 : vector<8x128xf32>
    %749 = vector.extract_strided_slice %83 {offsets = [0, 14], sizes = [8, 1], strides = [1, 1]} : vector<8x16xf32> to vector<8x1xf32>
    %750 = vector.broadcast %114 : vector<1x128xf32> to vector<8x128xf32>
    %751 = vector.broadcast %749 : vector<8x1xf32> to vector<8x128xf32>
    %752 = arith.subf %750, %751 : vector<8x128xf32>
    %753 = math.absf %752 : vector<8x128xf32>
    %cst_180 = arith.constant 1.000000e+00 : f32
    %754 = vector.broadcast %cst_180 : f32 to vector<8x128xf32>
    %755 = arith.subf %754, %753 : vector<8x128xf32>
    %cst_181 = arith.constant 0.000000e+00 : f32
    %756 = vector.broadcast %cst_181 : f32 to vector<8x128xf32>
    %757 = arith.maximumf %756, %755 : vector<8x128xf32>
    %758 = vector.extract_strided_slice %53 {offsets = [0, 2], sizes = [8, 1], strides = [1, 1]} : vector<8x8xf32> to vector<8x1xf32>
    %759 = arith.mulf %748, %757 : vector<8x128xf32>
    %760 = vector.broadcast %758 : vector<8x1xf32> to vector<8x128xf32>
    %761 = arith.mulf %760, %759 : vector<8x128xf32>
    %762 = arith.addf %739, %761 : vector<8x128xf32>
    %763 = vector.extract_strided_slice %73 {offsets = [0, 15], sizes = [8, 1], strides = [1, 1]} : vector<8x16xf32> to vector<8x1xf32>
    %764 = vector.broadcast %116 : vector<1x128xf32> to vector<8x128xf32>
    %765 = vector.broadcast %763 : vector<8x1xf32> to vector<8x128xf32>
    %766 = arith.subf %764, %765 : vector<8x128xf32>
    %767 = math.absf %766 : vector<8x128xf32>
    %cst_182 = arith.constant 1.000000e+00 : f32
    %768 = vector.broadcast %cst_182 : f32 to vector<8x128xf32>
    %769 = arith.subf %768, %767 : vector<8x128xf32>
    %cst_183 = arith.constant 0.000000e+00 : f32
    %770 = vector.broadcast %cst_183 : f32 to vector<8x128xf32>
    %771 = arith.maximumf %770, %769 : vector<8x128xf32>
    %772 = vector.extract_strided_slice %83 {offsets = [0, 15], sizes = [8, 1], strides = [1, 1]} : vector<8x16xf32> to vector<8x1xf32>
    %773 = vector.broadcast %114 : vector<1x128xf32> to vector<8x128xf32>
    %774 = vector.broadcast %772 : vector<8x1xf32> to vector<8x128xf32>
    %775 = arith.subf %773, %774 : vector<8x128xf32>
    %776 = math.absf %775 : vector<8x128xf32>
    %cst_184 = arith.constant 1.000000e+00 : f32
    %777 = vector.broadcast %cst_184 : f32 to vector<8x128xf32>
    %778 = arith.subf %777, %776 : vector<8x128xf32>
    %cst_185 = arith.constant 0.000000e+00 : f32
    %779 = vector.broadcast %cst_185 : f32 to vector<8x128xf32>
    %780 = arith.maximumf %779, %778 : vector<8x128xf32>
    %781 = vector.extract_strided_slice %53 {offsets = [0, 3], sizes = [8, 1], strides = [1, 1]} : vector<8x8xf32> to vector<8x1xf32>
    %782 = arith.mulf %771, %780 : vector<8x128xf32>
    %783 = vector.broadcast %781 : vector<8x1xf32> to vector<8x128xf32>
    %784 = arith.mulf %783, %782 : vector<8x128xf32>
    %785 = arith.addf %762, %784 : vector<8x128xf32>
    %786 = arith.truncf %785 : vector<8x128xf32> to vector<8x128xbf16>
    %c0_186 = arith.constant 0 : index
    %c3 = arith.constant 3 : index
    %c0_187 = arith.constant 0 : index
    %c0_188 = arith.constant 0 : index
    %787 = vector.load %arg4[%c0_186, %c3, %c0_187, %c0_188] : memref<1x4x256x32xbf16, #tpu.memory_space<vmem>>, vector<1x1x128x32xbf16>
    %788 = vector.shape_cast %787 : vector<1x1x128x32xbf16> to vector<128x32xbf16>
    %cst_189 = arith.constant dense<0.000000e+00> : vector<8x32xf32>
    %789 = tpu.matmul %786, %788, %cst_189 {dimension_numbers = #tpu.dot_dimension_numbers<[1], [0], [0], [1], [0, 0, 1, 1], [], []>} : vector<8x128xbf16>, vector<128x32xbf16>, vector<8x32xf32> -> vector<8x32xf32>
    %790 = arith.addf %694, %789 : vector<8x32xf32>
    %791 = vector.extract_strided_slice %103 {offsets = [0, 12], sizes = [8, 1], strides = [1, 1]} : vector<8x16xf32> to vector<8x1xf32>
    %792 = vector.broadcast %117 : vector<1x128xf32> to vector<8x128xf32>
    %793 = vector.broadcast %791 : vector<8x1xf32> to vector<8x128xf32>
    %794 = arith.subf %792, %793 : vector<8x128xf32>
    %795 = math.absf %794 : vector<8x128xf32>
    %cst_190 = arith.constant 1.000000e+00 : f32
    %796 = vector.broadcast %cst_190 : f32 to vector<8x128xf32>
    %797 = arith.subf %796, %795 : vector<8x128xf32>
    %cst_191 = arith.constant 0.000000e+00 : f32
    %798 = vector.broadcast %cst_191 : f32 to vector<8x128xf32>
    %799 = arith.maximumf %798, %797 : vector<8x128xf32>
    %800 = vector.extract_strided_slice %113 {offsets = [0, 12], sizes = [8, 1], strides = [1, 1]} : vector<8x16xf32> to vector<8x1xf32>
    %801 = vector.broadcast %115 : vector<1x128xf32> to vector<8x128xf32>
    %802 = vector.broadcast %800 : vector<8x1xf32> to vector<8x128xf32>
    %803 = arith.subf %801, %802 : vector<8x128xf32>
    %804 = math.absf %803 : vector<8x128xf32>
    %cst_192 = arith.constant 1.000000e+00 : f32
    %805 = vector.broadcast %cst_192 : f32 to vector<8x128xf32>
    %806 = arith.subf %805, %804 : vector<8x128xf32>
    %cst_193 = arith.constant 0.000000e+00 : f32
    %807 = vector.broadcast %cst_193 : f32 to vector<8x128xf32>
    %808 = arith.maximumf %807, %806 : vector<8x128xf32>
    %809 = vector.extract_strided_slice %53 {offsets = [0, 4], sizes = [8, 1], strides = [1, 1]} : vector<8x8xf32> to vector<8x1xf32>
    %810 = arith.mulf %799, %808 : vector<8x128xf32>
    %811 = vector.broadcast %809 : vector<8x1xf32> to vector<8x128xf32>
    %812 = arith.mulf %811, %810 : vector<8x128xf32>
    %813 = vector.extract_strided_slice %103 {offsets = [0, 13], sizes = [8, 1], strides = [1, 1]} : vector<8x16xf32> to vector<8x1xf32>
    %814 = vector.broadcast %117 : vector<1x128xf32> to vector<8x128xf32>
    %815 = vector.broadcast %813 : vector<8x1xf32> to vector<8x128xf32>
    %816 = arith.subf %814, %815 : vector<8x128xf32>
    %817 = math.absf %816 : vector<8x128xf32>
    %cst_194 = arith.constant 1.000000e+00 : f32
    %818 = vector.broadcast %cst_194 : f32 to vector<8x128xf32>
    %819 = arith.subf %818, %817 : vector<8x128xf32>
    %cst_195 = arith.constant 0.000000e+00 : f32
    %820 = vector.broadcast %cst_195 : f32 to vector<8x128xf32>
    %821 = arith.maximumf %820, %819 : vector<8x128xf32>
    %822 = vector.extract_strided_slice %113 {offsets = [0, 13], sizes = [8, 1], strides = [1, 1]} : vector<8x16xf32> to vector<8x1xf32>
    %823 = vector.broadcast %115 : vector<1x128xf32> to vector<8x128xf32>
    %824 = vector.broadcast %822 : vector<8x1xf32> to vector<8x128xf32>
    %825 = arith.subf %823, %824 : vector<8x128xf32>
    %826 = math.absf %825 : vector<8x128xf32>
    %cst_196 = arith.constant 1.000000e+00 : f32
    %827 = vector.broadcast %cst_196 : f32 to vector<8x128xf32>
    %828 = arith.subf %827, %826 : vector<8x128xf32>
    %cst_197 = arith.constant 0.000000e+00 : f32
    %829 = vector.broadcast %cst_197 : f32 to vector<8x128xf32>
    %830 = arith.maximumf %829, %828 : vector<8x128xf32>
    %831 = vector.extract_strided_slice %53 {offsets = [0, 5], sizes = [8, 1], strides = [1, 1]} : vector<8x8xf32> to vector<8x1xf32>
    %832 = arith.mulf %821, %830 : vector<8x128xf32>
    %833 = vector.broadcast %831 : vector<8x1xf32> to vector<8x128xf32>
    %834 = arith.mulf %833, %832 : vector<8x128xf32>
    %835 = arith.addf %812, %834 : vector<8x128xf32>
    %836 = vector.extract_strided_slice %103 {offsets = [0, 14], sizes = [8, 1], strides = [1, 1]} : vector<8x16xf32> to vector<8x1xf32>
    %837 = vector.broadcast %117 : vector<1x128xf32> to vector<8x128xf32>
    %838 = vector.broadcast %836 : vector<8x1xf32> to vector<8x128xf32>
    %839 = arith.subf %837, %838 : vector<8x128xf32>
    %840 = math.absf %839 : vector<8x128xf32>
    %cst_198 = arith.constant 1.000000e+00 : f32
    %841 = vector.broadcast %cst_198 : f32 to vector<8x128xf32>
    %842 = arith.subf %841, %840 : vector<8x128xf32>
    %cst_199 = arith.constant 0.000000e+00 : f32
    %843 = vector.broadcast %cst_199 : f32 to vector<8x128xf32>
    %844 = arith.maximumf %843, %842 : vector<8x128xf32>
    %845 = vector.extract_strided_slice %113 {offsets = [0, 14], sizes = [8, 1], strides = [1, 1]} : vector<8x16xf32> to vector<8x1xf32>
    %846 = vector.broadcast %115 : vector<1x128xf32> to vector<8x128xf32>
    %847 = vector.broadcast %845 : vector<8x1xf32> to vector<8x128xf32>
    %848 = arith.subf %846, %847 : vector<8x128xf32>
    %849 = math.absf %848 : vector<8x128xf32>
    %cst_200 = arith.constant 1.000000e+00 : f32
    %850 = vector.broadcast %cst_200 : f32 to vector<8x128xf32>
    %851 = arith.subf %850, %849 : vector<8x128xf32>
    %cst_201 = arith.constant 0.000000e+00 : f32
    %852 = vector.broadcast %cst_201 : f32 to vector<8x128xf32>
    %853 = arith.maximumf %852, %851 : vector<8x128xf32>
    %854 = vector.extract_strided_slice %53 {offsets = [0, 6], sizes = [8, 1], strides = [1, 1]} : vector<8x8xf32> to vector<8x1xf32>
    %855 = arith.mulf %844, %853 : vector<8x128xf32>
    %856 = vector.broadcast %854 : vector<8x1xf32> to vector<8x128xf32>
    %857 = arith.mulf %856, %855 : vector<8x128xf32>
    %858 = arith.addf %835, %857 : vector<8x128xf32>
    %859 = vector.extract_strided_slice %103 {offsets = [0, 15], sizes = [8, 1], strides = [1, 1]} : vector<8x16xf32> to vector<8x1xf32>
    %860 = vector.broadcast %117 : vector<1x128xf32> to vector<8x128xf32>
    %861 = vector.broadcast %859 : vector<8x1xf32> to vector<8x128xf32>
    %862 = arith.subf %860, %861 : vector<8x128xf32>
    %863 = math.absf %862 : vector<8x128xf32>
    %cst_202 = arith.constant 1.000000e+00 : f32
    %864 = vector.broadcast %cst_202 : f32 to vector<8x128xf32>
    %865 = arith.subf %864, %863 : vector<8x128xf32>
    %cst_203 = arith.constant 0.000000e+00 : f32
    %866 = vector.broadcast %cst_203 : f32 to vector<8x128xf32>
    %867 = arith.maximumf %866, %865 : vector<8x128xf32>
    %868 = vector.extract_strided_slice %113 {offsets = [0, 15], sizes = [8, 1], strides = [1, 1]} : vector<8x16xf32> to vector<8x1xf32>
    %869 = vector.broadcast %115 : vector<1x128xf32> to vector<8x128xf32>
    %870 = vector.broadcast %868 : vector<8x1xf32> to vector<8x128xf32>
    %871 = arith.subf %869, %870 : vector<8x128xf32>
    %872 = math.absf %871 : vector<8x128xf32>
    %cst_204 = arith.constant 1.000000e+00 : f32
    %873 = vector.broadcast %cst_204 : f32 to vector<8x128xf32>
    %874 = arith.subf %873, %872 : vector<8x128xf32>
    %cst_205 = arith.constant 0.000000e+00 : f32
    %875 = vector.broadcast %cst_205 : f32 to vector<8x128xf32>
    %876 = arith.maximumf %875, %874 : vector<8x128xf32>
    %877 = vector.extract_strided_slice %53 {offsets = [0, 7], sizes = [8, 1], strides = [1, 1]} : vector<8x8xf32> to vector<8x1xf32>
    %878 = arith.mulf %867, %876 : vector<8x128xf32>
    %879 = vector.broadcast %877 : vector<8x1xf32> to vector<8x128xf32>
    %880 = arith.mulf %879, %878 : vector<8x128xf32>
    %881 = arith.addf %858, %880 : vector<8x128xf32>
    %882 = arith.truncf %881 : vector<8x128xf32> to vector<8x128xbf16>
    %c0_206 = arith.constant 0 : index
    %c3_207 = arith.constant 3 : index
    %c128_208 = arith.constant 128 : index
    %c0_209 = arith.constant 0 : index
    %883 = vector.load %arg4[%c0_206, %c3_207, %c128_208, %c0_209] : memref<1x4x256x32xbf16, #tpu.memory_space<vmem>>, vector<1x1x128x32xbf16>
    %884 = vector.shape_cast %883 : vector<1x1x128x32xbf16> to vector<128x32xbf16>
    %cst_210 = arith.constant dense<0.000000e+00> : vector<8x32xf32>
    %885 = tpu.matmul %882, %884, %cst_210 {dimension_numbers = #tpu.dot_dimension_numbers<[1], [0], [0], [1], [0, 0, 1, 1], [], []>} : vector<8x128xbf16>, vector<128x32xbf16>, vector<8x32xf32> -> vector<8x32xf32>
    %886 = arith.addf %790, %885 : vector<8x32xf32>
    %c0_211 = arith.constant 0 : index
    %c0_212 = arith.constant 0 : index
    %887 = vector.load %arg10[%c0_211, %c0_212] : memref<1x32xf32, #tpu.memory_space<vmem>>, vector<1x32xf32>
    %888 = vector.broadcast %887 : vector<1x32xf32> to vector<8x32xf32>
    %889 = arith.addf %886, %888 : vector<8x32xf32>
    %c0_213 = arith.constant 0 : index
    %c0_214 = arith.constant 0 : index
    %c0_215 = arith.constant 0 : index
    %890 = vector.load %arg11[%c0_213, %c0_214, %c0_215] : memref<1x8x32xf32, #tpu.memory_space<vmem>>, vector<1x8x32xf32>
    %891 = vector.shape_cast %890 : vector<1x8x32xf32> to vector<8x32xf32>
    %892 = vector.shape_cast %889 : vector<8x32xf32> to vector<1x8x32xf32>
    tpu.vector_store %arg11[%c0_213, %c0_214, %c0_215], %892 {strides = array<i32>} : memref<1x8x32xf32, #tpu.memory_space<vmem>>, vector<1x8x32xf32>,
    return
  }
  func.func @transform_0(%arg0: i32, %arg1: i32) -> (i32, i32, i32) {
    %c0_i32 = arith.constant 0 : i32
    %c0_i32_0 = arith.constant 0 : i32
    return %arg0, %arg1, %c0_i32 : i32, i32, i32
  }
  func.func @transform_1(%arg0: i32, %arg1: i32) -> (i32, i32, i32) {
    %c0_i32 = arith.constant 0 : i32
    %c0_i32_0 = arith.constant 0 : i32
    return %arg0, %arg1, %c0_i32 : i32, i32, i32
  }
  func.func @transform_2(%arg0: i32, %arg1: i32) -> (i32, i32, i32, i32) {
    %c0_i32 = arith.constant 0 : i32
    %c0_i32_0 = arith.constant 0 : i32
    %c0_i32_1 = arith.constant 0 : i32
    %c0_i32_2 = arith.constant 0 : i32
    return %arg0, %c0_i32, %c0_i32_0, %c0_i32_1 : i32, i32, i32, i32
  }
  func.func @transform_3(%arg0: i32, %arg1: i32) -> (i32, i32) {
    %c0_i32 = arith.constant 0 : i32
    %c0_i32_0 = arith.constant 0 : i32
    %c0_i32_1 = arith.constant 0 : i32
    return %c0_i32, %c0_i32_0 : i32, i32
  }
  func.func @transform_4(%arg0: i32, %arg1: i32) -> (i32, i32) {
    %c0_i32 = arith.constant 0 : i32
    %c0_i32_0 = arith.constant 0 : i32
    %c0_i32_1 = arith.constant 0 : i32
    return %c0_i32, %c0_i32_0 : i32, i32
  }
  func.func @transform_5(%arg0: i32, %arg1: i32) -> (i32, i32) {
    %c0_i32 = arith.constant 0 : i32
    %c0_i32_0 = arith.constant 0 : i32
    %c0_i32_1 = arith.constant 0 : i32
    return %c0_i32, %c0_i32_0 : i32, i32
  }
  func.func @transform_6(%arg0: i32, %arg1: i32) -> (i32, i32) {
    %c0_i32 = arith.constant 0 : i32
    %c0_i32_0 = arith.constant 0 : i32
    %c0_i32_1 = arith.constant 0 : i32
    return %c0_i32, %c0_i32_0 : i32, i32
  }
  func.func @transform_7(%arg0: i32, %arg1: i32) -> (i32, i32) {
    %c0_i32 = arith.constant 0 : i32
    %c0_i32_0 = arith.constant 0 : i32
    %c0_i32_1 = arith.constant 0 : i32
    return %c0_i32, %c0_i32_0 : i32, i32
  }
  func.func @transform_8(%arg0: i32, %arg1: i32) -> (i32, i32) {
    %c0_i32 = arith.constant 0 : i32
    %c0_i32_0 = arith.constant 0 : i32
    %c0_i32_1 = arith.constant 0 : i32
    return %c0_i32, %c0_i32_0 : i32, i32
  }
  func.func @transform_9(%arg0: i32, %arg1: i32) -> (i32, i32, i32) {
    %c0_i32 = arith.constant 0 : i32
    %c0_i32_0 = arith.constant 0 : i32
    return %arg0, %arg1, %c0_i32 : i32, i32, i32
  }
}

</mosaic_0001>

<llo_original>
// kernel: tpu_custom_call.1
$region0: #{tpu_custom_call.1}
  #allocation0 [shape = 'u32[]', space=smem, size = 0x4, offset = 0x4, fixed_abs, tag = 'smem constant byte address 0x4 - core index']
  #allocation1 [shape = 'u32[144,128]{1,0:T(1,128)}', space=vmem, size = 0x12000, scoped, tag = 'internal scratch']
  %s0 = inlined_call_operand.vmem [shape: bf16[2,8,32], index: 0, kind: input, shape index: {}]
  %s1 = inlined_call_operand.vmem [shape: f32[2,8,8], index: 1, kind: input, shape index: {}]
  %s2 = inlined_call_operand.vmem [shape: bf16[2,4,256,32], index: 2, kind: input, shape index: {}]
  %s3 = inlined_call_operand.vmem [shape: f32[2,256], index: 3, kind: input, shape index: {}]
  %s4 = inlined_call_operand.vmem [shape: bf16[32,64], index: 4, kind: input, shape index: {}]
  %s5 = inlined_call_operand.vmem [shape: f32[1,64], index: 5, kind: input, shape index: {}]
  %s6 = inlined_call_operand.vmem [shape: bf16[32,32], index: 6, kind: input, shape index: {}]
  %s7 = inlined_call_operand.vmem [shape: f32[1,32], index: 7, kind: input, shape index: {}]
  %s8 = inlined_call_operand.vmem [shape: f32[1,32], index: 8, kind: input, shape index: {}]
  %s9 = inlined_call_operand.hbm [shape: f32[2,8,32], index: 9, kind: output, shape index: {}]
  %s10 = sld [smem:[#allocation0]]
  $region69: #{tpu_custom_call.1} parent=0
    _
  %s12 = ssub.s32 1, %s10
  %s13 = scalar_select 0, %s12, %s10
  $region1: #{tpu_custom_call.1} parent=0
    #allocation2 [shape = 'u8[8192]{0}', space=vmem, size = 0x2000, scoped, tag = 'output window, operand 0']
    #allocation3 [shape = 's32[2]{0}', space=sflag, size = 0x8, scoped, tag = 'scoped memory for tpu_custom_call.1']
    %14 = vsyncpa [#allocation3], 0
    %s15 = scalar_lea.sflag [#allocation3], 1
    %16 = vsyncpa %s15, 0
    loop: start=0, step=1, limit=4
    $region2: #{tpu_custom_call.1} parent=1 // loop_pre_header
      _
    $region3: #{tpu_custom_call.1} parent=1 // loop_header
      %s18 = sphi 0, %s22
      %p19 = scmp.ge.s32.totalorder %s18, 4
      %s25 = sphi 0, %s37
      %s26 = sphi 0, %s33
      %s27 = sphi 0, %s25
      %s28 = sphi 0, %s26
      %s29 = sphi 0, %s27
      %s30 = sphi 0, %s28
      %s42 = sphi 0, %s44
      %s45 = sphi 0, %s42
      %s46 = sphi 0, %s45
      %s62 = sphi 0, %s46
      %s70 = sphi 0, %s72
      %s73 = sphi 0, %s70
      %s74 = sphi 0, %s73
      %s90 = sphi 0, %s74
      %s96 = sphi 0, %s98
      %s99 = sphi 0, %s96
      %s100 = sphi 0, %s99
      %s116 = sphi 0, %s100
      %s120 = sphi 0, %s120
      %s122 = sphi 0, %s120
      %s123 = sphi 0, %s122
      %s137 = sphi 0, %s123
      %s141 = sphi 0, %s141
      %s143 = sphi 0, %s141
      %s144 = sphi 0, %s143
      %s158 = sphi 0, %s144
      %s162 = sphi 0, %s162
      %s164 = sphi 0, %s162
      %s165 = sphi 0, %s164
      %s179 = sphi 0, %s165
      %s183 = sphi 0, %s183
      %s185 = sphi 0, %s183
      %s186 = sphi 0, %s185
      %s200 = sphi 0, %s186
      %s204 = sphi 0, %s204
      %s206 = sphi 0, %s204
      %s207 = sphi 0, %s206
      %s221 = sphi 0, %s207
      %s225 = sphi 0, %s225
      %s227 = sphi 0, %s225
      %s228 = sphi 0, %s227
      %s242 = sphi 0, %s228
      %s250 = sphi 0, %s252
      %s253 = sphi 0, %s250
      %s254 = sphi 0, %s253
      %s270 = sphi 0, %s254
    $region4: #{tpu_custom_call.1} parent=1 // loop_header_branch
      %21 = sbr.rel (%p19) target = $region8
    $region5: #{tpu_custom_call.1} parent=1 // loop_body
      %s23 = ssub.s32 %s18, 1
      %s24 = ssub.s32 %s18, 2
      %s31 = sadd.s32 1, %s26
      %p32 = scmp.ge.s32.totalorder %s31, 1
      %s33 = scalar_select %p32, 0, %s31
      %s34 = sadd.s32 1, %s25
      %s35 = scalar_select %p32, %s34, %s25
      %p36 = scmp.ge.s32.totalorder %s35, 2
      %s37 = scalar_select %p36, 0, %s35
      %s38 = ssub.s32 %s25, %s37
      %s39 = ssub.s32 %s26, %s33
      %s40 = sor.u32 %s38, %s39
      %p41 = scmp.eq.s32.totalorder %s40, 0
      %s43 = sadd.s32 %s42, 1
      %s44 = scalar_select %p41, %s42, %s43
      %p47 = pneg %p41
      %p48 = scmp.eq.s32.totalorder %s18, 1
      %p49 = por %p47, %p48
      %p50 = scmp.ne.s32.totalorder %s42, %s45
      %p51 = scmp.eq.s32.totalorder %s18, 0
      %p52 = por %p50, %p51
      %p53 = scmp.ne.s32.totalorder %s42, %s45
      %p54 = scmp.eq.s32.totalorder %s23, 1
      %p55 = por %p53, %p54
      %p56 = scmp.ne.s32.totalorder %s45, %s46
      %p57 = scmp.eq.s32.totalorder %s23, 0
      %p58 = por %p56, %p57
      %p59 = scmp.ne.s32.totalorder %s45, %s46
      %p60 = scmp.eq.s32.totalorder %s24, 1
      %p61 = por %p59, %p60
      %p63 = scmp.ne.s32.totalorder %s46, %s62
      %p64 = scmp.eq.s32.totalorder %s24, 0
      %p65 = por %p63, %p64
      %s66 = ssub.s32 %s25, %s37
      %s67 = ssub.s32 %s26, %s33
      %s68 = sor.u32 %s66, %s67
      %p69 = scmp.eq.s32.totalorder %s68, 0
      %s71 = sadd.s32 %s70, 1
      %s72 = scalar_select %p69, %s70, %s71
      %p75 = pneg %p69
      %p76 = scmp.eq.s32.totalorder %s18, 1
      %p77 = por %p75, %p76
      %p78 = scmp.ne.s32.totalorder %s70, %s73
      %p79 = scmp.eq.s32.totalorder %s18, 0
      %p80 = por %p78, %p79
      %p81 = scmp.ne.s32.totalorder %s70, %s73
      %p82 = scmp.eq.s32.totalorder %s23, 1
      %p83 = por %p81, %p82
      %p84 = scmp.ne.s32.totalorder %s73, %s74
      %p85 = scmp.eq.s32.totalorder %s23, 0
      %p86 = por %p84, %p85
      %p87 = scmp.ne.s32.totalorder %s73, %s74
      %p88 = scmp.eq.s32.totalorder %s24, 1
      %p89 = por %p87, %p88
      %p91 = scmp.ne.s32.totalorder %s74, %s90
      %p92 = scmp.eq.s32.totalorder %s24, 0
      %p93 = por %p91, %p92
      %s94 = ssub.s32 %s25, %s37
      %p95 = scmp.eq.s32.totalorder %s94, 0
      %s97 = sadd.s32 %s96, 1
      %s98 = scalar_select %p95, %s96, %s97
      %p101 = pneg %p95
      %p102 = scmp.eq.s32.totalorder %s18, 1
      %p103 = por %p101, %p102
      %p104 = scmp.ne.s32.totalorder %s96, %s99
      %p105 = scmp.eq.s32.totalorder %s18, 0
      %p106 = por %p104, %p105
      %p107 = scmp.ne.s32.totalorder %s96, %s99
      %p108 = scmp.eq.s32.totalorder %s23, 1
      %p109 = por %p107, %p108
      %p110 = scmp.ne.s32.totalorder %s99, %s100
      %p111 = scmp.eq.s32.totalorder %s23, 0
      %p112 = por %p110, %p111
      %p113 = scmp.ne.s32.totalorder %s99, %s100
      %p114 = scmp.eq.s32.totalorder %s24, 1
      %p115 = por %p113, %p114
      %p117 = scmp.ne.s32.totalorder %s100, %s116
      %p118 = scmp.eq.s32.totalorder %s24, 0
      %p119 = por %p117, %p118
      %s121 = sadd.s32 %s120, 1
      %p124 = scmp.eq.s32.totalorder %s18, 1
      %p125 = scmp.ne.s32.totalorder %s120, %s122
      %p126 = scmp.eq.s32.totalorder %s18, 0
      %p127 = por %p125, %p126
      %p128 = scmp.ne.s32.totalorder %s120, %s122
      %p129 = scmp.eq.s32.totalorder %s23, 1
      %p130 = por %p128, %p129
      %p131 = scmp.ne.s32.totalorder %s122, %s123
      %p132 = scmp.eq.s32.totalorder %s23, 0
      %p133 = por %p131, %p132
      %p134 = scmp.ne.s32.totalorder %s122, %s123
      %p135 = scmp.eq.s32.totalorder %s24, 1
      %p136 = por %p134, %p135
      %p138 = scmp.ne.s32.totalorder %s123, %s137
      %p139 = scmp.eq.s32.totalorder %s24, 0
      %p140 = por %p138, %p139
      %s142 = sadd.s32 %s141, 1
      %p145 = scmp.eq.s32.totalorder %s18, 1
      %p146 = scmp.ne.s32.totalorder %s141, %s143
      %p147 = scmp.eq.s32.totalorder %s18, 0
      %p148 = por %p146, %p147
      %p149 = scmp.ne.s32.totalorder %s141, %s143
      %p150 = scmp.eq.s32.totalorder %s23, 1
      %p151 = por %p149, %p150
      %p152 = scmp.ne.s32.totalorder %s143, %s144
      %p153 = scmp.eq.s32.totalorder %s23, 0
      %p154 = por %p152, %p153
      %p155 = scmp.ne.s32.totalorder %s143, %s144
      %p156 = scmp.eq.s32.totalorder %s24, 1
      %p157 = por %p155, %p156
      %p159 = scmp.ne.s32.totalorder %s144, %s158
      %p160 = scmp.eq.s32.totalorder %s24, 0
      %p161 = por %p159, %p160
      %s163 = sadd.s32 %s162, 1
      %p166 = scmp.eq.s32.totalorder %s18, 1
      %p167 = scmp.ne.s32.totalorder %s162, %s164
      %p168 = scmp.eq.s32.totalorder %s18, 0
      %p169 = por %p167, %p168
      %p170 = scmp.ne.s32.totalorder %s162, %s164
      %p171 = scmp.eq.s32.totalorder %s23, 1
      %p172 = por %p170, %p171
      %p173 = scmp.ne.s32.totalorder %s164, %s165
      %p174 = scmp.eq.s32.totalorder %s23, 0
      %p175 = por %p173, %p174
      %p176 = scmp.ne.s32.totalorder %s164, %s165
      %p177 = scmp.eq.s32.totalorder %s24, 1
      %p178 = por %p176, %p177
      %p180 = scmp.ne.s32.totalorder %s165, %s179
      %p181 = scmp.eq.s32.totalorder %s24, 0
      %p182 = por %p180, %p181
      %s184 = sadd.s32 %s183, 1
      %p187 = scmp.eq.s32.totalorder %s18, 1
      %p188 = scmp.ne.s32.totalorder %s183, %s185
      %p189 = scmp.eq.s32.totalorder %s18, 0
      %p190 = por %p188, %p189
      %p191 = scmp.ne.s32.totalorder %s183, %s185
      %p192 = scmp.eq.s32.totalorder %s23, 1
      %p193 = por %p191, %p192
      %p194 = scmp.ne.s32.totalorder %s185, %s186
      %p195 = scmp.eq.s32.totalorder %s23, 0
      %p196 = por %p194, %p195
      %p197 = scmp.ne.s32.totalorder %s185, %s186
      %p198 = scmp.eq.s32.totalorder %s24, 1
      %p199 = por %p197, %p198
      %p201 = scmp.ne.s32.totalorder %s186, %s200
      %p202 = scmp.eq.s32.totalorder %s24, 0
      %p203 = por %p201, %p202
      %s205 = sadd.s32 %s204, 1
      %p208 = scmp.eq.s32.totalorder %s18, 1
      %p209 = scmp.ne.s32.totalorder %s204, %s206
      %p210 = scmp.eq.s32.totalorder %s18, 0
      %p211 = por %p209, %p210
      %p212 = scmp.ne.s32.totalorder %s204, %s206
      %p213 = scmp.eq.s32.totalorder %s23, 1
      %p214 = por %p212, %p213
      %p215 = scmp.ne.s32.totalorder %s206, %s207
      %p216 = scmp.eq.s32.totalorder %s23, 0
      %p217 = por %p215, %p216
      %p218 = scmp.ne.s32.totalorder %s206, %s207
      %p219 = scmp.eq.s32.totalorder %s24, 1
      %p220 = por %p218, %p219
      %p222 = scmp.ne.s32.totalorder %s207, %s221
      %p223 = scmp.eq.s32.totalorder %s24, 0
      %p224 = por %p222, %p223
      %s226 = sadd.s32 %s225, 1
      %p229 = scmp.eq.s32.totalorder %s18, 1
      %p230 = scmp.ne.s32.totalorder %s225, %s227
      %p231 = scmp.eq.s32.totalorder %s18, 0
      %p232 = por %p230, %p231
      %p233 = scmp.ne.s32.totalorder %s225, %s227
      %p234 = scmp.eq.s32.totalorder %s23, 1
      %p235 = por %p233, %p234
      %p236 = scmp.ne.s32.totalorder %s227, %s228
      %p237 = scmp.eq.s32.totalorder %s23, 0
      %p238 = por %p236, %p237
      %p239 = scmp.ne.s32.totalorder %s227, %s228
      %p240 = scmp.eq.s32.totalorder %s24, 1
      %p241 = por %p239, %p240
      %p243 = scmp.ne.s32.totalorder %s228, %s242
      %p244 = scmp.eq.s32.totalorder %s24, 0
      %p245 = por %p243, %p244
      %s246 = ssub.s32 %s25, %s37
      %s247 = ssub.s32 %s26, %s33
      %s248 = sor.u32 %s246, %s247
      %p249 = scmp.eq.s32.totalorder %s248, 0
      %s251 = sadd.s32 %s250, 1
      %s252 = scalar_select %p249, %s250, %s251
      %p255 = pneg %p249
      %p256 = scmp.eq.s32.totalorder %s18, 1
      %p257 = por %p255, %p256
      %p258 = scmp.ne.s32.totalorder %s250, %s253
      %p259 = scmp.eq.s32.totalorder %s18, 0
      %p260 = por %p258, %p259
      %p261 = scmp.ne.s32.totalorder %s250, %s253
      %p262 = scmp.eq.s32.totalorder %s23, 1
      %p263 = por %p261, %p262
      %p264 = scmp.ne.s32.totalorder %s253, %s254
      %p265 = scmp.eq.s32.totalorder %s23, 0
      %p266 = por %p264, %p265
      %p267 = scmp.ne.s32.totalorder %s253, %s254
      %p268 = scmp.eq.s32.totalorder %s24, 1
      %p269 = por %p267, %p268
      %p271 = scmp.ne.s32.totalorder %s254, %s270
      %p272 = scmp.eq.s32.totalorder %s24, 0
      %p273 = por %p271, %p272
      %p274 = scmp.le.s32.totalorder 1, %s18
      %p275 = scmp.lt.s32.totalorder %s18, 3
      %p276 = pnand %p274, %p275
      %p277 = pneg %p276
      // Predicated region
      $region9: #{tpu_custom_call.1} parent=5 // pred_check
        _
      $region10: #{tpu_custom_call.1} parent=5 // pred_check_branch
        %279 = sbr.rel (%p276) target = $region12
      $region11: #{tpu_custom_call.1} parent=5 // pred_region
        %s280 = ssub.s32 %s18, 1
        // Predicated region
        $region13: #{tpu_custom_call.1} parent=11 // pred_check
          %p281 = pneg %p133
        $region14: #{tpu_custom_call.1} parent=11 // pred_check_branch
          %283 = sbr.rel (%p281) target = $region16
        $region15: #{tpu_custom_call.1} parent=11 // pred_region
          _
        $region16: #{tpu_custom_call.1} parent=11 // pred_fallthru
          _
        // Predicated region
        $region17: #{tpu_custom_call.1} parent=11 // pred_check
          %p284 = pneg %p154
        $region18: #{tpu_custom_call.1} parent=11 // pred_check_branch
          %286 = sbr.rel (%p284) target = $region20
        $region19: #{tpu_custom_call.1} parent=11 // pred_region
          _
        $region20: #{tpu_custom_call.1} parent=11 // pred_fallthru
          _
        // Predicated region
        $region21: #{tpu_custom_call.1} parent=11 // pred_check
          %p287 = pneg %p175
        $region22: #{tpu_custom_call.1} parent=11 // pred_check_branch
          %289 = sbr.rel (%p287) target = $region24
        $region23: #{tpu_custom_call.1} parent=11 // pred_region
          _
        $region24: #{tpu_custom_call.1} parent=11 // pred_fallthru
          _
        // Predicated region
        $region25: #{tpu_custom_call.1} parent=11 // pred_check
          %p290 = pneg %p196
        $region26: #{tpu_custom_call.1} parent=11 // pred_check_branch
          %292 = sbr.rel (%p290) target = $region28
        $region27: #{tpu_custom_call.1} parent=11 // pred_region
          _
        $region28: #{tpu_custom_call.1} parent=11 // pred_fallthru
          _
        // Predicated region
        $region29: #{tpu_custom_call.1} parent=11 // pred_check
          %p293 = pneg %p217
        $region30: #{tpu_custom_call.1} parent=11 // pred_check_branch
          %295 = sbr.rel (%p293) target = $region32
        $region31: #{tpu_custom_call.1} parent=11 // pred_region
          _
        $region32: #{tpu_custom_call.1} parent=11 // pred_fallthru
          _
        // Predicated region
        $region33: #{tpu_custom_call.1} parent=11 // pred_check
          %p296 = pneg %p238
        $region34: #{tpu_custom_call.1} parent=11 // pred_check_branch
          %298 = sbr.rel (%p296) target = $region36
        $region35: #{tpu_custom_call.1} parent=11 // pred_region
          _
        $region36: #{tpu_custom_call.1} parent=11 // pred_fallthru
          _
      $region12: #{tpu_custom_call.1} parent=5 // pred_fallthru
        _
      %p299 = scmp.lt.s32.totalorder %s18, 2
      // Predicated region
      $region37: #{tpu_custom_call.1} parent=5 // pred_check
        %p300 = pneg %p299
      $region38: #{tpu_custom_call.1} parent=5 // pred_check_branch
        %302 = sbr.rel (%p300) target = $region40
      $region39: #{tpu_custom_call.1} parent=5 // pred_region
        // Predicated region
        $region41: #{tpu_custom_call.1} parent=39 // pred_check
          %p303 = pneg %p52
        $region42: #{tpu_custom_call.1} parent=39 // pred_check_branch
          %305 = sbr.rel (%p303) target = $region44
        $region43: #{tpu_custom_call.1} parent=39 // pred_region
          %p306 = scmp.lt.s32.totalorder %s25, 1
          %s307 = scalar_select %p306, %s25, 1
          %p308 = scmp.lt.s32.totalorder %s26, 0
          %s309 = scalar_select %p308, %s26, 0
          %s310 = sadd.s32 %s309, %s307
          %s311 = smul.addr %s310, 4
          %s312 = scalar_lea.vmem %s0, %s311
        $region44: #{tpu_custom_call.1} parent=39 // pred_fallthru
          _
        // Predicated region
        $region45: #{tpu_custom_call.1} parent=39 // pred_check
          %p313 = pneg %p80
        $region46: #{tpu_custom_call.1} parent=39 // pred_check_branch
          %315 = sbr.rel (%p313) target = $region48
        $region47: #{tpu_custom_call.1} parent=39 // pred_region
          %p316 = scmp.lt.s32.totalorder %s25, 1
          %s317 = scalar_select %p316, %s25, 1
          %p318 = scmp.lt.s32.totalorder %s26, 0
          %s319 = scalar_select %p318, %s26, 0
          %s320 = sadd.s32 %s319, %s317
          %s321 = smul.addr %s320, 8
          %s322 = scalar_lea.vmem %s1, %s321
        $region48: #{tpu_custom_call.1} parent=39 // pred_fallthru
          _
        // Predicated region
        $region49: #{tpu_custom_call.1} parent=39 // pred_check
          %p323 = pneg %p106
        $region50: #{tpu_custom_call.1} parent=39 // pred_check_branch
          %325 = sbr.rel (%p323) target = $region52
        $region51: #{tpu_custom_call.1} parent=39 // pred_region
          %p326 = scmp.lt.s32.totalorder %s25, 1
          %s327 = scalar_select %p326, %s25, 1
          %s328 = smul.addr %s327, 128
          %s329 = smul.addr %s328, 4
          %s330 = scalar_lea.vmem %s2, %s329
        $region52: #{tpu_custom_call.1} parent=39 // pred_fallthru
          _
      $region40: #{tpu_custom_call.1} parent=5 // pred_fallthru
        _
      %p331 = scmp.le.s32.totalorder 1, %s18
      %p332 = scmp.lt.s32.totalorder %s18, 3
      %p333 = pnand %p331, %p332
      %p334 = pneg %p333
      // Predicated region
      $region53: #{tpu_custom_call.1} parent=5 // pred_check
        _
      $region54: #{tpu_custom_call.1} parent=5 // pred_check_branch
        %336 = sbr.rel (%p333) target = $region56
      $region55: #{tpu_custom_call.1} parent=5 // pred_region
        %s337 = ssub.s32 %s18, 1
        %p338 = scmp.lt.s32.totalorder %s27, 1
        %s339 = scalar_select %p338, %s27, 1
        %p340 = scmp.lt.s32.totalorder %s28, 0
        %s341 = scalar_select %p340, %s28, 0
        %s342 = sadd.s32 %s341, %s339
        %s343 = smul.addr %s342, 4
        %s344 = scalar_lea.vmem %s0, %s343
        %p345 = pneg %p58
        %p346 = pneg %p55
        %p347 = scmp.lt.s32.totalorder %s27, 1
        %s348 = scalar_select %p347, %s27, 1
        %p349 = scmp.lt.s32.totalorder %s28, 0
        %s350 = scalar_select %p349, %s28, 0
        %s351 = sadd.s32 %s350, %s348
        %s352 = smul.addr %s351, 8
        %s353 = scalar_lea.vmem %s1, %s352
        %p354 = pneg %p86
        %p355 = pneg %p83
        %p356 = scmp.lt.s32.totalorder %s27, 1
        %s357 = scalar_select %p356, %s27, 1
        %s358 = smul.addr %s357, 128
        %s359 = smul.addr %s358, 4
        %s360 = scalar_lea.vmem %s2, %s359
        %p361 = pneg %p112
        %p362 = pneg %p109
        %p363 = pneg %p133
        %p364 = pneg %p130
        %p365 = pneg %p154
        %p366 = pneg %p151
        %p367 = pneg %p175
        %p368 = pneg %p172
        %p369 = pneg %p196
        %p370 = pneg %p193
        %p371 = pneg %p217
        %p372 = pneg %p214
        %p373 = pneg %p238
        %p374 = pneg %p235
        %p375 = pneg %p266
        %p376 = pneg %p263
        %s377 = sand.u32 %s253, 1
        %s378 = scalar_lea.sflag [#allocation3], %s377
        %s379 = sand.u32 %s253, 1
        %s380 = smul.addr %s379, 8
        %s381 = scalar_lea.vmem [#allocation2], %s380
        %p382 = scmp.lt.s32.totalorder %s27, 1
        %s383 = scalar_select %p382, %s27, 1
        %p384 = scmp.lt.s32.totalorder %s28, 0
        %s385 = scalar_select %p384, %s28, 0
        %s386 = sadd.s32 %s385, %s383
        %s387 = smul.addr %s386, 4
        %s388 = scalar_lea.vmem %s0, %s387
        %p389 = scmp.lt.s32.totalorder %s27, 1
        %s390 = scalar_select %p389, %s27, 1
        %p391 = scmp.lt.s32.totalorder %s28, 0
        %s392 = scalar_select %p391, %s28, 0
        %s393 = sadd.s32 %s392, %s390
        %s394 = smul.addr %s393, 8
        %s395 = scalar_lea.vmem %s1, %s394
        %p396 = scmp.lt.s32.totalorder %s27, 1
        %s397 = scalar_select %p396, %s27, 1
        %s398 = smul.addr %s397, 128
        %s399 = smul.addr %s398, 4
        %s400 = scalar_lea.vmem %s2, %s399
        %v402 = vld [vmem:[%s388] sm:$0xf]
        %v403 = vld [vmem:[%s395] sm:$0xff]
        %v404 = vld [vmem:[%s4] sm:$0xf]
        %v405 = vld [vmem:[%s4 + $0x4] sm:$0xf]
        %v406 = vld [vmem:[%s4 + $0x8] sm:$0xf]
        %v407 = vld [vmem:[%s4 + $0xc] sm:$0xf]
        %v408 = vld [vmem:[%s5] sm:$0x1]
        %v410 = vlaneseq
        %v411 = vshrl.u32 %v410, 7
        %v412 = vsub.s32 0, %v411
        %v413 = vrot.slane %v408, %v412
        %v419 = vunpack.c.l.b16 %v404
        %v420 = vunpack.c.l.b16 %v405
        %v421 = vunpack.c.l.b16 %v406
        %v422 = vunpack.c.l.b16 %v407
        %v423 = vpack.c.b16 %v420, %v419
        %v424 = vpack.c.b16 %v422, %v421
        %vm427 = vcmask 261120
        %v429 = vsel %vm427, %v402, 0
        %431 = vmatprep.subr.bf16.mxu0 0
        %432 = vmatpush1.bf16.msra.mxu0 %v423
        %433 = vmatprep.subr.bf16.mxu0 0
        %434 = vmatpush1.bf16.msra.mxu0 %v424
        %435 = vmatprep.subr.bf16.mxu0 0
        %436 = vmatpush1.bf16.msra.mxu0 0
        %437 = vmatprep.subr.bf16.mxu0 0
        %438 = vmatpush1.bf16.msra.mxu0 0
        %439 = vmatprep.subr.bf16.mxu0 0
        %440 = vmatpush1.bf16.msra.mxu0 0
        %441 = vmatprep.subr.bf16.mxu0 0
        %442 = vmatpush1.bf16.msra.mxu0 0
        %443 = vmatprep.subr.bf16.mxu0 0
        %444 = vmatpush1.bf16.msra.mxu0 0
        %445 = vmatprep.subr.bf16.mxu0 0
        %446 = vmatpush1.bf16.msra.mxu0 0
        %447 = vmatprep.subr.bf16.mxu0 0
        %448 = vmatpush1.bf16.msra.mxu0 0
        %449 = vmatprep.subr.bf16.mxu0 0
        %450 = vmatpush1.bf16.msra.mxu0 0
        %451 = vmatprep.subr.bf16.mxu0 0
        %452 = vmatpush1.bf16.msra.mxu0 0
        %453 = vmatprep.subr.bf16.mxu0 0
        %454 = vmatpush1.bf16.msra.mxu0 0
        %455 = vmatprep.subr.bf16.mxu0 0
        %456 = vmatpush1.bf16.msra.mxu0 0
        %457 = vmatprep.subr.bf16.mxu0 0
        %458 = vmatpush1.bf16.msra.mxu0 0
        %459 = vmatprep.subr.bf16.mxu0 0
        %460 = vmatpush1.bf16.msra.mxu0 0
        %461 = vmatprep.subr.bf16.mxu0 0
        %462 = vmatpush1.bf16.msra.mxu0 0
        %463 = vmatprep.mubr.bf16.mxu0 0
        %464 = vmatmul.mubr.bf16.gmra.mrb[0].mxu0 %v429
        %v465 = vpop.f32.mrb[0].mxu0
        %v466 = vadd.f32 %v413, %v465
        %v467 = vpop.f32.mrb[0].mxu0
        %v468 = vpop.f32.mrb[0].mxu0
        %v469 = vpop.f32.mrb[0].mxu0
        %470 = vdwg.mxu0
        %v471 = vld [vmem:[%s6] sm:$0xf]
        %v472 = vld [vmem:[%s6 + $0x4] sm:$0xf]
        %v473 = vld [vmem:[%s6 + $0x8] sm:$0xf]
        %v474 = vld [vmem:[%s6 + $0xc] sm:$0xf]
        %v475 = vld [vmem:[%s7] sm:$0x1]
        %v477 = vlaneseq
        %v478 = vshrl.u32 %v477, 7
        %v479 = vsub.s32 0, %v478
        %v480 = vrot.slane %v475, %v479
        %v486 = vunpack.c.l.b16 %v471
        %v487 = vunpack.c.l.b16 %v472
        %v488 = vunpack.c.l.b16 %v473
        %v489 = vunpack.c.l.b16 %v474
        %v490 = vpack.c.b16 %v487, %v486
        %v491 = vpack.c.b16 %v489, %v488
        %494 = vmatprep.subr.bf16.mxu0 0
        %495 = vmatpush1.bf16.msra.mxu0 %v490
        %496 = vmatprep.subr.bf16.mxu0 0
        %497 = vmatpush1.bf16.msra.mxu0 %v491
        %498 = vmatprep.subr.bf16.mxu0 0
        %499 = vmatpush1.bf16.msra.mxu0 0
        %500 = vmatprep.subr.bf16.mxu0 0
        %501 = vmatpush1.bf16.msra.mxu0 0
        %502 = vmatprep.subr.bf16.mxu0 0
        %503 = vmatpush1.bf16.msra.mxu0 0
        %504 = vmatprep.subr.bf16.mxu0 0
        %505 = vmatpush1.bf16.msra.mxu0 0
        %506 = vmatprep.subr.bf16.mxu0 0
        %507 = vmatpush1.bf16.msra.mxu0 0
        %508 = vmatprep.subr.bf16.mxu0 0
        %509 = vmatpush1.bf16.msra.mxu0 0
        %510 = vmatprep.subr.bf16.mxu0 0
        %511 = vmatpush1.bf16.msra.mxu0 0
        %512 = vmatprep.subr.bf16.mxu0 0
        %513 = vmatpush1.bf16.msra.mxu0 0
        %514 = vmatprep.subr.bf16.mxu0 0
        %515 = vmatpush1.bf16.msra.mxu0 0
        %516 = vmatprep.subr.bf16.mxu0 0
        %517 = vmatpush1.bf16.msra.mxu0 0
        %518 = vmatprep.subr.bf16.mxu0 0
        %519 = vmatpush1.bf16.msra.mxu0 0
        %520 = vmatprep.subr.bf16.mxu0 0
        %521 = vmatpush1.bf16.msra.mxu0 0
        %522 = vmatprep.subr.bf16.mxu0 0
        %523 = vmatpush1.bf16.msra.mxu0 0
        %524 = vmatprep.subr.bf16.mxu0 0
        %525 = vmatpush1.bf16.msra.mxu0 0
        %526 = vmatprep.mubr.bf16.mxu0 0
        %527 = vmatmul.mubr.bf16.gmra.mrb[0].mxu0 %v429
        %v528 = vpop.f32.mrb[0].mxu0
        %v529 = vadd.f32 %v480, %v528
        %v530 = vpop.f32.mrb[0].mxu0
        %v531 = vpop.f32.mrb[0].mxu0
        %v532 = vpop.f32.mrb[0].mxu0
        %533 = vdwg.mxu0
        %vm534 = vcmask 64512
        %v535 = vsel %vm534, %v529, -inf
        %536 = vmax.xlane.f32.xlu0 %v535
        %v537 = vpop.xlane.xlu0 %536
        %v538 = vsub.f32 %v529, %v537
        %v539 = vmul.f32 %v538, 1.442695
        %v540 = vpow.pop %v539
        %v541 = vsel %vm534, %v540, 0.0
        %542 = vadd.xlane.f32.xlu0 %v541
        %v543 = vpop.xlane.xlu0 %542
        %v544 = vrcp.pop %v543
        %v545 = vmul.f32 %v540, %v544
        %vm546 = vcmask 130112
        %v547 = vsel %vm546, %v529, -inf
        %548 = vmax.xlane.f32.xlu0 %v547
        %v549 = vpop.xlane.xlu0 %548
        %v550 = vsub.f32 %v529, %v549
        %v551 = vmul.f32 %v550, 1.442695
        %v552 = vpow.pop %v551
        %554 = vrot.lane.b32.xlu0 %v552, 120
        %v555 = vpop.permute.xlu0 %554
        %v557 = vsel %vm534, %v555, 0.0
        %558 = vadd.xlane.f32.xlu0 %v557
        %v559 = vpop.xlane.xlu0 %558
        %v560 = vrcp.pop %v559
        %v561 = vmul.f32 %v552, %v560
        %vm562 = vcmask 195712
        %v563 = vsel %vm562, %v529, -inf
        %564 = vmax.xlane.f32.xlu0 %v563
        %v565 = vpop.xlane.xlu0 %564
        %v566 = vsub.f32 %v529, %v565
        %v567 = vmul.f32 %v566, 1.442695
        %v568 = vpow.pop %v567
        %570 = vrot.lane.b32.xlu0 %v568, 112
        %v571 = vpop.permute.xlu0 %570
        %v573 = vsel %vm534, %v571, 0.0
        %574 = vadd.xlane.f32.xlu0 %v573
        %v575 = vpop.xlane.xlu0 %574
        %v576 = vrcp.pop %v575
        %v577 = vmul.f32 %v568, %v576
        %vm578 = vcmask 261312
        %v579 = vsel %vm578, %v529, -inf
        %580 = vmax.xlane.f32.xlu0 %v579
        %v581 = vpop.xlane.xlu0 %580
        %v582 = vsub.f32 %v529, %v581
        %v583 = vmul.f32 %v582, 1.442695
        %v584 = vpow.pop %v583
        %586 = vrot.lane.b32.xlu0 %v584, 104
        %v587 = vpop.permute.xlu0 %586
        %v589 = vsel %vm534, %v587, 0.0
        %590 = vadd.xlane.f32.xlu0 %v589
        %v591 = vpop.xlane.xlu0 %590
        %v592 = vrcp.pop %v591
        %v593 = vmul.f32 %v584, %v592
        %v594 = vmul.f32 %v403, 0.5
        %v595 = vmul.f32 %v466, 0.25
        %597 = vset.pattern.permute.xlu0 2
        %598 = vperm.xlu0 %597, %v594
        %v599 = vpop.permute.xlu0 %598
        %v601 = vmul.f32 %v595, %v599
        %603 = vset.pattern.permute.xlu0 0
        %604 = vperm.xlu0 %603, %v403
        %v605 = vpop.permute.xlu0 %604
        %v607 = vadd.f32 %v605, %v601
        %v608 = vmul.f32 %v607, 8.0
        %v609 = vsub.f32 %v608, 0.5
        %610 = vset.pattern.permute.xlu0 3
        %611 = vperm.xlu0 %610, %v594
        %v612 = vpop.permute.xlu0 %611
        %v614 = vmul.f32 %v595, %v612
        %615 = vset.pattern.permute.xlu0 1
        %616 = vperm.xlu0 %615, %v403
        %v617 = vpop.permute.xlu0 %616
        %v619 = vadd.f32 %v617, %v614
        %v620 = vmul.f32 %v619, 8.0
        %v621 = vsub.f32 %v620, 0.5
        %622 = vset.pattern.permute.xlu0 6
        %623 = vperm.xlu0 %622, %v594
        %v624 = vpop.permute.xlu0 %623
        %v626 = vmul.f32 %v595, %v624
        %627 = vset.pattern.permute.xlu0 4
        %628 = vperm.xlu0 %627, %v403
        %v629 = vpop.permute.xlu0 %628
        %v631 = vadd.f32 %v629, %v626
        %v632 = vmul.f32 %v631, 4.0
        %v633 = vsub.f32 %v632, 0.5
        %634 = vset.pattern.permute.xlu0 7
        %635 = vperm.xlu0 %634, %v594
        %v636 = vpop.permute.xlu0 %635
        %v638 = vmul.f32 %v595, %v636
        %639 = vset.pattern.permute.xlu0 5
        %640 = vperm.xlu0 %639, %v403
        %v641 = vpop.permute.xlu0 %640
        %v643 = vadd.f32 %v641, %v638
        %v644 = vmul.f32 %v643, 4.0
        %v645 = vsub.f32 %v644, 0.5
        %v646 = vld [vmem:[%s3] sm:$0x1]
        %v647 = vld [vmem:[%s3 + $0x2] sm:$0x1]
        %v648 = vld [vmem:[%s3 + $0x1] sm:$0x1]
        %v649 = vld [vmem:[%s3 + $0x3] sm:$0x1]
        %v650 = vlaneseq
        %v651 = vshrl.u32 %v650, 7
        %v652 = vsub.s32 0, %v651
        %v653 = vrot.slane %v648, %v652
        %655 = vset.pattern.permute.xlu0 0
        %656 = vperm.xlu0 %655, %v609
        %v657 = vpop.permute.xlu0 %656
        %v659 = vsub.f32 %v653, %v657
        %v660 = vand.u32 2147483647, %v659
        %v661 = vsub.f32 1.0, %v660
        %v662 = vmax.f32 %v661, 0.0
        %v663 = vlaneseq
        %v664 = vshrl.u32 %v663, 7
        %v665 = vsub.s32 0, %v664
        %v666 = vrot.slane %v646, %v665
        %668 = vset.pattern.permute.xlu0 16
        %669 = vperm.xlu0 %668, %v621
        %v670 = vpop.permute.xlu0 %669
        %v672 = vsub.f32 %v666, %v670
        %v673 = vand.u32 2147483647, %v672
        %v674 = vsub.f32 1.0, %v673
        %v675 = vmax.f32 %v674, 0.0
        %v676 = vmul.f32 %v662, %v675
        %678 = vset.pattern.permute.xlu0 0
        %679 = vperm.xlu0 %678, %v545
        %v680 = vpop.permute.xlu0 %679
        %v682 = vmul.f32 %v680, %v676
        %683 = vset.pattern.permute.xlu0 1
        %684 = vperm.xlu0 %683, %v609
        %v685 = vpop.permute.xlu0 %684
        %v687 = vsub.f32 %v653, %v685
        %v688 = vand.u32 2147483647, %v687
        %v689 = vsub.f32 1.0, %v688
        %v690 = vmax.f32 %v689, 0.0
        %691 = vset.pattern.permute.xlu0 17
        %692 = vperm.xlu0 %691, %v621
        %v693 = vpop.permute.xlu0 %692
        %v695 = vsub.f32 %v666, %v693
        %v696 = vand.u32 2147483647, %v695
        %v697 = vsub.f32 1.0, %v696
        %v698 = vmax.f32 %v697, 0.0
        %v699 = vmul.f32 %v690, %v698
        %700 = vset.pattern.permute.xlu0 1
        %701 = vperm.xlu0 %700, %v545
        %v702 = vpop.permute.xlu0 %701
        %v704 = vmul.f32 %v702, %v699
        %v705 = vadd.f32 %v682, %v704
        %706 = vset.pattern.permute.xlu0 2
        %707 = vperm.xlu0 %706, %v609
        %v708 = vpop.permute.xlu0 %707
        %v710 = vsub.f32 %v653, %v708
        %v711 = vand.u32 2147483647, %v710
        %v712 = vsub.f32 1.0, %v711
        %v713 = vmax.f32 %v712, 0.0
        %714 = vset.pattern.permute.xlu0 18
        %715 = vperm.xlu0 %714, %v621
        %v716 = vpop.permute.xlu0 %715
        %v718 = vsub.f32 %v666, %v716
        %v719 = vand.u32 2147483647, %v718
        %v720 = vsub.f32 1.0, %v719
        %v721 = vmax.f32 %v720, 0.0
        %v722 = vmul.f32 %v713, %v721
        %723 = vset.pattern.permute.xlu0 2
        %724 = vperm.xlu0 %723, %v545
        %v725 = vpop.permute.xlu0 %724
        %v727 = vmul.f32 %v725, %v722
        %v728 = vadd.f32 %v705, %v727
        %729 = vset.pattern.permute.xlu0 3
        %730 = vperm.xlu0 %729, %v609
        %v731 = vpop.permute.xlu0 %730
        %v733 = vsub.f32 %v653, %v731
        %v734 = vand.u32 2147483647, %v733
        %v735 = vsub.f32 1.0, %v734
        %v736 = vmax.f32 %v735, 0.0
        %737 = vset.pattern.permute.xlu0 19
        %738 = vperm.xlu0 %737, %v621
        %v739 = vpop.permute.xlu0 %738
        %v741 = vsub.f32 %v666, %v739
        %v742 = vand.u32 2147483647, %v741
        %v743 = vsub.f32 1.0, %v742
        %v744 = vmax.f32 %v743, 0.0
        %v745 = vmul.f32 %v736, %v744
        %746 = vset.pattern.permute.xlu0 3
        %747 = vperm.xlu0 %746, %v545
        %v748 = vpop.permute.xlu0 %747
        %v750 = vmul.f32 %v748, %v745
        %v751 = vadd.f32 %v728, %v750
        %v752 = vpack.c.bf16 %v751, %v751
        %v753 = vld [vmem:[%s400] sm:$0xf]
        %v754 = vld [vmem:[%s400 + $0x4] sm:$0xf]
        %v755 = vld [vmem:[%s400 + $0x8] sm:$0xf]
        %v756 = vld [vmem:[%s400 + $0xc] sm:$0xf]
        %v757 = vld [vmem:[%s400 + $0x10] sm:$0xf]
        %v758 = vld [vmem:[%s400 + $0x14] sm:$0xf]
        %v759 = vld [vmem:[%s400 + $0x18] sm:$0xf]
        %v760 = vld [vmem:[%s400 + $0x1c] sm:$0xf]
        %v761 = vld [vmem:[%s400 + $0x20] sm:$0xf]
        %v762 = vld [vmem:[%s400 + $0x24] sm:$0xf]
        %v763 = vld [vmem:[%s400 + $0x28] sm:$0xf]
        %v764 = vld [vmem:[%s400 + $0x2c] sm:$0xf]
        %v765 = vld [vmem:[%s400 + $0x30] sm:$0xf]
        %v766 = vld [vmem:[%s400 + $0x34] sm:$0xf]
        %v767 = vld [vmem:[%s400 + $0x38] sm:$0xf]
        %v768 = vld [vmem:[%s400 + $0x3c] sm:$0xf]
        %v769 = vlaneseq
        %v770 = vshrl.u32 %v769, 7
        %v771 = vsub.s32 0, %v770
        %v772 = vrot.slane %v649, %v771
        %774 = vset.pattern.permute.xlu0 32
        %775 = vperm.xlu0 %774, %v633
        %v776 = vpop.permute.xlu0 %775
        %v778 = vsub.f32 %v772, %v776
        %v779 = vand.u32 2147483647, %v778
        %v780 = vsub.f32 1.0, %v779
        %v781 = vmax.f32 %v780, 0.0
        %v782 = vlaneseq
        %v783 = vshrl.u32 %v782, 7
        %v784 = vsub.s32 0, %v783
        %v785 = vrot.slane %v647, %v784
        %787 = vset.pattern.permute.xlu0 48
        %788 = vperm.xlu0 %787, %v645
        %v789 = vpop.permute.xlu0 %788
        %v791 = vsub.f32 %v785, %v789
        %v792 = vand.u32 2147483647, %v791
        %v793 = vsub.f32 1.0, %v792
        %v794 = vmax.f32 %v793, 0.0
        %v795 = vmul.f32 %v781, %v794
        %796 = vset.pattern.permute.xlu0 4
        %797 = vperm.xlu0 %796, %v545
        %v798 = vpop.permute.xlu0 %797
        %v800 = vmul.f32 %v798, %v795
        %801 = vset.pattern.permute.xlu0 33
        %802 = vperm.xlu0 %801, %v633
        %v803 = vpop.permute.xlu0 %802
        %v805 = vsub.f32 %v772, %v803
        %v806 = vand.u32 2147483647, %v805
        %v807 = vsub.f32 1.0, %v806
        %v808 = vmax.f32 %v807, 0.0
        %809 = vset.pattern.permute.xlu0 49
        %810 = vperm.xlu0 %809, %v645
        %v811 = vpop.permute.xlu0 %810
        %v813 = vsub.f32 %v785, %v811
        %v814 = vand.u32 2147483647, %v813
        %v815 = vsub.f32 1.0, %v814
        %v816 = vmax.f32 %v815, 0.0
        %v817 = vmul.f32 %v808, %v816
        %818 = vset.pattern.permute.xlu0 5
        %819 = vperm.xlu0 %818, %v545
        %v820 = vpop.permute.xlu0 %819
        %v822 = vmul.f32 %v820, %v817
        %v823 = vadd.f32 %v800, %v822
        %824 = vset.pattern.permute.xlu0 34
        %825 = vperm.xlu0 %824, %v633
        %v826 = vpop.permute.xlu0 %825
        %v828 = vsub.f32 %v772, %v826
        %v829 = vand.u32 2147483647, %v828
        %v830 = vsub.f32 1.0, %v829
        %v831 = vmax.f32 %v830, 0.0
        %832 = vset.pattern.permute.xlu0 50
        %833 = vperm.xlu0 %832, %v645
        %v834 = vpop.permute.xlu0 %833
        %v836 = vsub.f32 %v785, %v834
        %v837 = vand.u32 2147483647, %v836
        %v838 = vsub.f32 1.0, %v837
        %v839 = vmax.f32 %v838, 0.0
        %v840 = vmul.f32 %v831, %v839
        %841 = vset.pattern.permute.xlu0 6
        %842 = vperm.xlu0 %841, %v545
        %v843 = vpop.permute.xlu0 %842
        %v845 = vmul.f32 %v843, %v840
        %v846 = vadd.f32 %v823, %v845
        %847 = vset.pattern.permute.xlu0 35
        %848 = vperm.xlu0 %847, %v633
        %v849 = vpop.permute.xlu0 %848
        %v851 = vsub.f32 %v772, %v849
        %v852 = vand.u32 2147483647, %v851
        %v853 = vsub.f32 1.0, %v852
        %v854 = vmax.f32 %v853, 0.0
        %855 = vset.pattern.permute.xlu0 51
        %856 = vperm.xlu0 %855, %v645
        %v857 = vpop.permute.xlu0 %856
        %v859 = vsub.f32 %v785, %v857
        %v860 = vand.u32 2147483647, %v859
        %v861 = vsub.f32 1.0, %v860
        %v862 = vmax.f32 %v861, 0.0
        %v863 = vmul.f32 %v854, %v862
        %864 = vset.pattern.permute.xlu0 7
        %865 = vperm.xlu0 %864, %v545
        %v866 = vpop.permute.xlu0 %865
        %v868 = vmul.f32 %v866, %v863
        %v869 = vadd.f32 %v846, %v868
        %v870 = vpack.c.bf16 %v869, %v869
        %v871 = vld [vmem:[%s400 + $0x40] sm:$0xf]
        %v872 = vld [vmem:[%s400 + $0x44] sm:$0xf]
        %v873 = vld [vmem:[%s400 + $0x48] sm:$0xf]
        %v874 = vld [vmem:[%s400 + $0x4c] sm:$0xf]
        %v875 = vld [vmem:[%s400 + $0x50] sm:$0xf]
        %v876 = vld [vmem:[%s400 + $0x54] sm:$0xf]
        %v877 = vld [vmem:[%s400 + $0x58] sm:$0xf]
        %v878 = vld [vmem:[%s400 + $0x5c] sm:$0xf]
        %v879 = vld [vmem:[%s400 + $0x60] sm:$0xf]
        %v880 = vld [vmem:[%s400 + $0x64] sm:$0xf]
        %v881 = vld [vmem:[%s400 + $0x68] sm:$0xf]
        %v882 = vld [vmem:[%s400 + $0x6c] sm:$0xf]
        %v883 = vld [vmem:[%s400 + $0x70] sm:$0xf]
        %v884 = vld [vmem:[%s400 + $0x74] sm:$0xf]
        %v885 = vld [vmem:[%s400 + $0x78] sm:$0xf]
        %v886 = vld [vmem:[%s400 + $0x7c] sm:$0xf]
        %v903 = vunpack.c.l.b16 %v871
        %v904 = vunpack.c.l.b16 %v872
        %v905 = vunpack.c.l.b16 %v873
        %v906 = vunpack.c.l.b16 %v874
        %v907 = vunpack.c.l.b16 %v875
        %v908 = vunpack.c.l.b16 %v876
        %v909 = vunpack.c.l.b16 %v877
        %v910 = vunpack.c.l.b16 %v878
        %v911 = vunpack.c.l.b16 %v879
        %v912 = vunpack.c.l.b16 %v880
        %v913 = vunpack.c.l.b16 %v881
        %v914 = vunpack.c.l.b16 %v882
        %v915 = vunpack.c.l.b16 %v883
        %v916 = vunpack.c.l.b16 %v884
        %v917 = vunpack.c.l.b16 %v885
        %v918 = vunpack.c.l.b16 %v886
        %v919 = vpack.c.b16 %v904, %v903
        %v920 = vpack.c.b16 %v906, %v905
        %v921 = vpack.c.b16 %v908, %v907
        %v922 = vpack.c.b16 %v910, %v909
        %v923 = vpack.c.b16 %v912, %v911
        %v924 = vpack.c.b16 %v914, %v913
        %v925 = vpack.c.b16 %v916, %v915
        %v926 = vpack.c.b16 %v918, %v917
        %935 = vmatprep.subr.bf16.mxu0 0
        %936 = vmatpush1.bf16.msra.mxu0 %v919
        %937 = vmatprep.subr.bf16.mxu0 0
        %938 = vmatpush1.bf16.msra.mxu0 %v920
        %939 = vmatprep.subr.bf16.mxu0 0
        %940 = vmatpush1.bf16.msra.mxu0 %v921
        %941 = vmatprep.subr.bf16.mxu0 0
        %942 = vmatpush1.bf16.msra.mxu0 %v922
        %943 = vmatprep.subr.bf16.mxu0 0
        %944 = vmatpush1.bf16.msra.mxu0 %v923
        %945 = vmatprep.subr.bf16.mxu0 0
        %946 = vmatpush1.bf16.msra.mxu0 %v924
        %947 = vmatprep.subr.bf16.mxu0 0
        %948 = vmatpush1.bf16.msra.mxu0 %v925
        %949 = vmatprep.subr.bf16.mxu0 0
        %950 = vmatpush1.bf16.msra.mxu0 %v926
        %951 = vmatprep.subr.bf16.mxu0 0
        %952 = vmatpush1.bf16.msra.mxu0 0
        %953 = vmatprep.subr.bf16.mxu0 0
        %954 = vmatpush1.bf16.msra.mxu0 0
        %955 = vmatprep.subr.bf16.mxu0 0
        %956 = vmatpush1.bf16.msra.mxu0 0
        %957 = vmatprep.subr.bf16.mxu0 0
        %958 = vmatpush1.bf16.msra.mxu0 0
        %959 = vmatprep.subr.bf16.mxu0 0
        %960 = vmatpush1.bf16.msra.mxu0 0
        %961 = vmatprep.subr.bf16.mxu0 0
        %962 = vmatpush1.bf16.msra.mxu0 0
        %963 = vmatprep.subr.bf16.mxu0 0
        %964 = vmatpush1.bf16.msra.mxu0 0
        %965 = vmatprep.subr.bf16.mxu0 0
        %966 = vmatpush1.bf16.msra.mxu0 0
        %967 = vmatprep.mubr.bf16.mxu0 0
        %968 = vmatmul.mubr.bf16.gmra.mrb[0].mxu0 %v870
        %v969 = vpop.f32.mrb[0].mxu0
        %v970 = vadd.f32 0.0, %v969
        %v971 = vpop.f32.mrb[0].mxu0
        %v972 = vpop.f32.mrb[0].mxu0
        %v973 = vpop.f32.mrb[0].mxu0
        %974 = vdwg.mxu0
        %v991 = vunpack.c.l.b16 %v753
        %v992 = vunpack.c.l.b16 %v754
        %v993 = vunpack.c.l.b16 %v755
        %v994 = vunpack.c.l.b16 %v756
        %v995 = vunpack.c.l.b16 %v757
        %v996 = vunpack.c.l.b16 %v758
        %v997 = vunpack.c.l.b16 %v759
        %v998 = vunpack.c.l.b16 %v760
        %v999 = vunpack.c.l.b16 %v761
        %v1000 = vunpack.c.l.b16 %v762
        %v1001 = vunpack.c.l.b16 %v763
        %v1002 = vunpack.c.l.b16 %v764
        %v1003 = vunpack.c.l.b16 %v765
        %v1004 = vunpack.c.l.b16 %v766
        %v1005 = vunpack.c.l.b16 %v767
        %v1006 = vunpack.c.l.b16 %v768
        %v1007 = vpack.c.b16 %v992, %v991
        %v1008 = vpack.c.b16 %v994, %v993
        %v1009 = vpack.c.b16 %v996, %v995
        %v1010 = vpack.c.b16 %v998, %v997
        %v1011 = vpack.c.b16 %v1000, %v999
        %v1012 = vpack.c.b16 %v1002, %v1001
        %v1013 = vpack.c.b16 %v1004, %v1003
        %v1014 = vpack.c.b16 %v1006, %v1005
        %1023 = vmatprep.subr.bf16.mxu0 0
        %1024 = vmatpush1.bf16.msra.mxu0 %v1007
        %1025 = vmatprep.subr.bf16.mxu0 0
        %1026 = vmatpush1.bf16.msra.mxu0 %v1008
        %1027 = vmatprep.subr.bf16.mxu0 0
        %1028 = vmatpush1.bf16.msra.mxu0 %v1009
        %1029 = vmatprep.subr.bf16.mxu0 0
        %1030 = vmatpush1.bf16.msra.mxu0 %v1010
        %1031 = vmatprep.subr.bf16.mxu0 0
        %1032 = vmatpush1.bf16.msra.mxu0 %v1011
        %1033 = vmatprep.subr.bf16.mxu0 0
        %1034 = vmatpush1.bf16.msra.mxu0 %v1012
        %1035 = vmatprep.subr.bf16.mxu0 0
        %1036 = vmatpush1.bf16.msra.mxu0 %v1013
        %1037 = vmatprep.subr.bf16.mxu0 0
        %1038 = vmatpush1.bf16.msra.mxu0 %v1014
        %1039 = vmatprep.subr.bf16.mxu0 0
        %1040 = vmatpush1.bf16.msra.mxu0 0
        %1041 = vmatprep.subr.bf16.mxu0 0
        %1042 = vmatpush1.bf16.msra.mxu0 0
        %1043 = vmatprep.subr.bf16.mxu0 0
        %1044 = vmatpush1.bf16.msra.mxu0 0
        %1045 = vmatprep.subr.bf16.mxu0 0
        %1046 = vmatpush1.bf16.msra.mxu0 0
        %1047 = vmatprep.subr.bf16.mxu0 0
        %1048 = vmatpush1.bf16.msra.mxu0 0
        %1049 = vmatprep.subr.bf16.mxu0 0
        %1050 = vmatpush1.bf16.msra.mxu0 0
        %1051 = vmatprep.subr.bf16.mxu0 0
        %1052 = vmatpush1.bf16.msra.mxu0 0
        %1053 = vmatprep.subr.bf16.mxu0 0
        %1054 = vmatpush1.bf16.msra.mxu0 0
        %1055 = vmatprep.mubr.bf16.mxu0 0
        %1056 = vmatmul.mubr.bf16.gmra.mrb[0].mxu0 %v752
        %v1057 = vpop.f32.mrb[0].mxu0
        %v1058 = vadd.f32 %v970, %v1057
        %v1059 = vpop.f32.mrb[0].mxu0
        %v1060 = vpop.f32.mrb[0].mxu0
        %v1061 = vpop.f32.mrb[0].mxu0
        %1062 = vdwg.mxu0
        %1063 = vset.pattern.permute.xlu0 4
        %1064 = vperm.xlu0 %1063, %v609
        %v1065 = vpop.permute.xlu0 %1064
        %v1067 = vsub.f32 %v653, %v1065
        %v1068 = vand.u32 2147483647, %v1067
        %v1069 = vsub.f32 1.0, %v1068
        %v1070 = vmax.f32 %v1069, 0.0
        %1071 = vset.pattern.permute.xlu0 20
        %1072 = vperm.xlu0 %1071, %v621
        %v1073 = vpop.permute.xlu0 %1072
        %v1075 = vsub.f32 %v666, %v1073
        %v1076 = vand.u32 2147483647, %v1075
        %v1077 = vsub.f32 1.0, %v1076
        %v1078 = vmax.f32 %v1077, 0.0
        %v1079 = vmul.f32 %v1070, %v1078
        %1081 = vset.pattern.permute.xlu0 8
        %1082 = vperm.xlu0 %1081, %v561
        %v1083 = vpop.permute.xlu0 %1082
        %v1085 = vmul.f32 %v1083, %v1079
        %1086 = vset.pattern.permute.xlu0 5
        %1087 = vperm.xlu0 %1086, %v609
        %v1088 = vpop.permute.xlu0 %1087
        %v1090 = vsub.f32 %v653, %v1088
        %v1091 = vand.u32 2147483647, %v1090
        %v1092 = vsub.f32 1.0, %v1091
        %v1093 = vmax.f32 %v1092, 0.0
        %1094 = vset.pattern.permute.xlu0 21
        %1095 = vperm.xlu0 %1094, %v621
        %v1096 = vpop.permute.xlu0 %1095
        %v1098 = vsub.f32 %v666, %v1096
        %v1099 = vand.u32 2147483647, %v1098
        %v1100 = vsub.f32 1.0, %v1099
        %v1101 = vmax.f32 %v1100, 0.0
        %v1102 = vmul.f32 %v1093, %v1101
        %1103 = vset.pattern.permute.xlu0 9
        %1104 = vperm.xlu0 %1103, %v561
        %v1105 = vpop.permute.xlu0 %1104
        %v1107 = vmul.f32 %v1105, %v1102
        %v1108 = vadd.f32 %v1085, %v1107
        %1109 = vset.pattern.permute.xlu0 6
        %1110 = vperm.xlu0 %1109, %v609
        %v1111 = vpop.permute.xlu0 %1110
        %v1113 = vsub.f32 %v653, %v1111
        %v1114 = vand.u32 2147483647, %v1113
        %v1115 = vsub.f32 1.0, %v1114
        %v1116 = vmax.f32 %v1115, 0.0
        %1117 = vset.pattern.permute.xlu0 22
        %1118 = vperm.xlu0 %1117, %v621
        %v1119 = vpop.permute.xlu0 %1118
        %v1121 = vsub.f32 %v666, %v1119
        %v1122 = vand.u32 2147483647, %v1121
        %v1123 = vsub.f32 1.0, %v1122
        %v1124 = vmax.f32 %v1123, 0.0
        %v1125 = vmul.f32 %v1116, %v1124
        %1126 = vset.pattern.permute.xlu0 10
        %1127 = vperm.xlu0 %1126, %v561
        %v1128 = vpop.permute.xlu0 %1127
        %v1130 = vmul.f32 %v1128, %v1125
        %v1131 = vadd.f32 %v1108, %v1130
        %1132 = vset.pattern.permute.xlu0 7
        %1133 = vperm.xlu0 %1132, %v609
        %v1134 = vpop.permute.xlu0 %1133
        %v1136 = vsub.f32 %v653, %v1134
        %v1137 = vand.u32 2147483647, %v1136
        %v1138 = vsub.f32 1.0, %v1137
        %v1139 = vmax.f32 %v1138, 0.0
        %1140 = vset.pattern.permute.xlu0 23
        %1141 = vperm.xlu0 %1140, %v621
        %v1142 = vpop.permute.xlu0 %1141
        %v1144 = vsub.f32 %v666, %v1142
        %v1145 = vand.u32 2147483647, %v1144
        %v1146 = vsub.f32 1.0, %v1145
        %v1147 = vmax.f32 %v1146, 0.0
        %v1148 = vmul.f32 %v1139, %v1147
        %1149 = vset.pattern.permute.xlu0 11
        %1150 = vperm.xlu0 %1149, %v561
        %v1151 = vpop.permute.xlu0 %1150
        %v1153 = vmul.f32 %v1151, %v1148
        %v1154 = vadd.f32 %v1131, %v1153
        %v1155 = vpack.c.bf16 %v1154, %v1154
        %s1156 = scalar_lea.vmem %s400, 128
        %v1157 = vld [vmem:[%s1156] sm:$0xf]
        %v1158 = vld [vmem:[%s1156 + $0x4] sm:$0xf]
        %v1159 = vld [vmem:[%s1156 + $0x8] sm:$0xf]
        %v1160 = vld [vmem:[%s1156 + $0xc] sm:$0xf]
        %v1161 = vld [vmem:[%s1156 + $0x10] sm:$0xf]
        %v1162 = vld [vmem:[%s1156 + $0x14] sm:$0xf]
        %v1163 = vld [vmem:[%s1156 + $0x18] sm:$0xf]
        %v1164 = vld [vmem:[%s1156 + $0x1c] sm:$0xf]
        %v1165 = vld [vmem:[%s1156 + $0x20] sm:$0xf]
        %v1166 = vld [vmem:[%s1156 + $0x24] sm:$0xf]
        %v1167 = vld [vmem:[%s1156 + $0x28] sm:$0xf]
        %v1168 = vld [vmem:[%s1156 + $0x2c] sm:$0xf]
        %v1169 = vld [vmem:[%s1156 + $0x30] sm:$0xf]
        %v1170 = vld [vmem:[%s1156 + $0x34] sm:$0xf]
        %v1171 = vld [vmem:[%s1156 + $0x38] sm:$0xf]
        %v1172 = vld [vmem:[%s1156 + $0x3c] sm:$0xf]
        %v1189 = vunpack.c.l.b16 %v1157
        %v1190 = vunpack.c.l.b16 %v1158
        %v1191 = vunpack.c.l.b16 %v1159
        %v1192 = vunpack.c.l.b16 %v1160
        %v1193 = vunpack.c.l.b16 %v1161
        %v1194 = vunpack.c.l.b16 %v1162
        %v1195 = vunpack.c.l.b16 %v1163
        %v1196 = vunpack.c.l.b16 %v1164
        %v1197 = vunpack.c.l.b16 %v1165
        %v1198 = vunpack.c.l.b16 %v1166
        %v1199 = vunpack.c.l.b16 %v1167
        %v1200 = vunpack.c.l.b16 %v1168
        %v1201 = vunpack.c.l.b16 %v1169
        %v1202 = vunpack.c.l.b16 %v1170
        %v1203 = vunpack.c.l.b16 %v1171
        %v1204 = vunpack.c.l.b16 %v1172
        %v1205 = vpack.c.b16 %v1190, %v1189
        %v1206 = vpack.c.b16 %v1192, %v1191
        %v1207 = vpack.c.b16 %v1194, %v1193
        %v1208 = vpack.c.b16 %v1196, %v1195
        %v1209 = vpack.c.b16 %v1198, %v1197
        %v1210 = vpack.c.b16 %v1200, %v1199
        %v1211 = vpack.c.b16 %v1202, %v1201
        %v1212 = vpack.c.b16 %v1204, %v1203
        %1221 = vmatprep.subr.bf16.mxu0 0
        %1222 = vmatpush1.bf16.msra.mxu0 %v1205
        %1223 = vmatprep.subr.bf16.mxu0 0
        %1224 = vmatpush1.bf16.msra.mxu0 %v1206
        %1225 = vmatprep.subr.bf16.mxu0 0
        %1226 = vmatpush1.bf16.msra.mxu0 %v1207
        %1227 = vmatprep.subr.bf16.mxu0 0
        %1228 = vmatpush1.bf16.msra.mxu0 %v1208
        %1229 = vmatprep.subr.bf16.mxu0 0
        %1230 = vmatpush1.bf16.msra.mxu0 %v1209
        %1231 = vmatprep.subr.bf16.mxu0 0
        %1232 = vmatpush1.bf16.msra.mxu0 %v1210
        %1233 = vmatprep.subr.bf16.mxu0 0
        %1234 = vmatpush1.bf16.msra.mxu0 %v1211
        %1235 = vmatprep.subr.bf16.mxu0 0
        %1236 = vmatpush1.bf16.msra.mxu0 %v1212
        %1237 = vmatprep.subr.bf16.mxu0 0
        %1238 = vmatpush1.bf16.msra.mxu0 0
        %1239 = vmatprep.subr.bf16.mxu0 0
        %1240 = vmatpush1.bf16.msra.mxu0 0
        %1241 = vmatprep.subr.bf16.mxu0 0
        %1242 = vmatpush1.bf16.msra.mxu0 0
        %1243 = vmatprep.subr.bf16.mxu0 0
        %1244 = vmatpush1.bf16.msra.mxu0 0
        %1245 = vmatprep.subr.bf16.mxu0 0
        %1246 = vmatpush1.bf16.msra.mxu0 0
        %1247 = vmatprep.subr.bf16.mxu0 0
        %1248 = vmatpush1.bf16.msra.mxu0 0
        %1249 = vmatprep.subr.bf16.mxu0 0
        %1250 = vmatpush1.bf16.msra.mxu0 0
        %1251 = vmatprep.subr.bf16.mxu0 0
        %1252 = vmatpush1.bf16.msra.mxu0 0
        %1253 = vmatprep.mubr.bf16.mxu0 0
        %1254 = vmatmul.mubr.bf16.gmra.mrb[0].mxu0 %v1155
        %v1255 = vpop.f32.mrb[0].mxu0
        %v1256 = vadd.f32 0.0, %v1255
        %v1257 = vpop.f32.mrb[0].mxu0
        %v1258 = vpop.f32.mrb[0].mxu0
        %v1259 = vpop.f32.mrb[0].mxu0
        %1260 = vdwg.mxu0
        %v1261 = vadd.f32 %v1058, %v1256
        %1262 = vset.pattern.permute.xlu0 36
        %1263 = vperm.xlu0 %1262, %v633
        %v1264 = vpop.permute.xlu0 %1263
        %v1266 = vsub.f32 %v772, %v1264
        %v1267 = vand.u32 2147483647, %v1266
        %v1268 = vsub.f32 1.0, %v1267
        %v1269 = vmax.f32 %v1268, 0.0
        %1270 = vset.pattern.permute.xlu0 52
        %1271 = vperm.xlu0 %1270, %v645
        %v1272 = vpop.permute.xlu0 %1271
        %v1274 = vsub.f32 %v785, %v1272
        %v1275 = vand.u32 2147483647, %v1274
        %v1276 = vsub.f32 1.0, %v1275
        %v1277 = vmax.f32 %v1276, 0.0
        %v1278 = vmul.f32 %v1269, %v1277
        %1279 = vset.pattern.permute.xlu0 12
        %1280 = vperm.xlu0 %1279, %v561
        %v1281 = vpop.permute.xlu0 %1280
        %v1283 = vmul.f32 %v1281, %v1278
        %1284 = vset.pattern.permute.xlu0 37
        %1285 = vperm.xlu0 %1284, %v633
        %v1286 = vpop.permute.xlu0 %1285
        %v1288 = vsub.f32 %v772, %v1286
        %v1289 = vand.u32 2147483647, %v1288
        %v1290 = vsub.f32 1.0, %v1289
        %v1291 = vmax.f32 %v1290, 0.0
        %1292 = vset.pattern.permute.xlu0 53
        %1293 = vperm.xlu0 %1292, %v645
        %v1294 = vpop.permute.xlu0 %1293
        %v1296 = vsub.f32 %v785, %v1294
        %v1297 = vand.u32 2147483647, %v1296
        %v1298 = vsub.f32 1.0, %v1297
        %v1299 = vmax.f32 %v1298, 0.0
        %v1300 = vmul.f32 %v1291, %v1299
        %1301 = vset.pattern.permute.xlu0 13
        %1302 = vperm.xlu0 %1301, %v561
        %v1303 = vpop.permute.xlu0 %1302
        %v1305 = vmul.f32 %v1303, %v1300
        %v1306 = vadd.f32 %v1283, %v1305
        %1307 = vset.pattern.permute.xlu0 38
        %1308 = vperm.xlu0 %1307, %v633
        %v1309 = vpop.permute.xlu0 %1308
        %v1311 = vsub.f32 %v772, %v1309
        %v1312 = vand.u32 2147483647, %v1311
        %v1313 = vsub.f32 1.0, %v1312
        %v1314 = vmax.f32 %v1313, 0.0
        %1315 = vset.pattern.permute.xlu0 54
        %1316 = vperm.xlu0 %1315, %v645
        %v1317 = vpop.permute.xlu0 %1316
        %v1319 = vsub.f32 %v785, %v1317
        %v1320 = vand.u32 2147483647, %v1319
        %v1321 = vsub.f32 1.0, %v1320
        %v1322 = vmax.f32 %v1321, 0.0
        %v1323 = vmul.f32 %v1314, %v1322
        %1324 = vset.pattern.permute.xlu0 14
        %1325 = vperm.xlu0 %1324, %v561
        %v1326 = vpop.permute.xlu0 %1325
        %v1328 = vmul.f32 %v1326, %v1323
        %v1329 = vadd.f32 %v1306, %v1328
        %1330 = vset.pattern.permute.xlu0 39
        %1331 = vperm.xlu0 %1330, %v633
        %v1332 = vpop.permute.xlu0 %1331
        %v1334 = vsub.f32 %v772, %v1332
        %v1335 = vand.u32 2147483647, %v1334
        %v1336 = vsub.f32 1.0, %v1335
        %v1337 = vmax.f32 %v1336, 0.0
        %1338 = vset.pattern.permute.xlu0 55
        %1339 = vperm.xlu0 %1338, %v645
        %v1340 = vpop.permute.xlu0 %1339
        %v1342 = vsub.f32 %v785, %v1340
        %v1343 = vand.u32 2147483647, %v1342
        %v1344 = vsub.f32 1.0, %v1343
        %v1345 = vmax.f32 %v1344, 0.0
        %v1346 = vmul.f32 %v1337, %v1345
        %1347 = vset.pattern.permute.xlu0 15
        %1348 = vperm.xlu0 %1347, %v561
        %v1349 = vpop.permute.xlu0 %1348
        %v1351 = vmul.f32 %v1349, %v1346
        %v1352 = vadd.f32 %v1329, %v1351
        %v1353 = vpack.c.bf16 %v1352, %v1352
        %v1354 = vld [vmem:[%s1156 + $0x40] sm:$0xf]
        %v1355 = vld [vmem:[%s1156 + $0x44] sm:$0xf]
        %v1356 = vld [vmem:[%s1156 + $0x48] sm:$0xf]
        %v1357 = vld [vmem:[%s1156 + $0x4c] sm:$0xf]
        %v1358 = vld [vmem:[%s1156 + $0x50] sm:$0xf]
        %v1359 = vld [vmem:[%s1156 + $0x54] sm:$0xf]
        %v1360 = vld [vmem:[%s1156 + $0x58] sm:$0xf]
        %v1361 = vld [vmem:[%s1156 + $0x5c] sm:$0xf]
        %v1362 = vld [vmem:[%s1156 + $0x60] sm:$0xf]
        %v1363 = vld [vmem:[%s1156 + $0x64] sm:$0xf]
        %v1364 = vld [vmem:[%s1156 + $0x68] sm:$0xf]
        %v1365 = vld [vmem:[%s1156 + $0x6c] sm:$0xf]
        %v1366 = vld [vmem:[%s1156 + $0x70] sm:$0xf]
        %v1367 = vld [vmem:[%s1156 + $0x74] sm:$0xf]
        %v1368 = vld [vmem:[%s1156 + $0x78] sm:$0xf]
        %v1369 = vld [vmem:[%s1156 + $0x7c] sm:$0xf]
        %v1386 = vunpack.c.l.b16 %v1354
        %v1387 = vunpack.c.l.b16 %v1355
        %v1388 = vunpack.c.l.b16 %v1356
        %v1389 = vunpack.c.l.b16 %v1357
        %v1390 = vunpack.c.l.b16 %v1358
        %v1391 = vunpack.c.l.b16 %v1359
        %v1392 = vunpack.c.l.b16 %v1360
        %v1393 = vunpack.c.l.b16 %v1361
        %v1394 = vunpack.c.l.b16 %v1362
        %v1395 = vunpack.c.l.b16 %v1363
        %v1396 = vunpack.c.l.b16 %v1364
        %v1397 = vunpack.c.l.b16 %v1365
        %v1398 = vunpack.c.l.b16 %v1366
        %v1399 = vunpack.c.l.b16 %v1367
        %v1400 = vunpack.c.l.b16 %v1368
        %v1401 = vunpack.c.l.b16 %v1369
        %v1402 = vpack.c.b16 %v1387, %v1386
        %v1403 = vpack.c.b16 %v1389, %v1388
        %v1404 = vpack.c.b16 %v1391, %v1390
        %v1405 = vpack.c.b16 %v1393, %v1392
        %v1406 = vpack.c.b16 %v1395, %v1394
        %v1407 = vpack.c.b16 %v1397, %v1396
        %v1408 = vpack.c.b16 %v1399, %v1398
        %v1409 = vpack.c.b16 %v1401, %v1400
        %1418 = vmatprep.subr.bf16.mxu0 0
        %1419 = vmatpush1.bf16.msra.mxu0 %v1402
        %1420 = vmatprep.subr.bf16.mxu0 0
        %1421 = vmatpush1.bf16.msra.mxu0 %v1403
        %1422 = vmatprep.subr.bf16.mxu0 0
        %1423 = vmatpush1.bf16.msra.mxu0 %v1404
        %1424 = vmatprep.subr.bf16.mxu0 0
        %1425 = vmatpush1.bf16.msra.mxu0 %v1405
        %1426 = vmatprep.subr.bf16.mxu0 0
        %1427 = vmatpush1.bf16.msra.mxu0 %v1406
        %1428 = vmatprep.subr.bf16.mxu0 0
        %1429 = vmatpush1.bf16.msra.mxu0 %v1407
        %1430 = vmatprep.subr.bf16.mxu0 0
        %1431 = vmatpush1.bf16.msra.mxu0 %v1408
        %1432 = vmatprep.subr.bf16.mxu0 0
        %1433 = vmatpush1.bf16.msra.mxu0 %v1409
        %1434 = vmatprep.subr.bf16.mxu0 0
        %1435 = vmatpush1.bf16.msra.mxu0 0
        %1436 = vmatprep.subr.bf16.mxu0 0
        %1437 = vmatpush1.bf16.msra.mxu0 0
        %1438 = vmatprep.subr.bf16.mxu0 0
        %1439 = vmatpush1.bf16.msra.mxu0 0
        %1440 = vmatprep.subr.bf16.mxu0 0
        %1441 = vmatpush1.bf16.msra.mxu0 0
        %1442 = vmatprep.subr.bf16.mxu0 0
        %1443 = vmatpush1.bf16.msra.mxu0 0
        %1444 = vmatprep.subr.bf16.mxu0 0
        %1445 = vmatpush1.bf16.msra.mxu0 0
        %1446 = vmatprep.subr.bf16.mxu0 0
        %1447 = vmatpush1.bf16.msra.mxu0 0
        %1448 = vmatprep.subr.bf16.mxu0 0
        %1449 = vmatpush1.bf16.msra.mxu0 0
        %1450 = vmatprep.mubr.bf16.mxu0 0
        %1451 = vmatmul.mubr.bf16.gmra.mrb[0].mxu0 %v1353
        %v1452 = vpop.f32.mrb[0].mxu0
        %v1453 = vadd.f32 0.0, %v1452
        %v1454 = vpop.f32.mrb[0].mxu0
        %v1455 = vpop.f32.mrb[0].mxu0
        %v1456 = vpop.f32.mrb[0].mxu0
        %1457 = vdwg.mxu0
        %v1458 = vadd.f32 %v1261, %v1453
        %1459 = vset.pattern.permute.xlu0 8
        %1460 = vperm.xlu0 %1459, %v609
        %v1461 = vpop.permute.xlu0 %1460
        %v1463 = vsub.f32 %v653, %v1461
        %v1464 = vand.u32 2147483647, %v1463
        %v1465 = vsub.f32 1.0, %v1464
        %v1466 = vmax.f32 %v1465, 0.0
        %1467 = vset.pattern.permute.xlu0 24
        %1468 = vperm.xlu0 %1467, %v621
        %v1469 = vpop.permute.xlu0 %1468
        %v1471 = vsub.f32 %v666, %v1469
        %v1472 = vand.u32 2147483647, %v1471
        %v1473 = vsub.f32 1.0, %v1472
        %v1474 = vmax.f32 %v1473, 0.0
        %v1475 = vmul.f32 %v1466, %v1474
        %1477 = vset.pattern.permute.xlu0 16
        %1478 = vperm.xlu0 %1477, %v577
        %v1479 = vpop.permute.xlu0 %1478
        %v1481 = vmul.f32 %v1479, %v1475
        %1482 = vset.pattern.permute.xlu0 9
        %1483 = vperm.xlu0 %1482, %v609
        %v1484 = vpop.permute.xlu0 %1483
        %v1486 = vsub.f32 %v653, %v1484
        %v1487 = vand.u32 2147483647, %v1486
        %v1488 = vsub.f32 1.0, %v1487
        %v1489 = vmax.f32 %v1488, 0.0
        %1490 = vset.pattern.permute.xlu0 25
        %1491 = vperm.xlu0 %1490, %v621
        %v1492 = vpop.permute.xlu0 %1491
        %v1494 = vsub.f32 %v666, %v1492
        %v1495 = vand.u32 2147483647, %v1494
        %v1496 = vsub.f32 1.0, %v1495
        %v1497 = vmax.f32 %v1496, 0.0
        %v1498 = vmul.f32 %v1489, %v1497
        %1499 = vset.pattern.permute.xlu0 17
        %1500 = vperm.xlu0 %1499, %v577
        %v1501 = vpop.permute.xlu0 %1500
        %v1503 = vmul.f32 %v1501, %v1498
        %v1504 = vadd.f32 %v1481, %v1503
        %1505 = vset.pattern.permute.xlu0 10
        %1506 = vperm.xlu0 %1505, %v609
        %v1507 = vpop.permute.xlu0 %1506
        %v1509 = vsub.f32 %v653, %v1507
        %v1510 = vand.u32 2147483647, %v1509
        %v1511 = vsub.f32 1.0, %v1510
        %v1512 = vmax.f32 %v1511, 0.0
        %1513 = vset.pattern.permute.xlu0 26
        %1514 = vperm.xlu0 %1513, %v621
        %v1515 = vpop.permute.xlu0 %1514
        %v1517 = vsub.f32 %v666, %v1515
        %v1518 = vand.u32 2147483647, %v1517
        %v1519 = vsub.f32 1.0, %v1518
        %v1520 = vmax.f32 %v1519, 0.0
        %v1521 = vmul.f32 %v1512, %v1520
        %1522 = vset.pattern.permute.xlu0 18
        %1523 = vperm.xlu0 %1522, %v577
        %v1524 = vpop.permute.xlu0 %1523
        %v1526 = vmul.f32 %v1524, %v1521
        %v1527 = vadd.f32 %v1504, %v1526
        %1528 = vset.pattern.permute.xlu0 11
        %1529 = vperm.xlu0 %1528, %v609
        %v1530 = vpop.permute.xlu0 %1529
        %v1532 = vsub.f32 %v653, %v1530
        %v1533 = vand.u32 2147483647, %v1532
        %v1534 = vsub.f32 1.0, %v1533
        %v1535 = vmax.f32 %v1534, 0.0
        %1536 = vset.pattern.permute.xlu0 27
        %1537 = vperm.xlu0 %1536, %v621
        %v1538 = vpop.permute.xlu0 %1537
        %v1540 = vsub.f32 %v666, %v1538
        %v1541 = vand.u32 2147483647, %v1540
        %v1542 = vsub.f32 1.0, %v1541
        %v1543 = vmax.f32 %v1542, 0.0
        %v1544 = vmul.f32 %v1535, %v1543
        %1545 = vset.pattern.permute.xlu0 19
        %1546 = vperm.xlu0 %1545, %v577
        %v1547 = vpop.permute.xlu0 %1546
        %v1549 = vmul.f32 %v1547, %v1544
        %v1550 = vadd.f32 %v1527, %v1549
        %v1551 = vpack.c.bf16 %v1550, %v1550
        %s1552 = scalar_lea.vmem %s400, 256
        %v1553 = vld [vmem:[%s1552] sm:$0xf]
        %v1554 = vld [vmem:[%s1552 + $0x4] sm:$0xf]
        %v1555 = vld [vmem:[%s1552 + $0x8] sm:$0xf]
        %v1556 = vld [vmem:[%s1552 + $0xc] sm:$0xf]
        %v1557 = vld [vmem:[%s1552 + $0x10] sm:$0xf]
        %v1558 = vld [vmem:[%s1552 + $0x14] sm:$0xf]
        %v1559 = vld [vmem:[%s1552 + $0x18] sm:$0xf]
        %v1560 = vld [vmem:[%s1552 + $0x1c] sm:$0xf]
        %v1561 = vld [vmem:[%s1552 + $0x20] sm:$0xf]
        %v1562 = vld [vmem:[%s1552 + $0x24] sm:$0xf]
        %v1563 = vld [vmem:[%s1552 + $0x28] sm:$0xf]
        %v1564 = vld [vmem:[%s1552 + $0x2c] sm:$0xf]
        %v1565 = vld [vmem:[%s1552 + $0x30] sm:$0xf]
        %v1566 = vld [vmem:[%s1552 + $0x34] sm:$0xf]
        %v1567 = vld [vmem:[%s1552 + $0x38] sm:$0xf]
        %v1568 = vld [vmem:[%s1552 + $0x3c] sm:$0xf]
        %v1585 = vunpack.c.l.b16 %v1553
        %v1586 = vunpack.c.l.b16 %v1554
        %v1587 = vunpack.c.l.b16 %v1555
        %v1588 = vunpack.c.l.b16 %v1556
        %v1589 = vunpack.c.l.b16 %v1557
        %v1590 = vunpack.c.l.b16 %v1558
        %v1591 = vunpack.c.l.b16 %v1559
        %v1592 = vunpack.c.l.b16 %v1560
        %v1593 = vunpack.c.l.b16 %v1561
        %v1594 = vunpack.c.l.b16 %v1562
        %v1595 = vunpack.c.l.b16 %v1563
        %v1596 = vunpack.c.l.b16 %v1564
        %v1597 = vunpack.c.l.b16 %v1565
        %v1598 = vunpack.c.l.b16 %v1566
        %v1599 = vunpack.c.l.b16 %v1567
        %v1600 = vunpack.c.l.b16 %v1568
        %v1601 = vpack.c.b16 %v1586, %v1585
        %v1602 = vpack.c.b16 %v1588, %v1587
        %v1603 = vpack.c.b16 %v1590, %v1589
        %v1604 = vpack.c.b16 %v1592, %v1591
        %v1605 = vpack.c.b16 %v1594, %v1593
        %v1606 = vpack.c.b16 %v1596, %v1595
        %v1607 = vpack.c.b16 %v1598, %v1597
        %v1608 = vpack.c.b16 %v1600, %v1599
        %1617 = vmatprep.subr.bf16.mxu0 0
        %1618 = vmatpush1.bf16.msra.mxu0 %v1601
        %1619 = vmatprep.subr.bf16.mxu0 0
        %1620 = vmatpush1.bf16.msra.mxu0 %v1602
        %1621 = vmatprep.subr.bf16.mxu0 0
        %1622 = vmatpush1.bf16.msra.mxu0 %v1603
        %1623 = vmatprep.subr.bf16.mxu0 0
        %1624 = vmatpush1.bf16.msra.mxu0 %v1604
        %1625 = vmatprep.subr.bf16.mxu0 0
        %1626 = vmatpush1.bf16.msra.mxu0 %v1605
        %1627 = vmatprep.subr.bf16.mxu0 0
        %1628 = vmatpush1.bf16.msra.mxu0 %v1606
        %1629 = vmatprep.subr.bf16.mxu0 0
        %1630 = vmatpush1.bf16.msra.mxu0 %v1607
        %1631 = vmatprep.subr.bf16.mxu0 0
        %1632 = vmatpush1.bf16.msra.mxu0 %v1608
        %1633 = vmatprep.subr.bf16.mxu0 0
        %1634 = vmatpush1.bf16.msra.mxu0 0
        %1635 = vmatprep.subr.bf16.mxu0 0
        %1636 = vmatpush1.bf16.msra.mxu0 0
        %1637 = vmatprep.subr.bf16.mxu0 0
        %1638 = vmatpush1.bf16.msra.mxu0 0
        %1639 = vmatprep.subr.bf16.mxu0 0
        %1640 = vmatpush1.bf16.msra.mxu0 0
        %1641 = vmatprep.subr.bf16.mxu0 0
        %1642 = vmatpush1.bf16.msra.mxu0 0
        %1643 = vmatprep.subr.bf16.mxu0 0
        %1644 = vmatpush1.bf16.msra.mxu0 0
        %1645 = vmatprep.subr.bf16.mxu0 0
        %1646 = vmatpush1.bf16.msra.mxu0 0
        %1647 = vmatprep.subr.bf16.mxu0 0
        %1648 = vmatpush1.bf16.msra.mxu0 0
        %1649 = vmatprep.mubr.bf16.mxu0 0
        %1650 = vmatmul.mubr.bf16.gmra.mrb[0].mxu0 %v1551
        %v1651 = vpop.f32.mrb[0].mxu0
        %v1652 = vadd.f32 0.0, %v1651
        %v1653 = vpop.f32.mrb[0].mxu0
        %v1654 = vpop.f32.mrb[0].mxu0
        %v1655 = vpop.f32.mrb[0].mxu0
        %1656 = vdwg.mxu0
        %v1657 = vadd.f32 %v1458, %v1652
        %1658 = vset.pattern.permute.xlu0 40
        %1659 = vperm.xlu0 %1658, %v633
        %v1660 = vpop.permute.xlu0 %1659
        %v1662 = vsub.f32 %v772, %v1660
        %v1663 = vand.u32 2147483647, %v1662
        %v1664 = vsub.f32 1.0, %v1663
        %v1665 = vmax.f32 %v1664, 0.0
        %1666 = vset.pattern.permute.xlu0 56
        %1667 = vperm.xlu0 %1666, %v645
        %v1668 = vpop.permute.xlu0 %1667
        %v1670 = vsub.f32 %v785, %v1668
        %v1671 = vand.u32 2147483647, %v1670
        %v1672 = vsub.f32 1.0, %v1671
        %v1673 = vmax.f32 %v1672, 0.0
        %v1674 = vmul.f32 %v1665, %v1673
        %1675 = vset.pattern.permute.xlu0 20
        %1676 = vperm.xlu0 %1675, %v577
        %v1677 = vpop.permute.xlu0 %1676
        %v1679 = vmul.f32 %v1677, %v1674
        %1680 = vset.pattern.permute.xlu0 41
        %1681 = vperm.xlu0 %1680, %v633
        %v1682 = vpop.permute.xlu0 %1681
        %v1684 = vsub.f32 %v772, %v1682
        %v1685 = vand.u32 2147483647, %v1684
        %v1686 = vsub.f32 1.0, %v1685
        %v1687 = vmax.f32 %v1686, 0.0
        %1688 = vset.pattern.permute.xlu0 57
        %1689 = vperm.xlu0 %1688, %v645
        %v1690 = vpop.permute.xlu0 %1689
        %v1692 = vsub.f32 %v785, %v1690
        %v1693 = vand.u32 2147483647, %v1692
        %v1694 = vsub.f32 1.0, %v1693
        %v1695 = vmax.f32 %v1694, 0.0
        %v1696 = vmul.f32 %v1687, %v1695
        %1697 = vset.pattern.permute.xlu0 21
        %1698 = vperm.xlu0 %1697, %v577
        %v1699 = vpop.permute.xlu0 %1698
        %v1701 = vmul.f32 %v1699, %v1696
        %v1702 = vadd.f32 %v1679, %v1701
        %1703 = vset.pattern.permute.xlu0 42
        %1704 = vperm.xlu0 %1703, %v633
        %v1705 = vpop.permute.xlu0 %1704
        %v1707 = vsub.f32 %v772, %v1705
        %v1708 = vand.u32 2147483647, %v1707
        %v1709 = vsub.f32 1.0, %v1708
        %v1710 = vmax.f32 %v1709, 0.0
        %1711 = vset.pattern.permute.xlu0 58
        %1712 = vperm.xlu0 %1711, %v645
        %v1713 = vpop.permute.xlu0 %1712
        %v1715 = vsub.f32 %v785, %v1713
        %v1716 = vand.u32 2147483647, %v1715
        %v1717 = vsub.f32 1.0, %v1716
        %v1718 = vmax.f32 %v1717, 0.0
        %v1719 = vmul.f32 %v1710, %v1718
        %1720 = vset.pattern.permute.xlu0 22
        %1721 = vperm.xlu0 %1720, %v577
        %v1722 = vpop.permute.xlu0 %1721
        %v1724 = vmul.f32 %v1722, %v1719
        %v1725 = vadd.f32 %v1702, %v1724
        %1726 = vset.pattern.permute.xlu0 43
        %1727 = vperm.xlu0 %1726, %v633
        %v1728 = vpop.permute.xlu0 %1727
        %v1730 = vsub.f32 %v772, %v1728
        %v1731 = vand.u32 2147483647, %v1730
        %v1732 = vsub.f32 1.0, %v1731
        %v1733 = vmax.f32 %v1732, 0.0
        %1734 = vset.pattern.permute.xlu0 59
        %1735 = vperm.xlu0 %1734, %v645
        %v1736 = vpop.permute.xlu0 %1735
        %v1738 = vsub.f32 %v785, %v1736
        %v1739 = vand.u32 2147483647, %v1738
        %v1740 = vsub.f32 1.0, %v1739
        %v1741 = vmax.f32 %v1740, 0.0
        %v1742 = vmul.f32 %v1733, %v1741
        %1743 = vset.pattern.permute.xlu0 23
        %1744 = vperm.xlu0 %1743, %v577
        %v1745 = vpop.permute.xlu0 %1744
        %v1747 = vmul.f32 %v1745, %v1742
        %v1748 = vadd.f32 %v1725, %v1747
        %v1749 = vpack.c.bf16 %v1748, %v1748
        %v1750 = vld [vmem:[%s1552 + $0x40] sm:$0xf]
        %v1751 = vld [vmem:[%s1552 + $0x44] sm:$0xf]
        %v1752 = vld [vmem:[%s1552 + $0x48] sm:$0xf]
        %v1753 = vld [vmem:[%s1552 + $0x4c] sm:$0xf]
        %v1754 = vld [vmem:[%s1552 + $0x50] sm:$0xf]
        %v1755 = vld [vmem:[%s1552 + $0x54] sm:$0xf]
        %v1756 = vld [vmem:[%s1552 + $0x58] sm:$0xf]
        %v1757 = vld [vmem:[%s1552 + $0x5c] sm:$0xf]
        %v1758 = vld [vmem:[%s1552 + $0x60] sm:$0xf]
        %v1759 = vld [vmem:[%s1552 + $0x64] sm:$0xf]
        %v1760 = vld [vmem:[%s1552 + $0x68] sm:$0xf]
        %v1761 = vld [vmem:[%s1552 + $0x6c] sm:$0xf]
        %v1762 = vld [vmem:[%s1552 + $0x70] sm:$0xf]
        %v1763 = vld [vmem:[%s1552 + $0x74] sm:$0xf]
        %v1764 = vld [vmem:[%s1552 + $0x78] sm:$0xf]
        %v1765 = vld [vmem:[%s1552 + $0x7c] sm:$0xf]
        %v1782 = vunpack.c.l.b16 %v1750
        %v1783 = vunpack.c.l.b16 %v1751
        %v1784 = vunpack.c.l.b16 %v1752
        %v1785 = vunpack.c.l.b16 %v1753
        %v1786 = vunpack.c.l.b16 %v1754
        %v1787 = vunpack.c.l.b16 %v1755
        %v1788 = vunpack.c.l.b16 %v1756
        %v1789 = vunpack.c.l.b16 %v1757
        %v1790 = vunpack.c.l.b16 %v1758
        %v1791 = vunpack.c.l.b16 %v1759
        %v1792 = vunpack.c.l.b16 %v1760
        %v1793 = vunpack.c.l.b16 %v1761
        %v1794 = vunpack.c.l.b16 %v1762
        %v1795 = vunpack.c.l.b16 %v1763
        %v1796 = vunpack.c.l.b16 %v1764
        %v1797 = vunpack.c.l.b16 %v1765
        %v1798 = vpack.c.b16 %v1783, %v1782
        %v1799 = vpack.c.b16 %v1785, %v1784
        %v1800 = vpack.c.b16 %v1787, %v1786
        %v1801 = vpack.c.b16 %v1789, %v1788
        %v1802 = vpack.c.b16 %v1791, %v1790
        %v1803 = vpack.c.b16 %v1793, %v1792
        %v1804 = vpack.c.b16 %v1795, %v1794
        %v1805 = vpack.c.b16 %v1797, %v1796
        %1814 = vmatprep.subr.bf16.mxu0 0
        %1815 = vmatpush1.bf16.msra.mxu0 %v1798
        %1816 = vmatprep.subr.bf16.mxu0 0
        %1817 = vmatpush1.bf16.msra.mxu0 %v1799
        %1818 = vmatprep.subr.bf16.mxu0 0
        %1819 = vmatpush1.bf16.msra.mxu0 %v1800
        %1820 = vmatprep.subr.bf16.mxu0 0
        %1821 = vmatpush1.bf16.msra.mxu0 %v1801
        %1822 = vmatprep.subr.bf16.mxu0 0
        %1823 = vmatpush1.bf16.msra.mxu0 %v1802
        %1824 = vmatprep.subr.bf16.mxu0 0
        %1825 = vmatpush1.bf16.msra.mxu0 %v1803
        %1826 = vmatprep.subr.bf16.mxu0 0
        %1827 = vmatpush1.bf16.msra.mxu0 %v1804
        %1828 = vmatprep.subr.bf16.mxu0 0
        %1829 = vmatpush1.bf16.msra.mxu0 %v1805
        %1830 = vmatprep.subr.bf16.mxu0 0
        %1831 = vmatpush1.bf16.msra.mxu0 0
        %1832 = vmatprep.subr.bf16.mxu0 0
        %1833 = vmatpush1.bf16.msra.mxu0 0
        %1834 = vmatprep.subr.bf16.mxu0 0
        %1835 = vmatpush1.bf16.msra.mxu0 0
        %1836 = vmatprep.subr.bf16.mxu0 0
        %1837 = vmatpush1.bf16.msra.mxu0 0
        %1838 = vmatprep.subr.bf16.mxu0 0
        %1839 = vmatpush1.bf16.msra.mxu0 0
        %1840 = vmatprep.subr.bf16.mxu0 0
        %1841 = vmatpush1.bf16.msra.mxu0 0
        %1842 = vmatprep.subr.bf16.mxu0 0
        %1843 = vmatpush1.bf16.msra.mxu0 0
        %1844 = vmatprep.subr.bf16.mxu0 0
        %1845 = vmatpush1.bf16.msra.mxu0 0
        %1846 = vmatprep.mubr.bf16.mxu0 0
        %1847 = vmatmul.mubr.bf16.gmra.mrb[0].mxu0 %v1749
        %v1848 = vpop.f32.mrb[0].mxu0
        %v1849 = vadd.f32 0.0, %v1848
        %v1850 = vpop.f32.mrb[0].mxu0
        %v1851 = vpop.f32.mrb[0].mxu0
        %v1852 = vpop.f32.mrb[0].mxu0
        %1853 = vdwg.mxu0
        %v1854 = vadd.f32 %v1657, %v1849
        %1855 = vset.pattern.permute.xlu0 12
        %1856 = vperm.xlu0 %1855, %v609
        %v1857 = vpop.permute.xlu0 %1856
        %v1859 = vsub.f32 %v653, %v1857
        %v1860 = vand.u32 2147483647, %v1859
        %v1861 = vsub.f32 1.0, %v1860
        %v1862 = vmax.f32 %v1861, 0.0
        %1863 = vset.pattern.permute.xlu0 28
        %1864 = vperm.xlu0 %1863, %v621
        %v1865 = vpop.permute.xlu0 %1864
        %v1867 = vsub.f32 %v666, %v1865
        %v1868 = vand.u32 2147483647, %v1867
        %v1869 = vsub.f32 1.0, %v1868
        %v1870 = vmax.f32 %v1869, 0.0
        %v1871 = vmul.f32 %v1862, %v1870
        %1873 = vset.pattern.permute.xlu0 24
        %1874 = vperm.xlu0 %1873, %v593
        %v1875 = vpop.permute.xlu0 %1874
        %v1877 = vmul.f32 %v1875, %v1871
        %1878 = vset.pattern.permute.xlu0 13
        %1879 = vperm.xlu0 %1878, %v609
        %v1880 = vpop.permute.xlu0 %1879
        %v1882 = vsub.f32 %v653, %v1880
        %v1883 = vand.u32 2147483647, %v1882
        %v1884 = vsub.f32 1.0, %v1883
        %v1885 = vmax.f32 %v1884, 0.0
        %1886 = vset.pattern.permute.xlu0 29
        %1887 = vperm.xlu0 %1886, %v621
        %v1888 = vpop.permute.xlu0 %1887
        %v1890 = vsub.f32 %v666, %v1888
        %v1891 = vand.u32 2147483647, %v1890
        %v1892 = vsub.f32 1.0, %v1891
        %v1893 = vmax.f32 %v1892, 0.0
        %v1894 = vmul.f32 %v1885, %v1893
        %1895 = vset.pattern.permute.xlu0 25
        %1896 = vperm.xlu0 %1895, %v593
        %v1897 = vpop.permute.xlu0 %1896
        %v1899 = vmul.f32 %v1897, %v1894
        %v1900 = vadd.f32 %v1877, %v1899
        %1901 = vset.pattern.permute.xlu0 14
        %1902 = vperm.xlu0 %1901, %v609
        %v1903 = vpop.permute.xlu0 %1902
        %v1905 = vsub.f32 %v653, %v1903
        %v1906 = vand.u32 2147483647, %v1905
        %v1907 = vsub.f32 1.0, %v1906
        %v1908 = vmax.f32 %v1907, 0.0
        %1909 = vset.pattern.permute.xlu0 30
        %1910 = vperm.xlu0 %1909, %v621
        %v1911 = vpop.permute.xlu0 %1910
        %v1913 = vsub.f32 %v666, %v1911
        %v1914 = vand.u32 2147483647, %v1913
        %v1915 = vsub.f32 1.0, %v1914
        %v1916 = vmax.f32 %v1915, 0.0
        %v1917 = vmul.f32 %v1908, %v1916
        %1918 = vset.pattern.permute.xlu0 26
        %1919 = vperm.xlu0 %1918, %v593
        %v1920 = vpop.permute.xlu0 %1919
        %v1922 = vmul.f32 %v1920, %v1917
        %v1923 = vadd.f32 %v1900, %v1922
        %1924 = vset.pattern.permute.xlu0 15
        %1925 = vperm.xlu0 %1924, %v609
        %v1926 = vpop.permute.xlu0 %1925
        %v1928 = vsub.f32 %v653, %v1926
        %v1929 = vand.u32 2147483647, %v1928
        %v1930 = vsub.f32 1.0, %v1929
        %v1931 = vmax.f32 %v1930, 0.0
        %1932 = vset.pattern.permute.xlu0 31
        %1933 = vperm.xlu0 %1932, %v621
        %v1934 = vpop.permute.xlu0 %1933
        %v1936 = vsub.f32 %v666, %v1934
        %v1937 = vand.u32 2147483647, %v1936
        %v1938 = vsub.f32 1.0, %v1937
        %v1939 = vmax.f32 %v1938, 0.0
        %v1940 = vmul.f32 %v1931, %v1939
        %1941 = vset.pattern.permute.xlu0 27
        %1942 = vperm.xlu0 %1941, %v593
        %v1943 = vpop.permute.xlu0 %1942
        %v1945 = vmul.f32 %v1943, %v1940
        %v1946 = vadd.f32 %v1923, %v1945
        %v1947 = vpack.c.bf16 %v1946, %v1946
        %s1948 = scalar_lea.vmem %s400, 384
        %v1949 = vld [vmem:[%s1948] sm:$0xf]
        %v1950 = vld [vmem:[%s1948 + $0x4] sm:$0xf]
        %v1951 = vld [vmem:[%s1948 + $0x8] sm:$0xf]
        %v1952 = vld [vmem:[%s1948 + $0xc] sm:$0xf]
        %v1953 = vld [vmem:[%s1948 + $0x10] sm:$0xf]
        %v1954 = vld [vmem:[%s1948 + $0x14] sm:$0xf]
        %v1955 = vld [vmem:[%s1948 + $0x18] sm:$0xf]
        %v1956 = vld [vmem:[%s1948 + $0x1c] sm:$0xf]
        %v1957 = vld [vmem:[%s1948 + $0x20] sm:$0xf]
        %v1958 = vld [vmem:[%s1948 + $0x24] sm:$0xf]
        %v1959 = vld [vmem:[%s1948 + $0x28] sm:$0xf]
        %v1960 = vld [vmem:[%s1948 + $0x2c] sm:$0xf]
        %v1961 = vld [vmem:[%s1948 + $0x30] sm:$0xf]
        %v1962 = vld [vmem:[%s1948 + $0x34] sm:$0xf]
        %v1963 = vld [vmem:[%s1948 + $0x38] sm:$0xf]
        %v1964 = vld [vmem:[%s1948 + $0x3c] sm:$0xf]
        %v1981 = vunpack.c.l.b16 %v1949
        %v1982 = vunpack.c.l.b16 %v1950
        %v1983 = vunpack.c.l.b16 %v1951
        %v1984 = vunpack.c.l.b16 %v1952
        %v1985 = vunpack.c.l.b16 %v1953
        %v1986 = vunpack.c.l.b16 %v1954
        %v1987 = vunpack.c.l.b16 %v1955
        %v1988 = vunpack.c.l.b16 %v1956
        %v1989 = vunpack.c.l.b16 %v1957
        %v1990 = vunpack.c.l.b16 %v1958
        %v1991 = vunpack.c.l.b16 %v1959
        %v1992 = vunpack.c.l.b16 %v1960
        %v1993 = vunpack.c.l.b16 %v1961
        %v1994 = vunpack.c.l.b16 %v1962
        %v1995 = vunpack.c.l.b16 %v1963
        %v1996 = vunpack.c.l.b16 %v1964
        %v1997 = vpack.c.b16 %v1982, %v1981
        %v1998 = vpack.c.b16 %v1984, %v1983
        %v1999 = vpack.c.b16 %v1986, %v1985
        %v2000 = vpack.c.b16 %v1988, %v1987
        %v2001 = vpack.c.b16 %v1990, %v1989
        %v2002 = vpack.c.b16 %v1992, %v1991
        %v2003 = vpack.c.b16 %v1994, %v1993
        %v2004 = vpack.c.b16 %v1996, %v1995
        %2013 = vmatprep.subr.bf16.mxu0 0
        %2014 = vmatpush1.bf16.msra.mxu0 %v1997
        %2015 = vmatprep.subr.bf16.mxu0 0
        %2016 = vmatpush1.bf16.msra.mxu0 %v1998
        %2017 = vmatprep.subr.bf16.mxu0 0
        %2018 = vmatpush1.bf16.msra.mxu0 %v1999
        %2019 = vmatprep.subr.bf16.mxu0 0
        %2020 = vmatpush1.bf16.msra.mxu0 %v2000
        %2021 = vmatprep.subr.bf16.mxu0 0
        %2022 = vmatpush1.bf16.msra.mxu0 %v2001
        %2023 = vmatprep.subr.bf16.mxu0 0
        %2024 = vmatpush1.bf16.msra.mxu0 %v2002
        %2025 = vmatprep.subr.bf16.mxu0 0
        %2026 = vmatpush1.bf16.msra.mxu0 %v2003
        %2027 = vmatprep.subr.bf16.mxu0 0
        %2028 = vmatpush1.bf16.msra.mxu0 %v2004
        %2029 = vmatprep.subr.bf16.mxu0 0
        %2030 = vmatpush1.bf16.msra.mxu0 0
        %2031 = vmatprep.subr.bf16.mxu0 0
        %2032 = vmatpush1.bf16.msra.mxu0 0
        %2033 = vmatprep.subr.bf16.mxu0 0
        %2034 = vmatpush1.bf16.msra.mxu0 0
        %2035 = vmatprep.subr.bf16.mxu0 0
        %2036 = vmatpush1.bf16.msra.mxu0 0
        %2037 = vmatprep.subr.bf16.mxu0 0
        %2038 = vmatpush1.bf16.msra.mxu0 0
        %2039 = vmatprep.subr.bf16.mxu0 0
        %2040 = vmatpush1.bf16.msra.mxu0 0
        %2041 = vmatprep.subr.bf16.mxu0 0
        %2042 = vmatpush1.bf16.msra.mxu0 0
        %2043 = vmatprep.subr.bf16.mxu0 0
        %2044 = vmatpush1.bf16.msra.mxu0 0
        %2045 = vmatprep.mubr.bf16.mxu0 0
        %2046 = vmatmul.mubr.bf16.gmra.mrb[0].mxu0 %v1947
        %v2047 = vpop.f32.mrb[0].mxu0
        %v2048 = vadd.f32 0.0, %v2047
        %v2049 = vpop.f32.mrb[0].mxu0
        %v2050 = vpop.f32.mrb[0].mxu0
        %v2051 = vpop.f32.mrb[0].mxu0
        %2052 = vdwg.mxu0
        %v2053 = vadd.f32 %v1854, %v2048
        %2054 = vset.pattern.permute.xlu0 44
        %2055 = vperm.xlu0 %2054, %v633
        %v2056 = vpop.permute.xlu0 %2055
        %v2058 = vsub.f32 %v772, %v2056
        %v2059 = vand.u32 2147483647, %v2058
        %v2060 = vsub.f32 1.0, %v2059
        %v2061 = vmax.f32 %v2060, 0.0
        %2062 = vset.pattern.permute.xlu0 60
        %2063 = vperm.xlu0 %2062, %v645
        %v2064 = vpop.permute.xlu0 %2063
        %v2066 = vsub.f32 %v785, %v2064
        %v2067 = vand.u32 2147483647, %v2066
        %v2068 = vsub.f32 1.0, %v2067
        %v2069 = vmax.f32 %v2068, 0.0
        %v2070 = vmul.f32 %v2061, %v2069
        %2071 = vset.pattern.permute.xlu0 28
        %2072 = vperm.xlu0 %2071, %v593
        %v2073 = vpop.permute.xlu0 %2072
        %v2075 = vmul.f32 %v2073, %v2070
        %2076 = vset.pattern.permute.xlu0 45
        %2077 = vperm.xlu0 %2076, %v633
        %v2078 = vpop.permute.xlu0 %2077
        %v2080 = vsub.f32 %v772, %v2078
        %v2081 = vand.u32 2147483647, %v2080
        %v2082 = vsub.f32 1.0, %v2081
        %v2083 = vmax.f32 %v2082, 0.0
        %2084 = vset.pattern.permute.xlu0 61
        %2085 = vperm.xlu0 %2084, %v645
        %v2086 = vpop.permute.xlu0 %2085
        %v2088 = vsub.f32 %v785, %v2086
        %v2089 = vand.u32 2147483647, %v2088
        %v2090 = vsub.f32 1.0, %v2089
        %v2091 = vmax.f32 %v2090, 0.0
        %v2092 = vmul.f32 %v2083, %v2091
        %2093 = vset.pattern.permute.xlu0 29
        %2094 = vperm.xlu0 %2093, %v593
        %v2095 = vpop.permute.xlu0 %2094
        %v2097 = vmul.f32 %v2095, %v2092
        %v2098 = vadd.f32 %v2075, %v2097
        %2099 = vset.pattern.permute.xlu0 46
        %2100 = vperm.xlu0 %2099, %v633
        %v2101 = vpop.permute.xlu0 %2100
        %v2103 = vsub.f32 %v772, %v2101
        %v2104 = vand.u32 2147483647, %v2103
        %v2105 = vsub.f32 1.0, %v2104
        %v2106 = vmax.f32 %v2105, 0.0
        %2107 = vset.pattern.permute.xlu0 62
        %2108 = vperm.xlu0 %2107, %v645
        %v2109 = vpop.permute.xlu0 %2108
        %v2111 = vsub.f32 %v785, %v2109
        %v2112 = vand.u32 2147483647, %v2111
        %v2113 = vsub.f32 1.0, %v2112
        %v2114 = vmax.f32 %v2113, 0.0
        %v2115 = vmul.f32 %v2106, %v2114
        %2116 = vset.pattern.permute.xlu0 30
        %2117 = vperm.xlu0 %2116, %v593
        %v2118 = vpop.permute.xlu0 %2117
        %v2120 = vmul.f32 %v2118, %v2115
        %v2121 = vadd.f32 %v2098, %v2120
        %2122 = vset.pattern.permute.xlu0 47
        %2123 = vperm.xlu0 %2122, %v633
        %v2124 = vpop.permute.xlu0 %2123
        %v2126 = vsub.f32 %v772, %v2124
        %v2127 = vand.u32 2147483647, %v2126
        %v2128 = vsub.f32 1.0, %v2127
        %v2129 = vmax.f32 %v2128, 0.0
        %2130 = vset.pattern.permute.xlu0 63
        %2131 = vperm.xlu0 %2130, %v645
        %v2132 = vpop.permute.xlu0 %2131
        %v2134 = vsub.f32 %v785, %v2132
        %v2135 = vand.u32 2147483647, %v2134
        %v2136 = vsub.f32 1.0, %v2135
        %v2137 = vmax.f32 %v2136, 0.0
        %v2138 = vmul.f32 %v2129, %v2137
        %2139 = vset.pattern.permute.xlu0 31
        %2140 = vperm.xlu0 %2139, %v593
        %v2141 = vpop.permute.xlu0 %2140
        %v2143 = vmul.f32 %v2141, %v2138
        %v2144 = vadd.f32 %v2121, %v2143
        %v2145 = vpack.c.bf16 %v2144, %v2144
        %v2146 = vld [vmem:[%s1948 + $0x40] sm:$0xf]
        %v2147 = vld [vmem:[%s1948 + $0x44] sm:$0xf]
        %v2148 = vld [vmem:[%s1948 + $0x48] sm:$0xf]
        %v2149 = vld [vmem:[%s1948 + $0x4c] sm:$0xf]
        %v2150 = vld [vmem:[%s1948 + $0x50] sm:$0xf]
        %v2151 = vld [vmem:[%s1948 + $0x54] sm:$0xf]
        %v2152 = vld [vmem:[%s1948 + $0x58] sm:$0xf]
        %v2153 = vld [vmem:[%s1948 + $0x5c] sm:$0xf]
        %v2154 = vld [vmem:[%s1948 + $0x60] sm:$0xf]
        %v2155 = vld [vmem:[%s1948 + $0x64] sm:$0xf]
        %v2156 = vld [vmem:[%s1948 + $0x68] sm:$0xf]
        %v2157 = vld [vmem:[%s1948 + $0x6c] sm:$0xf]
        %v2158 = vld [vmem:[%s1948 + $0x70] sm:$0xf]
        %v2159 = vld [vmem:[%s1948 + $0x74] sm:$0xf]
        %v2160 = vld [vmem:[%s1948 + $0x78] sm:$0xf]
        %v2161 = vld [vmem:[%s1948 + $0x7c] sm:$0xf]
        %v2178 = vunpack.c.l.b16 %v2146
        %v2179 = vunpack.c.l.b16 %v2147
        %v2180 = vunpack.c.l.b16 %v2148
        %v2181 = vunpack.c.l.b16 %v2149
        %v2182 = vunpack.c.l.b16 %v2150
        %v2183 = vunpack.c.l.b16 %v2151
        %v2184 = vunpack.c.l.b16 %v2152
        %v2185 = vunpack.c.l.b16 %v2153
        %v2186 = vunpack.c.l.b16 %v2154
        %v2187 = vunpack.c.l.b16 %v2155
        %v2188 = vunpack.c.l.b16 %v2156
        %v2189 = vunpack.c.l.b16 %v2157
        %v2190 = vunpack.c.l.b16 %v2158
        %v2191 = vunpack.c.l.b16 %v2159
        %v2192 = vunpack.c.l.b16 %v2160
        %v2193 = vunpack.c.l.b16 %v2161
        %v2194 = vpack.c.b16 %v2179, %v2178
        %v2195 = vpack.c.b16 %v2181, %v2180
        %v2196 = vpack.c.b16 %v2183, %v2182
        %v2197 = vpack.c.b16 %v2185, %v2184
        %v2198 = vpack.c.b16 %v2187, %v2186
        %v2199 = vpack.c.b16 %v2189, %v2188
        %v2200 = vpack.c.b16 %v2191, %v2190
        %v2201 = vpack.c.b16 %v2193, %v2192
        %2210 = vmatprep.subr.bf16.mxu0 0
        %2211 = vmatpush1.bf16.msra.mxu0 %v2194
        %2212 = vmatprep.subr.bf16.mxu0 0
        %2213 = vmatpush1.bf16.msra.mxu0 %v2195
        %2214 = vmatprep.subr.bf16.mxu0 0
        %2215 = vmatpush1.bf16.msra.mxu0 %v2196
        %2216 = vmatprep.subr.bf16.mxu0 0
        %2217 = vmatpush1.bf16.msra.mxu0 %v2197
        %2218 = vmatprep.subr.bf16.mxu0 0
        %2219 = vmatpush1.bf16.msra.mxu0 %v2198
        %2220 = vmatprep.subr.bf16.mxu0 0
        %2221 = vmatpush1.bf16.msra.mxu0 %v2199
        %2222 = vmatprep.subr.bf16.mxu0 0
        %2223 = vmatpush1.bf16.msra.mxu0 %v2200
        %2224 = vmatprep.subr.bf16.mxu0 0
        %2225 = vmatpush1.bf16.msra.mxu0 %v2201
        %2226 = vmatprep.subr.bf16.mxu0 0
        %2227 = vmatpush1.bf16.msra.mxu0 0
        %2228 = vmatprep.subr.bf16.mxu0 0
        %2229 = vmatpush1.bf16.msra.mxu0 0
        %2230 = vmatprep.subr.bf16.mxu0 0
        %2231 = vmatpush1.bf16.msra.mxu0 0
        %2232 = vmatprep.subr.bf16.mxu0 0
        %2233 = vmatpush1.bf16.msra.mxu0 0
        %2234 = vmatprep.subr.bf16.mxu0 0
        %2235 = vmatpush1.bf16.msra.mxu0 0
        %2236 = vmatprep.subr.bf16.mxu0 0
        %2237 = vmatpush1.bf16.msra.mxu0 0
        %2238 = vmatprep.subr.bf16.mxu0 0
        %2239 = vmatpush1.bf16.msra.mxu0 0
        %2240 = vmatprep.subr.bf16.mxu0 0
        %2241 = vmatpush1.bf16.msra.mxu0 0
        %2242 = vmatprep.mubr.bf16.mxu0 0
        %2243 = vmatmul.mubr.bf16.gmra.mrb[0].mxu0 %v2145
        %v2244 = vpop.f32.mrb[0].mxu0
        %v2245 = vadd.f32 0.0, %v2244
        %v2246 = vpop.f32.mrb[0].mxu0
        %v2247 = vpop.f32.mrb[0].mxu0
        %v2248 = vpop.f32.mrb[0].mxu0
        %2249 = vdwg.mxu0
        %v2250 = vadd.f32 %v2053, %v2245
        %v2251 = vld [vmem:[%s8] sm:$0x1]
        %v2253 = vlaneseq
        %v2254 = vshrl.u32 %v2253, 7
        %v2255 = vsub.s32 0, %v2254
        %v2256 = vrot.slane %v2251, %v2255
        %v2258 = vadd.f32 %v2250, %v2256
        %2259 = vst.msk [vmem:[%s381] sm:$0xff] %vm427, %v2258
        %s2260 = sand.u32 %s253, 1
        %s2261 = scalar_lea.sflag [#allocation3], %s2260
        %s2262 = sand.u32 %s253, 1
        %s2263 = smul.addr %s2262, 8
        %s2264 = scalar_lea.vmem [#allocation2], %s2263
        // Predicated region
        $region57: #{tpu_custom_call.1} parent=55 // pred_check
          %p2265 = pneg %p263
        $region58: #{tpu_custom_call.1} parent=55 // pred_check_branch
          %2267 = sbr.rel (%p2265) target = $region60
        $region59: #{tpu_custom_call.1} parent=55 // pred_region
          %s2269 = ssub.s32 128, 128
          %2270 = vsyncadd %s2261, %s2269
          %s2271 = sadd.s32 %s28, %s27
          %s2272 = smul.addr %s2271, 128
          %s2273 = scalar_lea.hbm %s9, %s2272
          %s2275 = sshll.u32 %s2264, 4
          %s2276 = int_to_ptr.vmem [resolvable:$true] %s2275
          %2278 = dma.vmem_to_hbm [thread:$0]  %s2276, 128, %s2273, %s2261
        $region60: #{tpu_custom_call.1} parent=55 // pred_fallthru
          _
      $region56: #{tpu_custom_call.1} parent=5 // pred_fallthru
        _
      %p2279 = scmp.le.s32.totalorder 2, %s18
      // Predicated region
      $region61: #{tpu_custom_call.1} parent=5 // pred_check
        %p2280 = pneg %p2279
      $region62: #{tpu_custom_call.1} parent=5 // pred_check_branch
        %2282 = sbr.rel (%p2280) target = $region64
      $region63: #{tpu_custom_call.1} parent=5 // pred_region
        %s2283 = ssub.s32 %s18, 2
        // Predicated region
        $region65: #{tpu_custom_call.1} parent=63 // pred_check
          %p2284 = pneg %p269
        $region66: #{tpu_custom_call.1} parent=63 // pred_check_branch
          %2286 = sbr.rel (%p2284) target = $region68
        $region67: #{tpu_custom_call.1} parent=63 // pred_region
          %s2287 = sand.u32 %s254, 1
          %s2288 = scalar_lea.sflag [#allocation3], %s2287
          %s2289 = sand.u32 %s254, 1
          %s2290 = smul.addr %s2289, 8
          %s2291 = scalar_lea.vmem [#allocation2], %s2290
          %2292 = dma.done %s2288, 128
        $region68: #{tpu_custom_call.1} parent=63 // pred_fallthru
          _
      $region64: #{tpu_custom_call.1} parent=5 // pred_fallthru
        _
    $region6: #{tpu_custom_call.1} parent=1 // loop_footer
      %s22 = sadd.s32 1, %s18
    $region7: #{tpu_custom_call.1} parent=1 // loop_footer_branch
      %17 = sbr.rel target = $region3
    $region8: #{tpu_custom_call.1} parent=1 // loop_exit
      _
    %2293 = vsyncpa [#allocation3], 1
    %s2294 = scalar_lea.sflag [#allocation3], 1
    %2295 = vsyncpa %s2294, 1

</llo_original>
